<compile_context>
chip_gen: v5e
topology: v5e:2x2
jax: 0.10.0
libtpu: 0.0.40
codegen_flags: <defaults>
</compile_context>

<pallas_src>
import functools
import math

import jax
import jax.numpy as jnp
from jax.experimental import pallas as pl
from jax.experimental.pallas import tpu as pltpu

_K = 7            # kernel size (module asserts 3 or 7; default is 7)
_PAD = _K // 2    # 'same' padding


def _pairwise_reduce(vals, op):
    """Tree-reduce a list of arrays (exposes ILP vs. a serial chain)."""
    vals = list(vals)
    while len(vals) > 1:
        nxt = [op(vals[i], vals[i + 1]) for i in range(0, len(vals) - 1, 2)]
        if len(vals) % 2:
            nxt.append(vals[-1])
        vals = nxt
    return vals[0]


def _conv_plane(pad_ref, w_ref, w_base, H, W):
    """7x7 'same' cross-correlation of one zero-padded plane, weights in SMEM.

    Column (lane) shifts are hoisted: 7 shifted strips are read once and kept
    vreg-resident; the inner 49 terms only differ by a sublane offset.  Four
    independent accumulators break the serial FMA dependence chain.
    """
    cols = [pad_ref[:, j:j + W] for j in range(_K)]        # 7 x (H+2P, W) values
    accs = [jnp.zeros((H, W), jnp.float32) for _ in range(4)]
    t = 0
    for i in range(_K):
        for j in range(_K):
            wv = w_ref[w_base + i * _K + j]                 # scalar from SMEM
            accs[t % 4] = accs[t % 4] + wv * cols[j][i:i + H, :]
            t += 1
    return (accs[0] + accs[1]) + (accs[2] + accs[3])


def _spatial_attention_kernel(w_ref, x_ref, o_ref, apad_ref, mpad_ref,
                              *, B_TILE, C, H, W):
    # w_ref    : SMEM (2*K*K,) f32  -- conv weight, flattened [channel, ki, kj]
    #                                  (1/C already folded into channel 0)
    # x_ref    : VMEM (B_TILE, C, H, W)
    # o_ref    : VMEM (B_TILE, H, W)
    # apad_ref : VMEM (H+2P, W+2P)  -- zero-padded channel-sum plane (scratch)
    # mpad_ref : VMEM (H+2P, W+2P)  -- zero-padded channel-max plane (scratch)
    f32 = jnp.float32
    Hp, Wp = H + 2 * _PAD, W + 2 * _PAD

    # Zero the halos once per grid step.  The interior is fully overwritten for
    # every batch element below.  (Not gated on program_id==0: that is unsafe
    # if a 'parallel' grid axis is sharded across TensorCores.)
    apad_ref[...] = jnp.zeros((Hp, Wp), f32)
    mpad_ref[...] = jnp.zeros((Hp, Wp), f32)

    for b in range(B_TILE):
        # ---- fused channel sum & max (no HBM intermediate), tree-reduced ----
        xs = [x_ref[b, c].astype(f32) for c in range(C)]
        s = _pairwise_reduce(xs, lambda u, v: u + v)   # raw sum; 1/C is in the weights
        m = _pairwise_reduce(xs, jnp.maximum)

        apad_ref[_PAD:_PAD + H, _PAD:_PAD + W] = s
        mpad_ref[_PAD:_PAD + H, _PAD:_PAD + W] = m

        # ---- 7x7 conv as shift-and-accumulate on the VPU ----
        acc = (_conv_plane(apad_ref, w_ref, 0, H, W)
               + _conv_plane(mpad_ref, w_ref, _K * _K, H, W))

        # NOTE: the PyTorch module defines self.sigmoid but never applies it in
        # forward(), so we faithfully return the raw conv output.
        o_ref[b] = acc.astype(o_ref.dtype)


def _pick_b_tile(B, C, H, W, max_unroll=8, vmem_budget=8 * 1024 * 1024):
    """Batch elements per grid step: amortize step overhead, stay in VMEM,
    keep the in-kernel unroll bounded, and divide B exactly."""
    per_b = C * H * W * 4
    bt = max(1, min(B, max_unroll, vmem_budget // max(per_b, 1)))
    while B % bt:
        bt -= 1
    return bt


def spatial_attention(x, conv_weight):
    """x: (B, C, H, W); conv_weight: (1, 2, K, K) -> (B, 1, H, W)."""
    B, C, H, W = x.shape
    assert conv_weight.shape == (1, 2, _K, _K)

    # Fold the 1/C of the mean into the avg-channel weights (98 scalars on the
    # host -- not the tensor-sized "pre-scale inputs" anti-pattern).
    w = conv_weight.astype(jnp.float32).reshape(2, _K, _K)
    w = w.at[0].multiply(1.0 / C)
    w_flat = w.reshape(2 * _K * _K)

    B_TILE = _pick_b_tile(B, C, H, W)
    n_steps = B // B_TILE

    kernel = functools.partial(_spatial_attention_kernel,
                               B_TILE=B_TILE, C=C, H=H, W=W)

    out = pl.pallas_call(
        kernel,
        out_shape=jax.ShapeDtypeStruct((B, 1, H, W), x.dtype),
        grid=(n_steps,),
        in_specs=[
            # Tiny weight table -> SMEM (scalar reads inside the kernel).
            pl.BlockSpec(memory_space=pltpu.MemorySpace.SMEM),
            # B_TILE batch elements per grid step.
            pl.BlockSpec((B_TILE, C, H, W), lambda t: (t, 0, 0, 0)),
        ],
        out_specs=pl.BlockSpec((B_TILE, None, H, W), lambda t: (t, 0, 0, 0)),
        scratch_shapes=[
            pltpu.VMEM((H + 2 * _PAD, W + 2 * _PAD), jnp.float32),
            pltpu.VMEM((H + 2 * _PAD, W + 2 * _PAD), jnp.float32),
        ],
        compiler_params=pltpu.CompilerParams(
            dimension_semantics=("parallel",),
        ),
    )(w_flat, x)
    return out


def _reference(x, conv_weight):
    """Pure-JAX reference for SpatialAttention.forward (no sigmoid)."""
    avg = jnp.mean(x, axis=1, keepdims=True)
    mx = jnp.max(x, axis=1, keepdims=True)
    xc = jnp.concatenate([avg, mx], axis=1)                  # (B, 2, H, W)
    return jax.lax.conv_general_dilated(
        xc, conv_weight,
        window_strides=(1, 1),
        padding=((_PAD, _PAD), (_PAD, _PAD)),
        dimension_numbers=("NCHW", "OIHW", "NCHW"),
    )


if __name__ == "__main__":
    B, C, H, W = 2, 4, 16, 16

    key = jax.random.PRNGKey(0)
    kx, kw = jax.random.split(key)

    x = jax.random.normal(kx, (B, C, H, W), dtype=jnp.float32)

    # PyTorch Conv2d default init: kaiming_uniform_(a=sqrt(5)) -> U(-1/sqrt(fan_in), +).
    fan_in = 2 * _K * _K
    bound = 1.0 / math.sqrt(fan_in)
    conv_weight = jax.random.uniform(
        kw, (1, 2, _K, _K), dtype=jnp.float32, minval=-bound, maxval=bound)

    out = spatial_attention(x, conv_weight)
    out = jax.block_until_ready(out)

    ref = _reference(x, conv_weight)
    assert out.shape == (B, 1, H, W)
    assert jnp.allclose(out, ref, atol=1e-4, rtol=1e-4)

    print("KERNEL_OK")
</pallas_src>

<mosaic_0001>
module attributes {stable_mosaic.version = 11 : i64} {
  func.func @_spatial_attention_kernel(%arg0: i32, %arg1: memref<98xf32, #tpu.memory_space<smem>>, %arg2: memref<2x4x16x16xf32, #tpu.memory_space<vmem>>, %arg3: memref<2x1x16x16xf32, #tpu.memory_space<vmem>>, %arg4: memref<22x22xf32, #tpu.memory_space<vmem>>, %arg5: memref<22x22xf32, #tpu.memory_space<vmem>>) attributes {dimension_semantics = [#tpu.dimension_semantics<parallel>], iteration_bounds = array<i64: 1>, scalar_prefetch = 0 : i64, scratch_operands = 2 : i64, tpu.core_type = #tpu.core_type<tc>, window_params = [{transform_indices = @transform_0, window_bounds = array<i64: 98>}, {transform_indices = @transform_1, window_bounds = array<i64: 2, 4, 16, 16>}, {transform_indices = @transform_2, window_bounds = array<i64: 2, 1, 16, 16>}]} {
    %cst = arith.constant 0.000000e+00 : f32
    %0 = vector.broadcast %cst : f32 to vector<22x22xf32>
    %c0 = arith.constant 0 : index
    %c0_0 = arith.constant 0 : index
    %1 = vector.load %arg4[%c0, %c0_0] : memref<22x22xf32, #tpu.memory_space<vmem>>, vector<22x22xf32>
    tpu.vector_store %arg4[%c0, %c0_0], %0 {strides = array<i32>} : memref<22x22xf32, #tpu.memory_space<vmem>>, vector<22x22xf32>,
    %cst_1 = arith.constant 0.000000e+00 : f32
    %2 = vector.broadcast %cst_1 : f32 to vector<22x22xf32>
    %c0_2 = arith.constant 0 : index
    %c0_3 = arith.constant 0 : index
    %3 = vector.load %arg5[%c0_2, %c0_3] : memref<22x22xf32, #tpu.memory_space<vmem>>, vector<22x22xf32>
    tpu.vector_store %arg5[%c0_2, %c0_3], %2 {strides = array<i32>} : memref<22x22xf32, #tpu.memory_space<vmem>>, vector<22x22xf32>,
    %c0_4 = arith.constant 0 : index
    %c0_5 = arith.constant 0 : index
    %c0_6 = arith.constant 0 : index
    %c0_7 = arith.constant 0 : index
    %4 = vector.load %arg2[%c0_4, %c0_5, %c0_6, %c0_7] : memref<2x4x16x16xf32, #tpu.memory_space<vmem>>, vector<1x1x16x16xf32>
    %5 = vector.shape_cast %4 : vector<1x1x16x16xf32> to vector<16x16xf32>
    %c0_8 = arith.constant 0 : index
    %c1 = arith.constant 1 : index
    %c0_9 = arith.constant 0 : index
    %c0_10 = arith.constant 0 : index
    %6 = vector.load %arg2[%c0_8, %c1, %c0_9, %c0_10] : memref<2x4x16x16xf32, #tpu.memory_space<vmem>>, vector<1x1x16x16xf32>
    %7 = vector.shape_cast %6 : vector<1x1x16x16xf32> to vector<16x16xf32>
    %c0_11 = arith.constant 0 : index
    %c2 = arith.constant 2 : index
    %c0_12 = arith.constant 0 : index
    %c0_13 = arith.constant 0 : index
    %8 = vector.load %arg2[%c0_11, %c2, %c0_12, %c0_13] : memref<2x4x16x16xf32, #tpu.memory_space<vmem>>, vector<1x1x16x16xf32>
    %9 = vector.shape_cast %8 : vector<1x1x16x16xf32> to vector<16x16xf32>
    %c0_14 = arith.constant 0 : index
    %c3 = arith.constant 3 : index
    %c0_15 = arith.constant 0 : index
    %c0_16 = arith.constant 0 : index
    %10 = vector.load %arg2[%c0_14, %c3, %c0_15, %c0_16] : memref<2x4x16x16xf32, #tpu.memory_space<vmem>>, vector<1x1x16x16xf32>
    %11 = vector.shape_cast %10 : vector<1x1x16x16xf32> to vector<16x16xf32>
    %12 = arith.addf %5, %7 : vector<16x16xf32>
    %13 = arith.addf %9, %11 : vector<16x16xf32>
    %14 = arith.addf %12, %13 : vector<16x16xf32>
    %15 = arith.maximumf %5, %7 : vector<16x16xf32>
    %16 = arith.maximumf %9, %11 : vector<16x16xf32>
    %17 = arith.maximumf %15, %16 : vector<16x16xf32>
    %c3_17 = arith.constant 3 : index
    %c3_18 = arith.constant 3 : index
    %18 = vector.load %arg4[%c3_17, %c3_18] : memref<22x22xf32, #tpu.memory_space<vmem>>, vector<16x16xf32>
    tpu.vector_store %arg4[%c3_17, %c3_18], %14 {strides = array<i32>} : memref<22x22xf32, #tpu.memory_space<vmem>>, vector<16x16xf32>,
    %c3_19 = arith.constant 3 : index
    %c3_20 = arith.constant 3 : index
    %19 = vector.load %arg5[%c3_19, %c3_20] : memref<22x22xf32, #tpu.memory_space<vmem>>, vector<16x16xf32>
    tpu.vector_store %arg5[%c3_19, %c3_20], %17 {strides = array<i32>} : memref<22x22xf32, #tpu.memory_space<vmem>>, vector<16x16xf32>,
    %c0_21 = arith.constant 0 : index
    %c0_22 = arith.constant 0 : index
    %20 = vector.load %arg4[%c0_21, %c0_22] : memref<22x22xf32, #tpu.memory_space<vmem>>, vector<22x16xf32>
    %c0_23 = arith.constant 0 : index
    %c1_24 = arith.constant 1 : index
    %21 = vector.load %arg4[%c0_23, %c1_24] : memref<22x22xf32, #tpu.memory_space<vmem>>, vector<22x16xf32>
    %c0_25 = arith.constant 0 : index
    %c2_26 = arith.constant 2 : index
    %22 = vector.load %arg4[%c0_25, %c2_26] : memref<22x22xf32, #tpu.memory_space<vmem>>, vector<22x16xf32>
    %c0_27 = arith.constant 0 : index
    %c3_28 = arith.constant 3 : index
    %23 = vector.load %arg4[%c0_27, %c3_28] : memref<22x22xf32, #tpu.memory_space<vmem>>, vector<22x16xf32>
    %c0_29 = arith.constant 0 : index
    %c4 = arith.constant 4 : index
    %24 = vector.load %arg4[%c0_29, %c4] : memref<22x22xf32, #tpu.memory_space<vmem>>, vector<22x16xf32>
    %c0_30 = arith.constant 0 : index
    %c5 = arith.constant 5 : index
    %25 = vector.load %arg4[%c0_30, %c5] : memref<22x22xf32, #tpu.memory_space<vmem>>, vector<22x16xf32>
    %c0_31 = arith.constant 0 : index
    %c6 = arith.constant 6 : index
    %26 = vector.load %arg4[%c0_31, %c6] : memref<22x22xf32, #tpu.memory_space<vmem>>, vector<22x16xf32>
    %cst_32 = arith.constant 0.000000e+00 : f32
    %27 = vector.broadcast %cst_32 : f32 to vector<16x16xf32>
    %cst_33 = arith.constant 0.000000e+00 : f32
    %28 = vector.broadcast %cst_33 : f32 to vector<16x16xf32>
    %cst_34 = arith.constant 0.000000e+00 : f32
    %29 = vector.broadcast %cst_34 : f32 to vector<16x16xf32>
    %cst_35 = arith.constant 0.000000e+00 : f32
    %30 = vector.broadcast %cst_35 : f32 to vector<16x16xf32>
    %c0_36 = arith.constant 0 : index
    %31 = memref.load %arg1[%c0_36] : memref<98xf32, #tpu.memory_space<smem>>
    %32 = vector.extract_strided_slice %20 {offsets = [0, 0], sizes = [16, 16], strides = [1, 1]} : vector<22x16xf32> to vector<16x16xf32>
    %33 = vector.broadcast %31 : f32 to vector<16x16xf32>
    %34 = arith.mulf %33, %32 : vector<16x16xf32>
    %35 = arith.addf %27, %34 : vector<16x16xf32>
    %c1_37 = arith.constant 1 : index
    %36 = memref.load %arg1[%c1_37] : memref<98xf32, #tpu.memory_space<smem>>
    %37 = vector.extract_strided_slice %21 {offsets = [0, 0], sizes = [16, 16], strides = [1, 1]} : vector<22x16xf32> to vector<16x16xf32>
    %38 = vector.broadcast %36 : f32 to vector<16x16xf32>
    %39 = arith.mulf %38, %37 : vector<16x16xf32>
    %40 = arith.addf %28, %39 : vector<16x16xf32>
    %c2_38 = arith.constant 2 : index
    %41 = memref.load %arg1[%c2_38] : memref<98xf32, #tpu.memory_space<smem>>
    %42 = vector.extract_strided_slice %22 {offsets = [0, 0], sizes = [16, 16], strides = [1, 1]} : vector<22x16xf32> to vector<16x16xf32>
    %43 = vector.broadcast %41 : f32 to vector<16x16xf32>
    %44 = arith.mulf %43, %42 : vector<16x16xf32>
    %45 = arith.addf %29, %44 : vector<16x16xf32>
    %c3_39 = arith.constant 3 : index
    %46 = memref.load %arg1[%c3_39] : memref<98xf32, #tpu.memory_space<smem>>
    %47 = vector.extract_strided_slice %23 {offsets = [0, 0], sizes = [16, 16], strides = [1, 1]} : vector<22x16xf32> to vector<16x16xf32>
    %48 = vector.broadcast %46 : f32 to vector<16x16xf32>
    %49 = arith.mulf %48, %47 : vector<16x16xf32>
    %50 = arith.addf %30, %49 : vector<16x16xf32>
    %c4_40 = arith.constant 4 : index
    %51 = memref.load %arg1[%c4_40] : memref<98xf32, #tpu.memory_space<smem>>
    %52 = vector.extract_strided_slice %24 {offsets = [0, 0], sizes = [16, 16], strides = [1, 1]} : vector<22x16xf32> to vector<16x16xf32>
    %53 = vector.broadcast %51 : f32 to vector<16x16xf32>
    %54 = arith.mulf %53, %52 : vector<16x16xf32>
    %55 = arith.addf %35, %54 : vector<16x16xf32>
    %c5_41 = arith.constant 5 : index
    %56 = memref.load %arg1[%c5_41] : memref<98xf32, #tpu.memory_space<smem>>
    %57 = vector.extract_strided_slice %25 {offsets = [0, 0], sizes = [16, 16], strides = [1, 1]} : vector<22x16xf32> to vector<16x16xf32>
    %58 = vector.broadcast %56 : f32 to vector<16x16xf32>
    %59 = arith.mulf %58, %57 : vector<16x16xf32>
    %60 = arith.addf %40, %59 : vector<16x16xf32>
    %c6_42 = arith.constant 6 : index
    %61 = memref.load %arg1[%c6_42] : memref<98xf32, #tpu.memory_space<smem>>
    %62 = vector.extract_strided_slice %26 {offsets = [0, 0], sizes = [16, 16], strides = [1, 1]} : vector<22x16xf32> to vector<16x16xf32>
    %63 = vector.broadcast %61 : f32 to vector<16x16xf32>
    %64 = arith.mulf %63, %62 : vector<16x16xf32>
    %65 = arith.addf %45, %64 : vector<16x16xf32>
    %c7 = arith.constant 7 : index
    %66 = memref.load %arg1[%c7] : memref<98xf32, #tpu.memory_space<smem>>
    %67 = vector.extract_strided_slice %20 {offsets = [1, 0], sizes = [16, 16], strides = [1, 1]} : vector<22x16xf32> to vector<16x16xf32>
    %68 = vector.broadcast %66 : f32 to vector<16x16xf32>
    %69 = arith.mulf %68, %67 : vector<16x16xf32>
    %70 = arith.addf %50, %69 : vector<16x16xf32>
    %c8 = arith.constant 8 : index
    %71 = memref.load %arg1[%c8] : memref<98xf32, #tpu.memory_space<smem>>
    %72 = vector.extract_strided_slice %21 {offsets = [1, 0], sizes = [16, 16], strides = [1, 1]} : vector<22x16xf32> to vector<16x16xf32>
    %73 = vector.broadcast %71 : f32 to vector<16x16xf32>
    %74 = arith.mulf %73, %72 : vector<16x16xf32>
    %75 = arith.addf %55, %74 : vector<16x16xf32>
    %c9 = arith.constant 9 : index
    %76 = memref.load %arg1[%c9] : memref<98xf32, #tpu.memory_space<smem>>
    %77 = vector.extract_strided_slice %22 {offsets = [1, 0], sizes = [16, 16], strides = [1, 1]} : vector<22x16xf32> to vector<16x16xf32>
    %78 = vector.broadcast %76 : f32 to vector<16x16xf32>
    %79 = arith.mulf %78, %77 : vector<16x16xf32>
    %80 = arith.addf %60, %79 : vector<16x16xf32>
    %c10 = arith.constant 10 : index
    %81 = memref.load %arg1[%c10] : memref<98xf32, #tpu.memory_space<smem>>
    %82 = vector.extract_strided_slice %23 {offsets = [1, 0], sizes = [16, 16], strides = [1, 1]} : vector<22x16xf32> to vector<16x16xf32>
    %83 = vector.broadcast %81 : f32 to vector<16x16xf32>
    %84 = arith.mulf %83, %82 : vector<16x16xf32>
    %85 = arith.addf %65, %84 : vector<16x16xf32>
    %c11 = arith.constant 11 : index
    %86 = memref.load %arg1[%c11] : memref<98xf32, #tpu.memory_space<smem>>
    %87 = vector.extract_strided_slice %24 {offsets = [1, 0], sizes = [16, 16], strides = [1, 1]} : vector<22x16xf32> to vector<16x16xf32>
    %88 = vector.broadcast %86 : f32 to vector<16x16xf32>
    %89 = arith.mulf %88, %87 : vector<16x16xf32>
    %90 = arith.addf %70, %89 : vector<16x16xf32>
    %c12 = arith.constant 12 : index
    %91 = memref.load %arg1[%c12] : memref<98xf32, #tpu.memory_space<smem>>
    %92 = vector.extract_strided_slice %25 {offsets = [1, 0], sizes = [16, 16], strides = [1, 1]} : vector<22x16xf32> to vector<16x16xf32>
    %93 = vector.broadcast %91 : f32 to vector<16x16xf32>
    %94 = arith.mulf %93, %92 : vector<16x16xf32>
    %95 = arith.addf %75, %94 : vector<16x16xf32>
    %c13 = arith.constant 13 : index
    %96 = memref.load %arg1[%c13] : memref<98xf32, #tpu.memory_space<smem>>
    %97 = vector.extract_strided_slice %26 {offsets = [1, 0], sizes = [16, 16], strides = [1, 1]} : vector<22x16xf32> to vector<16x16xf32>
    %98 = vector.broadcast %96 : f32 to vector<16x16xf32>
    %99 = arith.mulf %98, %97 : vector<16x16xf32>
    %100 = arith.addf %80, %99 : vector<16x16xf32>
    %c14 = arith.constant 14 : index
    %101 = memref.load %arg1[%c14] : memref<98xf32, #tpu.memory_space<smem>>
    %102 = vector.extract_strided_slice %20 {offsets = [2, 0], sizes = [16, 16], strides = [1, 1]} : vector<22x16xf32> to vector<16x16xf32>
    %103 = vector.broadcast %101 : f32 to vector<16x16xf32>
    %104 = arith.mulf %103, %102 : vector<16x16xf32>
    %105 = arith.addf %85, %104 : vector<16x16xf32>
    %c15 = arith.constant 15 : index
    %106 = memref.load %arg1[%c15] : memref<98xf32, #tpu.memory_space<smem>>
    %107 = vector.extract_strided_slice %21 {offsets = [2, 0], sizes = [16, 16], strides = [1, 1]} : vector<22x16xf32> to vector<16x16xf32>
    %108 = vector.broadcast %106 : f32 to vector<16x16xf32>
    %109 = arith.mulf %108, %107 : vector<16x16xf32>
    %110 = arith.addf %90, %109 : vector<16x16xf32>
    %c16 = arith.constant 16 : index
    %111 = memref.load %arg1[%c16] : memref<98xf32, #tpu.memory_space<smem>>
    %112 = vector.extract_strided_slice %22 {offsets = [2, 0], sizes = [16, 16], strides = [1, 1]} : vector<22x16xf32> to vector<16x16xf32>
    %113 = vector.broadcast %111 : f32 to vector<16x16xf32>
    %114 = arith.mulf %113, %112 : vector<16x16xf32>
    %115 = arith.addf %95, %114 : vector<16x16xf32>
    %c17 = arith.constant 17 : index
    %116 = memref.load %arg1[%c17] : memref<98xf32, #tpu.memory_space<smem>>
    %117 = vector.extract_strided_slice %23 {offsets = [2, 0], sizes = [16, 16], strides = [1, 1]} : vector<22x16xf32> to vector<16x16xf32>
    %118 = vector.broadcast %116 : f32 to vector<16x16xf32>
    %119 = arith.mulf %118, %117 : vector<16x16xf32>
    %120 = arith.addf %100, %119 : vector<16x16xf32>
    %c18 = arith.constant 18 : index
    %121 = memref.load %arg1[%c18] : memref<98xf32, #tpu.memory_space<smem>>
    %122 = vector.extract_strided_slice %24 {offsets = [2, 0], sizes = [16, 16], strides = [1, 1]} : vector<22x16xf32> to vector<16x16xf32>
    %123 = vector.broadcast %121 : f32 to vector<16x16xf32>
    %124 = arith.mulf %123, %122 : vector<16x16xf32>
    %125 = arith.addf %105, %124 : vector<16x16xf32>
    %c19 = arith.constant 19 : index
    %126 = memref.load %arg1[%c19] : memref<98xf32, #tpu.memory_space<smem>>
    %127 = vector.extract_strided_slice %25 {offsets = [2, 0], sizes = [16, 16], strides = [1, 1]} : vector<22x16xf32> to vector<16x16xf32>
    %128 = vector.broadcast %126 : f32 to vector<16x16xf32>
    %129 = arith.mulf %128, %127 : vector<16x16xf32>
    %130 = arith.addf %110, %129 : vector<16x16xf32>
    %c20 = arith.constant 20 : index
    %131 = memref.load %arg1[%c20] : memref<98xf32, #tpu.memory_space<smem>>
    %132 = vector.extract_strided_slice %26 {offsets = [2, 0], sizes = [16, 16], strides = [1, 1]} : vector<22x16xf32> to vector<16x16xf32>
    %133 = vector.broadcast %131 : f32 to vector<16x16xf32>
    %134 = arith.mulf %133, %132 : vector<16x16xf32>
    %135 = arith.addf %115, %134 : vector<16x16xf32>
    %c21 = arith.constant 21 : index
    %136 = memref.load %arg1[%c21] : memref<98xf32, #tpu.memory_space<smem>>
    %137 = vector.extract_strided_slice %20 {offsets = [3, 0], sizes = [16, 16], strides = [1, 1]} : vector<22x16xf32> to vector<16x16xf32>
    %138 = vector.broadcast %136 : f32 to vector<16x16xf32>
    %139 = arith.mulf %138, %137 : vector<16x16xf32>
    %140 = arith.addf %120, %139 : vector<16x16xf32>
    %c22 = arith.constant 22 : index
    %141 = memref.load %arg1[%c22] : memref<98xf32, #tpu.memory_space<smem>>
    %142 = vector.extract_strided_slice %21 {offsets = [3, 0], sizes = [16, 16], strides = [1, 1]} : vector<22x16xf32> to vector<16x16xf32>
    %143 = vector.broadcast %141 : f32 to vector<16x16xf32>
    %144 = arith.mulf %143, %142 : vector<16x16xf32>
    %145 = arith.addf %125, %144 : vector<16x16xf32>
    %c23 = arith.constant 23 : index
    %146 = memref.load %arg1[%c23] : memref<98xf32, #tpu.memory_space<smem>>
    %147 = vector.extract_strided_slice %22 {offsets = [3, 0], sizes = [16, 16], strides = [1, 1]} : vector<22x16xf32> to vector<16x16xf32>
    %148 = vector.broadcast %146 : f32 to vector<16x16xf32>
    %149 = arith.mulf %148, %147 : vector<16x16xf32>
    %150 = arith.addf %130, %149 : vector<16x16xf32>
    %c24 = arith.constant 24 : index
    %151 = memref.load %arg1[%c24] : memref<98xf32, #tpu.memory_space<smem>>
    %152 = vector.extract_strided_slice %23 {offsets = [3, 0], sizes = [16, 16], strides = [1, 1]} : vector<22x16xf32> to vector<16x16xf32>
    %153 = vector.broadcast %151 : f32 to vector<16x16xf32>
    %154 = arith.mulf %153, %152 : vector<16x16xf32>
    %155 = arith.addf %135, %154 : vector<16x16xf32>
    %c25 = arith.constant 25 : index
    %156 = memref.load %arg1[%c25] : memref<98xf32, #tpu.memory_space<smem>>
    %157 = vector.extract_strided_slice %24 {offsets = [3, 0], sizes = [16, 16], strides = [1, 1]} : vector<22x16xf32> to vector<16x16xf32>
    %158 = vector.broadcast %156 : f32 to vector<16x16xf32>
    %159 = arith.mulf %158, %157 : vector<16x16xf32>
    %160 = arith.addf %140, %159 : vector<16x16xf32>
    %c26 = arith.constant 26 : index
    %161 = memref.load %arg1[%c26] : memref<98xf32, #tpu.memory_space<smem>>
    %162 = vector.extract_strided_slice %25 {offsets = [3, 0], sizes = [16, 16], strides = [1, 1]} : vector<22x16xf32> to vector<16x16xf32>
    %163 = vector.broadcast %161 : f32 to vector<16x16xf32>
    %164 = arith.mulf %163, %162 : vector<16x16xf32>
    %165 = arith.addf %145, %164 : vector<16x16xf32>
    %c27 = arith.constant 27 : index
    %166 = memref.load %arg1[%c27] : memref<98xf32, #tpu.memory_space<smem>>
    %167 = vector.extract_strided_slice %26 {offsets = [3, 0], sizes = [16, 16], strides = [1, 1]} : vector<22x16xf32> to vector<16x16xf32>
    %168 = vector.broadcast %166 : f32 to vector<16x16xf32>
    %169 = arith.mulf %168, %167 : vector<16x16xf32>
    %170 = arith.addf %150, %169 : vector<16x16xf32>
    %c28 = arith.constant 28 : index
    %171 = memref.load %arg1[%c28] : memref<98xf32, #tpu.memory_space<smem>>
    %172 = vector.extract_strided_slice %20 {offsets = [4, 0], sizes = [16, 16], strides = [1, 1]} : vector<22x16xf32> to vector<16x16xf32>
    %173 = vector.broadcast %171 : f32 to vector<16x16xf32>
    %174 = arith.mulf %173, %172 : vector<16x16xf32>
    %175 = arith.addf %155, %174 : vector<16x16xf32>
    %c29 = arith.constant 29 : index
    %176 = memref.load %arg1[%c29] : memref<98xf32, #tpu.memory_space<smem>>
    %177 = vector.extract_strided_slice %21 {offsets = [4, 0], sizes = [16, 16], strides = [1, 1]} : vector<22x16xf32> to vector<16x16xf32>
    %178 = vector.broadcast %176 : f32 to vector<16x16xf32>
    %179 = arith.mulf %178, %177 : vector<16x16xf32>
    %180 = arith.addf %160, %179 : vector<16x16xf32>
    %c30 = arith.constant 30 : index
    %181 = memref.load %arg1[%c30] : memref<98xf32, #tpu.memory_space<smem>>
    %182 = vector.extract_strided_slice %22 {offsets = [4, 0], sizes = [16, 16], strides = [1, 1]} : vector<22x16xf32> to vector<16x16xf32>
    %183 = vector.broadcast %181 : f32 to vector<16x16xf32>
    %184 = arith.mulf %183, %182 : vector<16x16xf32>
    %185 = arith.addf %165, %184 : vector<16x16xf32>
    %c31 = arith.constant 31 : index
    %186 = memref.load %arg1[%c31] : memref<98xf32, #tpu.memory_space<smem>>
    %187 = vector.extract_strided_slice %23 {offsets = [4, 0], sizes = [16, 16], strides = [1, 1]} : vector<22x16xf32> to vector<16x16xf32>
    %188 = vector.broadcast %186 : f32 to vector<16x16xf32>
    %189 = arith.mulf %188, %187 : vector<16x16xf32>
    %190 = arith.addf %170, %189 : vector<16x16xf32>
    %c32 = arith.constant 32 : index
    %191 = memref.load %arg1[%c32] : memref<98xf32, #tpu.memory_space<smem>>
    %192 = vector.extract_strided_slice %24 {offsets = [4, 0], sizes = [16, 16], strides = [1, 1]} : vector<22x16xf32> to vector<16x16xf32>
    %193 = vector.broadcast %191 : f32 to vector<16x16xf32>
    %194 = arith.mulf %193, %192 : vector<16x16xf32>
    %195 = arith.addf %175, %194 : vector<16x16xf32>
    %c33 = arith.constant 33 : index
    %196 = memref.load %arg1[%c33] : memref<98xf32, #tpu.memory_space<smem>>
    %197 = vector.extract_strided_slice %25 {offsets = [4, 0], sizes = [16, 16], strides = [1, 1]} : vector<22x16xf32> to vector<16x16xf32>
    %198 = vector.broadcast %196 : f32 to vector<16x16xf32>
    %199 = arith.mulf %198, %197 : vector<16x16xf32>
    %200 = arith.addf %180, %199 : vector<16x16xf32>
    %c34 = arith.constant 34 : index
    %201 = memref.load %arg1[%c34] : memref<98xf32, #tpu.memory_space<smem>>
    %202 = vector.extract_strided_slice %26 {offsets = [4, 0], sizes = [16, 16], strides = [1, 1]} : vector<22x16xf32> to vector<16x16xf32>
    %203 = vector.broadcast %201 : f32 to vector<16x16xf32>
    %204 = arith.mulf %203, %202 : vector<16x16xf32>
    %205 = arith.addf %185, %204 : vector<16x16xf32>
    %c35 = arith.constant 35 : index
    %206 = memref.load %arg1[%c35] : memref<98xf32, #tpu.memory_space<smem>>
    %207 = vector.extract_strided_slice %20 {offsets = [5, 0], sizes = [16, 16], strides = [1, 1]} : vector<22x16xf32> to vector<16x16xf32>
    %208 = vector.broadcast %206 : f32 to vector<16x16xf32>
    %209 = arith.mulf %208, %207 : vector<16x16xf32>
    %210 = arith.addf %190, %209 : vector<16x16xf32>
    %c36 = arith.constant 36 : index
    %211 = memref.load %arg1[%c36] : memref<98xf32, #tpu.memory_space<smem>>
    %212 = vector.extract_strided_slice %21 {offsets = [5, 0], sizes = [16, 16], strides = [1, 1]} : vector<22x16xf32> to vector<16x16xf32>
    %213 = vector.broadcast %211 : f32 to vector<16x16xf32>
    %214 = arith.mulf %213, %212 : vector<16x16xf32>
    %215 = arith.addf %195, %214 : vector<16x16xf32>
    %c37 = arith.constant 37 : index
    %216 = memref.load %arg1[%c37] : memref<98xf32, #tpu.memory_space<smem>>
    %217 = vector.extract_strided_slice %22 {offsets = [5, 0], sizes = [16, 16], strides = [1, 1]} : vector<22x16xf32> to vector<16x16xf32>
    %218 = vector.broadcast %216 : f32 to vector<16x16xf32>
    %219 = arith.mulf %218, %217 : vector<16x16xf32>
    %220 = arith.addf %200, %219 : vector<16x16xf32>
    %c38 = arith.constant 38 : index
    %221 = memref.load %arg1[%c38] : memref<98xf32, #tpu.memory_space<smem>>
    %222 = vector.extract_strided_slice %23 {offsets = [5, 0], sizes = [16, 16], strides = [1, 1]} : vector<22x16xf32> to vector<16x16xf32>
    %223 = vector.broadcast %221 : f32 to vector<16x16xf32>
    %224 = arith.mulf %223, %222 : vector<16x16xf32>
    %225 = arith.addf %205, %224 : vector<16x16xf32>
    %c39 = arith.constant 39 : index
    %226 = memref.load %arg1[%c39] : memref<98xf32, #tpu.memory_space<smem>>
    %227 = vector.extract_strided_slice %24 {offsets = [5, 0], sizes = [16, 16], strides = [1, 1]} : vector<22x16xf32> to vector<16x16xf32>
    %228 = vector.broadcast %226 : f32 to vector<16x16xf32>
    %229 = arith.mulf %228, %227 : vector<16x16xf32>
    %230 = arith.addf %210, %229 : vector<16x16xf32>
    %c40 = arith.constant 40 : index
    %231 = memref.load %arg1[%c40] : memref<98xf32, #tpu.memory_space<smem>>
    %232 = vector.extract_strided_slice %25 {offsets = [5, 0], sizes = [16, 16], strides = [1, 1]} : vector<22x16xf32> to vector<16x16xf32>
    %233 = vector.broadcast %231 : f32 to vector<16x16xf32>
    %234 = arith.mulf %233, %232 : vector<16x16xf32>
    %235 = arith.addf %215, %234 : vector<16x16xf32>
    %c41 = arith.constant 41 : index
    %236 = memref.load %arg1[%c41] : memref<98xf32, #tpu.memory_space<smem>>
    %237 = vector.extract_strided_slice %26 {offsets = [5, 0], sizes = [16, 16], strides = [1, 1]} : vector<22x16xf32> to vector<16x16xf32>
    %238 = vector.broadcast %236 : f32 to vector<16x16xf32>
    %239 = arith.mulf %238, %237 : vector<16x16xf32>
    %240 = arith.addf %220, %239 : vector<16x16xf32>
    %c42 = arith.constant 42 : index
    %241 = memref.load %arg1[%c42] : memref<98xf32, #tpu.memory_space<smem>>
    %242 = vector.extract_strided_slice %20 {offsets = [6, 0], sizes = [16, 16], strides = [1, 1]} : vector<22x16xf32> to vector<16x16xf32>
    %243 = vector.broadcast %241 : f32 to vector<16x16xf32>
    %244 = arith.mulf %243, %242 : vector<16x16xf32>
    %245 = arith.addf %225, %244 : vector<16x16xf32>
    %c43 = arith.constant 43 : index
    %246 = memref.load %arg1[%c43] : memref<98xf32, #tpu.memory_space<smem>>
    %247 = vector.extract_strided_slice %21 {offsets = [6, 0], sizes = [16, 16], strides = [1, 1]} : vector<22x16xf32> to vector<16x16xf32>
    %248 = vector.broadcast %246 : f32 to vector<16x16xf32>
    %249 = arith.mulf %248, %247 : vector<16x16xf32>
    %250 = arith.addf %230, %249 : vector<16x16xf32>
    %c44 = arith.constant 44 : index
    %251 = memref.load %arg1[%c44] : memref<98xf32, #tpu.memory_space<smem>>
    %252 = vector.extract_strided_slice %22 {offsets = [6, 0], sizes = [16, 16], strides = [1, 1]} : vector<22x16xf32> to vector<16x16xf32>
    %253 = vector.broadcast %251 : f32 to vector<16x16xf32>
    %254 = arith.mulf %253, %252 : vector<16x16xf32>
    %255 = arith.addf %235, %254 : vector<16x16xf32>
    %c45 = arith.constant 45 : index
    %256 = memref.load %arg1[%c45] : memref<98xf32, #tpu.memory_space<smem>>
    %257 = vector.extract_strided_slice %23 {offsets = [6, 0], sizes = [16, 16], strides = [1, 1]} : vector<22x16xf32> to vector<16x16xf32>
    %258 = vector.broadcast %256 : f32 to vector<16x16xf32>
    %259 = arith.mulf %258, %257 : vector<16x16xf32>
    %260 = arith.addf %240, %259 : vector<16x16xf32>
    %c46 = arith.constant 46 : index
    %261 = memref.load %arg1[%c46] : memref<98xf32, #tpu.memory_space<smem>>
    %262 = vector.extract_strided_slice %24 {offsets = [6, 0], sizes = [16, 16], strides = [1, 1]} : vector<22x16xf32> to vector<16x16xf32>
    %263 = vector.broadcast %261 : f32 to vector<16x16xf32>
    %264 = arith.mulf %263, %262 : vector<16x16xf32>
    %265 = arith.addf %245, %264 : vector<16x16xf32>
    %c47 = arith.constant 47 : index
    %266 = memref.load %arg1[%c47] : memref<98xf32, #tpu.memory_space<smem>>
    %267 = vector.extract_strided_slice %25 {offsets = [6, 0], sizes = [16, 16], strides = [1, 1]} : vector<22x16xf32> to vector<16x16xf32>
    %268 = vector.broadcast %266 : f32 to vector<16x16xf32>
    %269 = arith.mulf %268, %267 : vector<16x16xf32>
    %270 = arith.addf %250, %269 : vector<16x16xf32>
    %c48 = arith.constant 48 : index
    %271 = memref.load %arg1[%c48] : memref<98xf32, #tpu.memory_space<smem>>
    %272 = vector.extract_strided_slice %26 {offsets = [6, 0], sizes = [16, 16], strides = [1, 1]} : vector<22x16xf32> to vector<16x16xf32>
    %273 = vector.broadcast %271 : f32 to vector<16x16xf32>
    %274 = arith.mulf %273, %272 : vector<16x16xf32>
    %275 = arith.addf %255, %274 : vector<16x16xf32>
    %276 = arith.addf %275, %260 : vector<16x16xf32>
    %277 = arith.addf %265, %270 : vector<16x16xf32>
    %278 = arith.addf %276, %277 : vector<16x16xf32>
    %c0_43 = arith.constant 0 : index
    %c0_44 = arith.constant 0 : index
    %279 = vector.load %arg5[%c0_43, %c0_44] : memref<22x22xf32, #tpu.memory_space<vmem>>, vector<22x16xf32>
    %c0_45 = arith.constant 0 : index
    %c1_46 = arith.constant 1 : index
    %280 = vector.load %arg5[%c0_45, %c1_46] : memref<22x22xf32, #tpu.memory_space<vmem>>, vector<22x16xf32>
    %c0_47 = arith.constant 0 : index
    %c2_48 = arith.constant 2 : index
    %281 = vector.load %arg5[%c0_47, %c2_48] : memref<22x22xf32, #tpu.memory_space<vmem>>, vector<22x16xf32>
    %c0_49 = arith.constant 0 : index
    %c3_50 = arith.constant 3 : index
    %282 = vector.load %arg5[%c0_49, %c3_50] : memref<22x22xf32, #tpu.memory_space<vmem>>, vector<22x16xf32>
    %c0_51 = arith.constant 0 : index
    %c4_52 = arith.constant 4 : index
    %283 = vector.load %arg5[%c0_51, %c4_52] : memref<22x22xf32, #tpu.memory_space<vmem>>, vector<22x16xf32>
    %c0_53 = arith.constant 0 : index
    %c5_54 = arith.constant 5 : index
    %284 = vector.load %arg5[%c0_53, %c5_54] : memref<22x22xf32, #tpu.memory_space<vmem>>, vector<22x16xf32>
    %c0_55 = arith.constant 0 : index
    %c6_56 = arith.constant 6 : index
    %285 = vector.load %arg5[%c0_55, %c6_56] : memref<22x22xf32, #tpu.memory_space<vmem>>, vector<22x16xf32>
    %cst_57 = arith.constant 0.000000e+00 : f32
    %286 = vector.broadcast %cst_57 : f32 to vector<16x16xf32>
    %cst_58 = arith.constant 0.000000e+00 : f32
    %287 = vector.broadcast %cst_58 : f32 to vector<16x16xf32>
    %cst_59 = arith.constant 0.000000e+00 : f32
    %288 = vector.broadcast %cst_59 : f32 to vector<16x16xf32>
    %cst_60 = arith.constant 0.000000e+00 : f32
    %289 = vector.broadcast %cst_60 : f32 to vector<16x16xf32>
    %c49 = arith.constant 49 : index
    %290 = memref.load %arg1[%c49] : memref<98xf32, #tpu.memory_space<smem>>
    %291 = vector.extract_strided_slice %279 {offsets = [0, 0], sizes = [16, 16], strides = [1, 1]} : vector<22x16xf32> to vector<16x16xf32>
    %292 = vector.broadcast %290 : f32 to vector<16x16xf32>
    %293 = arith.mulf %292, %291 : vector<16x16xf32>
    %294 = arith.addf %286, %293 : vector<16x16xf32>
    %c50 = arith.constant 50 : index
    %295 = memref.load %arg1[%c50] : memref<98xf32, #tpu.memory_space<smem>>
    %296 = vector.extract_strided_slice %280 {offsets = [0, 0], sizes = [16, 16], strides = [1, 1]} : vector<22x16xf32> to vector<16x16xf32>
    %297 = vector.broadcast %295 : f32 to vector<16x16xf32>
    %298 = arith.mulf %297, %296 : vector<16x16xf32>
    %299 = arith.addf %287, %298 : vector<16x16xf32>
    %c51 = arith.constant 51 : index
    %300 = memref.load %arg1[%c51] : memref<98xf32, #tpu.memory_space<smem>>
    %301 = vector.extract_strided_slice %281 {offsets = [0, 0], sizes = [16, 16], strides = [1, 1]} : vector<22x16xf32> to vector<16x16xf32>
    %302 = vector.broadcast %300 : f32 to vector<16x16xf32>
    %303 = arith.mulf %302, %301 : vector<16x16xf32>
    %304 = arith.addf %288, %303 : vector<16x16xf32>
    %c52 = arith.constant 52 : index
    %305 = memref.load %arg1[%c52] : memref<98xf32, #tpu.memory_space<smem>>
    %306 = vector.extract_strided_slice %282 {offsets = [0, 0], sizes = [16, 16], strides = [1, 1]} : vector<22x16xf32> to vector<16x16xf32>
    %307 = vector.broadcast %305 : f32 to vector<16x16xf32>
    %308 = arith.mulf %307, %306 : vector<16x16xf32>
    %309 = arith.addf %289, %308 : vector<16x16xf32>
    %c53 = arith.constant 53 : index
    %310 = memref.load %arg1[%c53] : memref<98xf32, #tpu.memory_space<smem>>
    %311 = vector.extract_strided_slice %283 {offsets = [0, 0], sizes = [16, 16], strides = [1, 1]} : vector<22x16xf32> to vector<16x16xf32>
    %312 = vector.broadcast %310 : f32 to vector<16x16xf32>
    %313 = arith.mulf %312, %311 : vector<16x16xf32>
    %314 = arith.addf %294, %313 : vector<16x16xf32>
    %c54 = arith.constant 54 : index
    %315 = memref.load %arg1[%c54] : memref<98xf32, #tpu.memory_space<smem>>
    %316 = vector.extract_strided_slice %284 {offsets = [0, 0], sizes = [16, 16], strides = [1, 1]} : vector<22x16xf32> to vector<16x16xf32>
    %317 = vector.broadcast %315 : f32 to vector<16x16xf32>
    %318 = arith.mulf %317, %316 : vector<16x16xf32>
    %319 = arith.addf %299, %318 : vector<16x16xf32>
    %c55 = arith.constant 55 : index
    %320 = memref.load %arg1[%c55] : memref<98xf32, #tpu.memory_space<smem>>
    %321 = vector.extract_strided_slice %285 {offsets = [0, 0], sizes = [16, 16], strides = [1, 1]} : vector<22x16xf32> to vector<16x16xf32>
    %322 = vector.broadcast %320 : f32 to vector<16x16xf32>
    %323 = arith.mulf %322, %321 : vector<16x16xf32>
    %324 = arith.addf %304, %323 : vector<16x16xf32>
    %c56 = arith.constant 56 : index
    %325 = memref.load %arg1[%c56] : memref<98xf32, #tpu.memory_space<smem>>
    %326 = vector.extract_strided_slice %279 {offsets = [1, 0], sizes = [16, 16], strides = [1, 1]} : vector<22x16xf32> to vector<16x16xf32>
    %327 = vector.broadcast %325 : f32 to vector<16x16xf32>
    %328 = arith.mulf %327, %326 : vector<16x16xf32>
    %329 = arith.addf %309, %328 : vector<16x16xf32>
    %c57 = arith.constant 57 : index
    %330 = memref.load %arg1[%c57] : memref<98xf32, #tpu.memory_space<smem>>
    %331 = vector.extract_strided_slice %280 {offsets = [1, 0], sizes = [16, 16], strides = [1, 1]} : vector<22x16xf32> to vector<16x16xf32>
    %332 = vector.broadcast %330 : f32 to vector<16x16xf32>
    %333 = arith.mulf %332, %331 : vector<16x16xf32>
    %334 = arith.addf %314, %333 : vector<16x16xf32>
    %c58 = arith.constant 58 : index
    %335 = memref.load %arg1[%c58] : memref<98xf32, #tpu.memory_space<smem>>
    %336 = vector.extract_strided_slice %281 {offsets = [1, 0], sizes = [16, 16], strides = [1, 1]} : vector<22x16xf32> to vector<16x16xf32>
    %337 = vector.broadcast %335 : f32 to vector<16x16xf32>
    %338 = arith.mulf %337, %336 : vector<16x16xf32>
    %339 = arith.addf %319, %338 : vector<16x16xf32>
    %c59 = arith.constant 59 : index
    %340 = memref.load %arg1[%c59] : memref<98xf32, #tpu.memory_space<smem>>
    %341 = vector.extract_strided_slice %282 {offsets = [1, 0], sizes = [16, 16], strides = [1, 1]} : vector<22x16xf32> to vector<16x16xf32>
    %342 = vector.broadcast %340 : f32 to vector<16x16xf32>
    %343 = arith.mulf %342, %341 : vector<16x16xf32>
    %344 = arith.addf %324, %343 : vector<16x16xf32>
    %c60 = arith.constant 60 : index
    %345 = memref.load %arg1[%c60] : memref<98xf32, #tpu.memory_space<smem>>
    %346 = vector.extract_strided_slice %283 {offsets = [1, 0], sizes = [16, 16], strides = [1, 1]} : vector<22x16xf32> to vector<16x16xf32>
    %347 = vector.broadcast %345 : f32 to vector<16x16xf32>
    %348 = arith.mulf %347, %346 : vector<16x16xf32>
    %349 = arith.addf %329, %348 : vector<16x16xf32>
    %c61 = arith.constant 61 : index
    %350 = memref.load %arg1[%c61] : memref<98xf32, #tpu.memory_space<smem>>
    %351 = vector.extract_strided_slice %284 {offsets = [1, 0], sizes = [16, 16], strides = [1, 1]} : vector<22x16xf32> to vector<16x16xf32>
    %352 = vector.broadcast %350 : f32 to vector<16x16xf32>
    %353 = arith.mulf %352, %351 : vector<16x16xf32>
    %354 = arith.addf %334, %353 : vector<16x16xf32>
    %c62 = arith.constant 62 : index
    %355 = memref.load %arg1[%c62] : memref<98xf32, #tpu.memory_space<smem>>
    %356 = vector.extract_strided_slice %285 {offsets = [1, 0], sizes = [16, 16], strides = [1, 1]} : vector<22x16xf32> to vector<16x16xf32>
    %357 = vector.broadcast %355 : f32 to vector<16x16xf32>
    %358 = arith.mulf %357, %356 : vector<16x16xf32>
    %359 = arith.addf %339, %358 : vector<16x16xf32>
    %c63 = arith.constant 63 : index
    %360 = memref.load %arg1[%c63] : memref<98xf32, #tpu.memory_space<smem>>
    %361 = vector.extract_strided_slice %279 {offsets = [2, 0], sizes = [16, 16], strides = [1, 1]} : vector<22x16xf32> to vector<16x16xf32>
    %362 = vector.broadcast %360 : f32 to vector<16x16xf32>
    %363 = arith.mulf %362, %361 : vector<16x16xf32>
    %364 = arith.addf %344, %363 : vector<16x16xf32>
    %c64 = arith.constant 64 : index
    %365 = memref.load %arg1[%c64] : memref<98xf32, #tpu.memory_space<smem>>
    %366 = vector.extract_strided_slice %280 {offsets = [2, 0], sizes = [16, 16], strides = [1, 1]} : vector<22x16xf32> to vector<16x16xf32>
    %367 = vector.broadcast %365 : f32 to vector<16x16xf32>
    %368 = arith.mulf %367, %366 : vector<16x16xf32>
    %369 = arith.addf %349, %368 : vector<16x16xf32>
    %c65 = arith.constant 65 : index
    %370 = memref.load %arg1[%c65] : memref<98xf32, #tpu.memory_space<smem>>
    %371 = vector.extract_strided_slice %281 {offsets = [2, 0], sizes = [16, 16], strides = [1, 1]} : vector<22x16xf32> to vector<16x16xf32>
    %372 = vector.broadcast %370 : f32 to vector<16x16xf32>
    %373 = arith.mulf %372, %371 : vector<16x16xf32>
    %374 = arith.addf %354, %373 : vector<16x16xf32>
    %c66 = arith.constant 66 : index
    %375 = memref.load %arg1[%c66] : memref<98xf32, #tpu.memory_space<smem>>
    %376 = vector.extract_strided_slice %282 {offsets = [2, 0], sizes = [16, 16], strides = [1, 1]} : vector<22x16xf32> to vector<16x16xf32>
    %377 = vector.broadcast %375 : f32 to vector<16x16xf32>
    %378 = arith.mulf %377, %376 : vector<16x16xf32>
    %379 = arith.addf %359, %378 : vector<16x16xf32>
    %c67 = arith.constant 67 : index
    %380 = memref.load %arg1[%c67] : memref<98xf32, #tpu.memory_space<smem>>
    %381 = vector.extract_strided_slice %283 {offsets = [2, 0], sizes = [16, 16], strides = [1, 1]} : vector<22x16xf32> to vector<16x16xf32>
    %382 = vector.broadcast %380 : f32 to vector<16x16xf32>
    %383 = arith.mulf %382, %381 : vector<16x16xf32>
    %384 = arith.addf %364, %383 : vector<16x16xf32>
    %c68 = arith.constant 68 : index
    %385 = memref.load %arg1[%c68] : memref<98xf32, #tpu.memory_space<smem>>
    %386 = vector.extract_strided_slice %284 {offsets = [2, 0], sizes = [16, 16], strides = [1, 1]} : vector<22x16xf32> to vector<16x16xf32>
    %387 = vector.broadcast %385 : f32 to vector<16x16xf32>
    %388 = arith.mulf %387, %386 : vector<16x16xf32>
    %389 = arith.addf %369, %388 : vector<16x16xf32>
    %c69 = arith.constant 69 : index
    %390 = memref.load %arg1[%c69] : memref<98xf32, #tpu.memory_space<smem>>
    %391 = vector.extract_strided_slice %285 {offsets = [2, 0], sizes = [16, 16], strides = [1, 1]} : vector<22x16xf32> to vector<16x16xf32>
    %392 = vector.broadcast %390 : f32 to vector<16x16xf32>
    %393 = arith.mulf %392, %391 : vector<16x16xf32>
    %394 = arith.addf %374, %393 : vector<16x16xf32>
    %c70 = arith.constant 70 : index
    %395 = memref.load %arg1[%c70] : memref<98xf32, #tpu.memory_space<smem>>
    %396 = vector.extract_strided_slice %279 {offsets = [3, 0], sizes = [16, 16], strides = [1, 1]} : vector<22x16xf32> to vector<16x16xf32>
    %397 = vector.broadcast %395 : f32 to vector<16x16xf32>
    %398 = arith.mulf %397, %396 : vector<16x16xf32>
    %399 = arith.addf %379, %398 : vector<16x16xf32>
    %c71 = arith.constant 71 : index
    %400 = memref.load %arg1[%c71] : memref<98xf32, #tpu.memory_space<smem>>
    %401 = vector.extract_strided_slice %280 {offsets = [3, 0], sizes = [16, 16], strides = [1, 1]} : vector<22x16xf32> to vector<16x16xf32>
    %402 = vector.broadcast %400 : f32 to vector<16x16xf32>
    %403 = arith.mulf %402, %401 : vector<16x16xf32>
    %404 = arith.addf %384, %403 : vector<16x16xf32>
    %c72 = arith.constant 72 : index
    %405 = memref.load %arg1[%c72] : memref<98xf32, #tpu.memory_space<smem>>
    %406 = vector.extract_strided_slice %281 {offsets = [3, 0], sizes = [16, 16], strides = [1, 1]} : vector<22x16xf32> to vector<16x16xf32>
    %407 = vector.broadcast %405 : f32 to vector<16x16xf32>
    %408 = arith.mulf %407, %406 : vector<16x16xf32>
    %409 = arith.addf %389, %408 : vector<16x16xf32>
    %c73 = arith.constant 73 : index
    %410 = memref.load %arg1[%c73] : memref<98xf32, #tpu.memory_space<smem>>
    %411 = vector.extract_strided_slice %282 {offsets = [3, 0], sizes = [16, 16], strides = [1, 1]} : vector<22x16xf32> to vector<16x16xf32>
    %412 = vector.broadcast %410 : f32 to vector<16x16xf32>
    %413 = arith.mulf %412, %411 : vector<16x16xf32>
    %414 = arith.addf %394, %413 : vector<16x16xf32>
    %c74 = arith.constant 74 : index
    %415 = memref.load %arg1[%c74] : memref<98xf32, #tpu.memory_space<smem>>
    %416 = vector.extract_strided_slice %283 {offsets = [3, 0], sizes = [16, 16], strides = [1, 1]} : vector<22x16xf32> to vector<16x16xf32>
    %417 = vector.broadcast %415 : f32 to vector<16x16xf32>
    %418 = arith.mulf %417, %416 : vector<16x16xf32>
    %419 = arith.addf %399, %418 : vector<16x16xf32>
    %c75 = arith.constant 75 : index
    %420 = memref.load %arg1[%c75] : memref<98xf32, #tpu.memory_space<smem>>
    %421 = vector.extract_strided_slice %284 {offsets = [3, 0], sizes = [16, 16], strides = [1, 1]} : vector<22x16xf32> to vector<16x16xf32>
    %422 = vector.broadcast %420 : f32 to vector<16x16xf32>
    %423 = arith.mulf %422, %421 : vector<16x16xf32>
    %424 = arith.addf %404, %423 : vector<16x16xf32>
    %c76 = arith.constant 76 : index
    %425 = memref.load %arg1[%c76] : memref<98xf32, #tpu.memory_space<smem>>
    %426 = vector.extract_strided_slice %285 {offsets = [3, 0], sizes = [16, 16], strides = [1, 1]} : vector<22x16xf32> to vector<16x16xf32>
    %427 = vector.broadcast %425 : f32 to vector<16x16xf32>
    %428 = arith.mulf %427, %426 : vector<16x16xf32>
    %429 = arith.addf %409, %428 : vector<16x16xf32>
    %c77 = arith.constant 77 : index
    %430 = memref.load %arg1[%c77] : memref<98xf32, #tpu.memory_space<smem>>
    %431 = vector.extract_strided_slice %279 {offsets = [4, 0], sizes = [16, 16], strides = [1, 1]} : vector<22x16xf32> to vector<16x16xf32>
    %432 = vector.broadcast %430 : f32 to vector<16x16xf32>
    %433 = arith.mulf %432, %431 : vector<16x16xf32>
    %434 = arith.addf %414, %433 : vector<16x16xf32>
    %c78 = arith.constant 78 : index
    %435 = memref.load %arg1[%c78] : memref<98xf32, #tpu.memory_space<smem>>
    %436 = vector.extract_strided_slice %280 {offsets = [4, 0], sizes = [16, 16], strides = [1, 1]} : vector<22x16xf32> to vector<16x16xf32>
    %437 = vector.broadcast %435 : f32 to vector<16x16xf32>
    %438 = arith.mulf %437, %436 : vector<16x16xf32>
    %439 = arith.addf %419, %438 : vector<16x16xf32>
    %c79 = arith.constant 79 : index
    %440 = memref.load %arg1[%c79] : memref<98xf32, #tpu.memory_space<smem>>
    %441 = vector.extract_strided_slice %281 {offsets = [4, 0], sizes = [16, 16], strides = [1, 1]} : vector<22x16xf32> to vector<16x16xf32>
    %442 = vector.broadcast %440 : f32 to vector<16x16xf32>
    %443 = arith.mulf %442, %441 : vector<16x16xf32>
    %444 = arith.addf %424, %443 : vector<16x16xf32>
    %c80 = arith.constant 80 : index
    %445 = memref.load %arg1[%c80] : memref<98xf32, #tpu.memory_space<smem>>
    %446 = vector.extract_strided_slice %282 {offsets = [4, 0], sizes = [16, 16], strides = [1, 1]} : vector<22x16xf32> to vector<16x16xf32>
    %447 = vector.broadcast %445 : f32 to vector<16x16xf32>
    %448 = arith.mulf %447, %446 : vector<16x16xf32>
    %449 = arith.addf %429, %448 : vector<16x16xf32>
    %c81 = arith.constant 81 : index
    %450 = memref.load %arg1[%c81] : memref<98xf32, #tpu.memory_space<smem>>
    %451 = vector.extract_strided_slice %283 {offsets = [4, 0], sizes = [16, 16], strides = [1, 1]} : vector<22x16xf32> to vector<16x16xf32>
    %452 = vector.broadcast %450 : f32 to vector<16x16xf32>
    %453 = arith.mulf %452, %451 : vector<16x16xf32>
    %454 = arith.addf %434, %453 : vector<16x16xf32>
    %c82 = arith.constant 82 : index
    %455 = memref.load %arg1[%c82] : memref<98xf32, #tpu.memory_space<smem>>
    %456 = vector.extract_strided_slice %284 {offsets = [4, 0], sizes = [16, 16], strides = [1, 1]} : vector<22x16xf32> to vector<16x16xf32>
    %457 = vector.broadcast %455 : f32 to vector<16x16xf32>
    %458 = arith.mulf %457, %456 : vector<16x16xf32>
    %459 = arith.addf %439, %458 : vector<16x16xf32>
    %c83 = arith.constant 83 : index
    %460 = memref.load %arg1[%c83] : memref<98xf32, #tpu.memory_space<smem>>
    %461 = vector.extract_strided_slice %285 {offsets = [4, 0], sizes = [16, 16], strides = [1, 1]} : vector<22x16xf32> to vector<16x16xf32>
    %462 = vector.broadcast %460 : f32 to vector<16x16xf32>
    %463 = arith.mulf %462, %461 : vector<16x16xf32>
    %464 = arith.addf %444, %463 : vector<16x16xf32>
    %c84 = arith.constant 84 : index
    %465 = memref.load %arg1[%c84] : memref<98xf32, #tpu.memory_space<smem>>
    %466 = vector.extract_strided_slice %279 {offsets = [5, 0], sizes = [16, 16], strides = [1, 1]} : vector<22x16xf32> to vector<16x16xf32>
    %467 = vector.broadcast %465 : f32 to vector<16x16xf32>
    %468 = arith.mulf %467, %466 : vector<16x16xf32>
    %469 = arith.addf %449, %468 : vector<16x16xf32>
    %c85 = arith.constant 85 : index
    %470 = memref.load %arg1[%c85] : memref<98xf32, #tpu.memory_space<smem>>
    %471 = vector.extract_strided_slice %280 {offsets = [5, 0], sizes = [16, 16], strides = [1, 1]} : vector<22x16xf32> to vector<16x16xf32>
    %472 = vector.broadcast %470 : f32 to vector<16x16xf32>
    %473 = arith.mulf %472, %471 : vector<16x16xf32>
    %474 = arith.addf %454, %473 : vector<16x16xf32>
    %c86 = arith.constant 86 : index
    %475 = memref.load %arg1[%c86] : memref<98xf32, #tpu.memory_space<smem>>
    %476 = vector.extract_strided_slice %281 {offsets = [5, 0], sizes = [16, 16], strides = [1, 1]} : vector<22x16xf32> to vector<16x16xf32>
    %477 = vector.broadcast %475 : f32 to vector<16x16xf32>
    %478 = arith.mulf %477, %476 : vector<16x16xf32>
    %479 = arith.addf %459, %478 : vector<16x16xf32>
    %c87 = arith.constant 87 : index
    %480 = memref.load %arg1[%c87] : memref<98xf32, #tpu.memory_space<smem>>
    %481 = vector.extract_strided_slice %282 {offsets = [5, 0], sizes = [16, 16], strides = [1, 1]} : vector<22x16xf32> to vector<16x16xf32>
    %482 = vector.broadcast %480 : f32 to vector<16x16xf32>
    %483 = arith.mulf %482, %481 : vector<16x16xf32>
    %484 = arith.addf %464, %483 : vector<16x16xf32>
    %c88 = arith.constant 88 : index
    %485 = memref.load %arg1[%c88] : memref<98xf32, #tpu.memory_space<smem>>
    %486 = vector.extract_strided_slice %283 {offsets = [5, 0], sizes = [16, 16], strides = [1, 1]} : vector<22x16xf32> to vector<16x16xf32>
    %487 = vector.broadcast %485 : f32 to vector<16x16xf32>
    %488 = arith.mulf %487, %486 : vector<16x16xf32>
    %489 = arith.addf %469, %488 : vector<16x16xf32>
    %c89 = arith.constant 89 : index
    %490 = memref.load %arg1[%c89] : memref<98xf32, #tpu.memory_space<smem>>
    %491 = vector.extract_strided_slice %284 {offsets = [5, 0], sizes = [16, 16], strides = [1, 1]} : vector<22x16xf32> to vector<16x16xf32>
    %492 = vector.broadcast %490 : f32 to vector<16x16xf32>
    %493 = arith.mulf %492, %491 : vector<16x16xf32>
    %494 = arith.addf %474, %493 : vector<16x16xf32>
    %c90 = arith.constant 90 : index
    %495 = memref.load %arg1[%c90] : memref<98xf32, #tpu.memory_space<smem>>
    %496 = vector.extract_strided_slice %285 {offsets = [5, 0], sizes = [16, 16], strides = [1, 1]} : vector<22x16xf32> to vector<16x16xf32>
    %497 = vector.broadcast %495 : f32 to vector<16x16xf32>
    %498 = arith.mulf %497, %496 : vector<16x16xf32>
    %499 = arith.addf %479, %498 : vector<16x16xf32>
    %c91 = arith.constant 91 : index
    %500 = memref.load %arg1[%c91] : memref<98xf32, #tpu.memory_space<smem>>
    %501 = vector.extract_strided_slice %279 {offsets = [6, 0], sizes = [16, 16], strides = [1, 1]} : vector<22x16xf32> to vector<16x16xf32>
    %502 = vector.broadcast %500 : f32 to vector<16x16xf32>
    %503 = arith.mulf %502, %501 : vector<16x16xf32>
    %504 = arith.addf %484, %503 : vector<16x16xf32>
    %c92 = arith.constant 92 : index
    %505 = memref.load %arg1[%c92] : memref<98xf32, #tpu.memory_space<smem>>
    %506 = vector.extract_strided_slice %280 {offsets = [6, 0], sizes = [16, 16], strides = [1, 1]} : vector<22x16xf32> to vector<16x16xf32>
    %507 = vector.broadcast %505 : f32 to vector<16x16xf32>
    %508 = arith.mulf %507, %506 : vector<16x16xf32>
    %509 = arith.addf %489, %508 : vector<16x16xf32>
    %c93 = arith.constant 93 : index
    %510 = memref.load %arg1[%c93] : memref<98xf32, #tpu.memory_space<smem>>
    %511 = vector.extract_strided_slice %281 {offsets = [6, 0], sizes = [16, 16], strides = [1, 1]} : vector<22x16xf32> to vector<16x16xf32>
    %512 = vector.broadcast %510 : f32 to vector<16x16xf32>
    %513 = arith.mulf %512, %511 : vector<16x16xf32>
    %514 = arith.addf %494, %513 : vector<16x16xf32>
    %c94 = arith.constant 94 : index
    %515 = memref.load %arg1[%c94] : memref<98xf32, #tpu.memory_space<smem>>
    %516 = vector.extract_strided_slice %282 {offsets = [6, 0], sizes = [16, 16], strides = [1, 1]} : vector<22x16xf32> to vector<16x16xf32>
    %517 = vector.broadcast %515 : f32 to vector<16x16xf32>
    %518 = arith.mulf %517, %516 : vector<16x16xf32>
    %519 = arith.addf %499, %518 : vector<16x16xf32>
    %c95 = arith.constant 95 : index
    %520 = memref.load %arg1[%c95] : memref<98xf32, #tpu.memory_space<smem>>
    %521 = vector.extract_strided_slice %283 {offsets = [6, 0], sizes = [16, 16], strides = [1, 1]} : vector<22x16xf32> to vector<16x16xf32>
    %522 = vector.broadcast %520 : f32 to vector<16x16xf32>
    %523 = arith.mulf %522, %521 : vector<16x16xf32>
    %524 = arith.addf %504, %523 : vector<16x16xf32>
    %c96 = arith.constant 96 : index
    %525 = memref.load %arg1[%c96] : memref<98xf32, #tpu.memory_space<smem>>
    %526 = vector.extract_strided_slice %284 {offsets = [6, 0], sizes = [16, 16], strides = [1, 1]} : vector<22x16xf32> to vector<16x16xf32>
    %527 = vector.broadcast %525 : f32 to vector<16x16xf32>
    %528 = arith.mulf %527, %526 : vector<16x16xf32>
    %529 = arith.addf %509, %528 : vector<16x16xf32>
    %c97 = arith.constant 97 : index
    %530 = memref.load %arg1[%c97] : memref<98xf32, #tpu.memory_space<smem>>
    %531 = vector.extract_strided_slice %285 {offsets = [6, 0], sizes = [16, 16], strides = [1, 1]} : vector<22x16xf32> to vector<16x16xf32>
    %532 = vector.broadcast %530 : f32 to vector<16x16xf32>
    %533 = arith.mulf %532, %531 : vector<16x16xf32>
    %534 = arith.addf %514, %533 : vector<16x16xf32>
    %535 = arith.addf %534, %519 : vector<16x16xf32>
    %536 = arith.addf %524, %529 : vector<16x16xf32>
    %537 = arith.addf %535, %536 : vector<16x16xf32>
    %538 = arith.addf %278, %537 : vector<16x16xf32>
    %c0_61 = arith.constant 0 : index
    %c0_62 = arith.constant 0 : index
    %c0_63 = arith.constant 0 : index
    %c0_64 = arith.constant 0 : index
    %539 = vector.load %arg3[%c0_61, %c0_62, %c0_63, %c0_64] : memref<2x1x16x16xf32, #tpu.memory_space<vmem>>, vector<1x1x16x16xf32>
    %540 = vector.shape_cast %539 : vector<1x1x16x16xf32> to vector<16x16xf32>
    %541 = vector.shape_cast %538 : vector<16x16xf32> to vector<1x1x16x16xf32>
    tpu.vector_store %arg3[%c0_61, %c0_62, %c0_63, %c0_64], %541 {strides = array<i32>} : memref<2x1x16x16xf32, #tpu.memory_space<vmem>>, vector<1x1x16x16xf32>,
    %c1_65 = arith.constant 1 : index
    %c0_66 = arith.constant 0 : index
    %c0_67 = arith.constant 0 : index
    %c0_68 = arith.constant 0 : index
    %542 = vector.load %arg2[%c1_65, %c0_66, %c0_67, %c0_68] : memref<2x4x16x16xf32, #tpu.memory_space<vmem>>, vector<1x1x16x16xf32>
    %543 = vector.shape_cast %542 : vector<1x1x16x16xf32> to vector<16x16xf32>
    %c1_69 = arith.constant 1 : index
    %c1_70 = arith.constant 1 : index
    %c0_71 = arith.constant 0 : index
    %c0_72 = arith.constant 0 : index
    %544 = vector.load %arg2[%c1_69, %c1_70, %c0_71, %c0_72] : memref<2x4x16x16xf32, #tpu.memory_space<vmem>>, vector<1x1x16x16xf32>
    %545 = vector.shape_cast %544 : vector<1x1x16x16xf32> to vector<16x16xf32>
    %c1_73 = arith.constant 1 : index
    %c2_74 = arith.constant 2 : index
    %c0_75 = arith.constant 0 : index
    %c0_76 = arith.constant 0 : index
    %546 = vector.load %arg2[%c1_73, %c2_74, %c0_75, %c0_76] : memref<2x4x16x16xf32, #tpu.memory_space<vmem>>, vector<1x1x16x16xf32>
    %547 = vector.shape_cast %546 : vector<1x1x16x16xf32> to vector<16x16xf32>
    %c1_77 = arith.constant 1 : index
    %c3_78 = arith.constant 3 : index
    %c0_79 = arith.constant 0 : index
    %c0_80 = arith.constant 0 : index
    %548 = vector.load %arg2[%c1_77, %c3_78, %c0_79, %c0_80] : memref<2x4x16x16xf32, #tpu.memory_space<vmem>>, vector<1x1x16x16xf32>
    %549 = vector.shape_cast %548 : vector<1x1x16x16xf32> to vector<16x16xf32>
    %550 = arith.addf %543, %545 : vector<16x16xf32>
    %551 = arith.addf %547, %549 : vector<16x16xf32>
    %552 = arith.addf %550, %551 : vector<16x16xf32>
    %553 = arith.maximumf %543, %545 : vector<16x16xf32>
    %554 = arith.maximumf %547, %549 : vector<16x16xf32>
    %555 = arith.maximumf %553, %554 : vector<16x16xf32>
    %c3_81 = arith.constant 3 : index
    %c3_82 = arith.constant 3 : index
    %556 = vector.load %arg4[%c3_81, %c3_82] : memref<22x22xf32, #tpu.memory_space<vmem>>, vector<16x16xf32>
    tpu.vector_store %arg4[%c3_81, %c3_82], %552 {strides = array<i32>} : memref<22x22xf32, #tpu.memory_space<vmem>>, vector<16x16xf32>,
    %c3_83 = arith.constant 3 : index
    %c3_84 = arith.constant 3 : index
    %557 = vector.load %arg5[%c3_83, %c3_84] : memref<22x22xf32, #tpu.memory_space<vmem>>, vector<16x16xf32>
    tpu.vector_store %arg5[%c3_83, %c3_84], %555 {strides = array<i32>} : memref<22x22xf32, #tpu.memory_space<vmem>>, vector<16x16xf32>,
    %c0_85 = arith.constant 0 : index
    %c0_86 = arith.constant 0 : index
    %558 = vector.load %arg4[%c0_85, %c0_86] : memref<22x22xf32, #tpu.memory_space<vmem>>, vector<22x16xf32>
    %c0_87 = arith.constant 0 : index
    %c1_88 = arith.constant 1 : index
    %559 = vector.load %arg4[%c0_87, %c1_88] : memref<22x22xf32, #tpu.memory_space<vmem>>, vector<22x16xf32>
    %c0_89 = arith.constant 0 : index
    %c2_90 = arith.constant 2 : index
    %560 = vector.load %arg4[%c0_89, %c2_90] : memref<22x22xf32, #tpu.memory_space<vmem>>, vector<22x16xf32>
    %c0_91 = arith.constant 0 : index
    %c3_92 = arith.constant 3 : index
    %561 = vector.load %arg4[%c0_91, %c3_92] : memref<22x22xf32, #tpu.memory_space<vmem>>, vector<22x16xf32>
    %c0_93 = arith.constant 0 : index
    %c4_94 = arith.constant 4 : index
    %562 = vector.load %arg4[%c0_93, %c4_94] : memref<22x22xf32, #tpu.memory_space<vmem>>, vector<22x16xf32>
    %c0_95 = arith.constant 0 : index
    %c5_96 = arith.constant 5 : index
    %563 = vector.load %arg4[%c0_95, %c5_96] : memref<22x22xf32, #tpu.memory_space<vmem>>, vector<22x16xf32>
    %c0_97 = arith.constant 0 : index
    %c6_98 = arith.constant 6 : index
    %564 = vector.load %arg4[%c0_97, %c6_98] : memref<22x22xf32, #tpu.memory_space<vmem>>, vector<22x16xf32>
    %cst_99 = arith.constant 0.000000e+00 : f32
    %565 = vector.broadcast %cst_99 : f32 to vector<16x16xf32>
    %cst_100 = arith.constant 0.000000e+00 : f32
    %566 = vector.broadcast %cst_100 : f32 to vector<16x16xf32>
    %cst_101 = arith.constant 0.000000e+00 : f32
    %567 = vector.broadcast %cst_101 : f32 to vector<16x16xf32>
    %cst_102 = arith.constant 0.000000e+00 : f32
    %568 = vector.broadcast %cst_102 : f32 to vector<16x16xf32>
    %c0_103 = arith.constant 0 : index
    %569 = memref.load %arg1[%c0_103] : memref<98xf32, #tpu.memory_space<smem>>
    %570 = vector.extract_strided_slice %558 {offsets = [0, 0], sizes = [16, 16], strides = [1, 1]} : vector<22x16xf32> to vector<16x16xf32>
    %571 = vector.broadcast %569 : f32 to vector<16x16xf32>
    %572 = arith.mulf %571, %570 : vector<16x16xf32>
    %573 = arith.addf %565, %572 : vector<16x16xf32>
    %c1_104 = arith.constant 1 : index
    %574 = memref.load %arg1[%c1_104] : memref<98xf32, #tpu.memory_space<smem>>
    %575 = vector.extract_strided_slice %559 {offsets = [0, 0], sizes = [16, 16], strides = [1, 1]} : vector<22x16xf32> to vector<16x16xf32>
    %576 = vector.broadcast %574 : f32 to vector<16x16xf32>
    %577 = arith.mulf %576, %575 : vector<16x16xf32>
    %578 = arith.addf %566, %577 : vector<16x16xf32>
    %c2_105 = arith.constant 2 : index
    %579 = memref.load %arg1[%c2_105] : memref<98xf32, #tpu.memory_space<smem>>
    %580 = vector.extract_strided_slice %560 {offsets = [0, 0], sizes = [16, 16], strides = [1, 1]} : vector<22x16xf32> to vector<16x16xf32>
    %581 = vector.broadcast %579 : f32 to vector<16x16xf32>
    %582 = arith.mulf %581, %580 : vector<16x16xf32>
    %583 = arith.addf %567, %582 : vector<16x16xf32>
    %c3_106 = arith.constant 3 : index
    %584 = memref.load %arg1[%c3_106] : memref<98xf32, #tpu.memory_space<smem>>
    %585 = vector.extract_strided_slice %561 {offsets = [0, 0], sizes = [16, 16], strides = [1, 1]} : vector<22x16xf32> to vector<16x16xf32>
    %586 = vector.broadcast %584 : f32 to vector<16x16xf32>
    %587 = arith.mulf %586, %585 : vector<16x16xf32>
    %588 = arith.addf %568, %587 : vector<16x16xf32>
    %c4_107 = arith.constant 4 : index
    %589 = memref.load %arg1[%c4_107] : memref<98xf32, #tpu.memory_space<smem>>
    %590 = vector.extract_strided_slice %562 {offsets = [0, 0], sizes = [16, 16], strides = [1, 1]} : vector<22x16xf32> to vector<16x16xf32>
    %591 = vector.broadcast %589 : f32 to vector<16x16xf32>
    %592 = arith.mulf %591, %590 : vector<16x16xf32>
    %593 = arith.addf %573, %592 : vector<16x16xf32>
    %c5_108 = arith.constant 5 : index
    %594 = memref.load %arg1[%c5_108] : memref<98xf32, #tpu.memory_space<smem>>
    %595 = vector.extract_strided_slice %563 {offsets = [0, 0], sizes = [16, 16], strides = [1, 1]} : vector<22x16xf32> to vector<16x16xf32>
    %596 = vector.broadcast %594 : f32 to vector<16x16xf32>
    %597 = arith.mulf %596, %595 : vector<16x16xf32>
    %598 = arith.addf %578, %597 : vector<16x16xf32>
    %c6_109 = arith.constant 6 : index
    %599 = memref.load %arg1[%c6_109] : memref<98xf32, #tpu.memory_space<smem>>
    %600 = vector.extract_strided_slice %564 {offsets = [0, 0], sizes = [16, 16], strides = [1, 1]} : vector<22x16xf32> to vector<16x16xf32>
    %601 = vector.broadcast %599 : f32 to vector<16x16xf32>
    %602 = arith.mulf %601, %600 : vector<16x16xf32>
    %603 = arith.addf %583, %602 : vector<16x16xf32>
    %c7_110 = arith.constant 7 : index
    %604 = memref.load %arg1[%c7_110] : memref<98xf32, #tpu.memory_space<smem>>
    %605 = vector.extract_strided_slice %558 {offsets = [1, 0], sizes = [16, 16], strides = [1, 1]} : vector<22x16xf32> to vector<16x16xf32>
    %606 = vector.broadcast %604 : f32 to vector<16x16xf32>
    %607 = arith.mulf %606, %605 : vector<16x16xf32>
    %608 = arith.addf %588, %607 : vector<16x16xf32>
    %c8_111 = arith.constant 8 : index
    %609 = memref.load %arg1[%c8_111] : memref<98xf32, #tpu.memory_space<smem>>
    %610 = vector.extract_strided_slice %559 {offsets = [1, 0], sizes = [16, 16], strides = [1, 1]} : vector<22x16xf32> to vector<16x16xf32>
    %611 = vector.broadcast %609 : f32 to vector<16x16xf32>
    %612 = arith.mulf %611, %610 : vector<16x16xf32>
    %613 = arith.addf %593, %612 : vector<16x16xf32>
    %c9_112 = arith.constant 9 : index
    %614 = memref.load %arg1[%c9_112] : memref<98xf32, #tpu.memory_space<smem>>
    %615 = vector.extract_strided_slice %560 {offsets = [1, 0], sizes = [16, 16], strides = [1, 1]} : vector<22x16xf32> to vector<16x16xf32>
    %616 = vector.broadcast %614 : f32 to vector<16x16xf32>
    %617 = arith.mulf %616, %615 : vector<16x16xf32>
    %618 = arith.addf %598, %617 : vector<16x16xf32>
    %c10_113 = arith.constant 10 : index
    %619 = memref.load %arg1[%c10_113] : memref<98xf32, #tpu.memory_space<smem>>
    %620 = vector.extract_strided_slice %561 {offsets = [1, 0], sizes = [16, 16], strides = [1, 1]} : vector<22x16xf32> to vector<16x16xf32>
    %621 = vector.broadcast %619 : f32 to vector<16x16xf32>
    %622 = arith.mulf %621, %620 : vector<16x16xf32>
    %623 = arith.addf %603, %622 : vector<16x16xf32>
    %c11_114 = arith.constant 11 : index
    %624 = memref.load %arg1[%c11_114] : memref<98xf32, #tpu.memory_space<smem>>
    %625 = vector.extract_strided_slice %562 {offsets = [1, 0], sizes = [16, 16], strides = [1, 1]} : vector<22x16xf32> to vector<16x16xf32>
    %626 = vector.broadcast %624 : f32 to vector<16x16xf32>
    %627 = arith.mulf %626, %625 : vector<16x16xf32>
    %628 = arith.addf %608, %627 : vector<16x16xf32>
    %c12_115 = arith.constant 12 : index
    %629 = memref.load %arg1[%c12_115] : memref<98xf32, #tpu.memory_space<smem>>
    %630 = vector.extract_strided_slice %563 {offsets = [1, 0], sizes = [16, 16], strides = [1, 1]} : vector<22x16xf32> to vector<16x16xf32>
    %631 = vector.broadcast %629 : f32 to vector<16x16xf32>
    %632 = arith.mulf %631, %630 : vector<16x16xf32>
    %633 = arith.addf %613, %632 : vector<16x16xf32>
    %c13_116 = arith.constant 13 : index
    %634 = memref.load %arg1[%c13_116] : memref<98xf32, #tpu.memory_space<smem>>
    %635 = vector.extract_strided_slice %564 {offsets = [1, 0], sizes = [16, 16], strides = [1, 1]} : vector<22x16xf32> to vector<16x16xf32>
    %636 = vector.broadcast %634 : f32 to vector<16x16xf32>
    %637 = arith.mulf %636, %635 : vector<16x16xf32>
    %638 = arith.addf %618, %637 : vector<16x16xf32>
    %c14_117 = arith.constant 14 : index
    %639 = memref.load %arg1[%c14_117] : memref<98xf32, #tpu.memory_space<smem>>
    %640 = vector.extract_strided_slice %558 {offsets = [2, 0], sizes = [16, 16], strides = [1, 1]} : vector<22x16xf32> to vector<16x16xf32>
    %641 = vector.broadcast %639 : f32 to vector<16x16xf32>
    %642 = arith.mulf %641, %640 : vector<16x16xf32>
    %643 = arith.addf %623, %642 : vector<16x16xf32>
    %c15_118 = arith.constant 15 : index
    %644 = memref.load %arg1[%c15_118] : memref<98xf32, #tpu.memory_space<smem>>
    %645 = vector.extract_strided_slice %559 {offsets = [2, 0], sizes = [16, 16], strides = [1, 1]} : vector<22x16xf32> to vector<16x16xf32>
    %646 = vector.broadcast %644 : f32 to vector<16x16xf32>
    %647 = arith.mulf %646, %645 : vector<16x16xf32>
    %648 = arith.addf %628, %647 : vector<16x16xf32>
    %c16_119 = arith.constant 16 : index
    %649 = memref.load %arg1[%c16_119] : memref<98xf32, #tpu.memory_space<smem>>
    %650 = vector.extract_strided_slice %560 {offsets = [2, 0], sizes = [16, 16], strides = [1, 1]} : vector<22x16xf32> to vector<16x16xf32>
    %651 = vector.broadcast %649 : f32 to vector<16x16xf32>
    %652 = arith.mulf %651, %650 : vector<16x16xf32>
    %653 = arith.addf %633, %652 : vector<16x16xf32>
    %c17_120 = arith.constant 17 : index
    %654 = memref.load %arg1[%c17_120] : memref<98xf32, #tpu.memory_space<smem>>
    %655 = vector.extract_strided_slice %561 {offsets = [2, 0], sizes = [16, 16], strides = [1, 1]} : vector<22x16xf32> to vector<16x16xf32>
    %656 = vector.broadcast %654 : f32 to vector<16x16xf32>
    %657 = arith.mulf %656, %655 : vector<16x16xf32>
    %658 = arith.addf %638, %657 : vector<16x16xf32>
    %c18_121 = arith.constant 18 : index
    %659 = memref.load %arg1[%c18_121] : memref<98xf32, #tpu.memory_space<smem>>
    %660 = vector.extract_strided_slice %562 {offsets = [2, 0], sizes = [16, 16], strides = [1, 1]} : vector<22x16xf32> to vector<16x16xf32>
    %661 = vector.broadcast %659 : f32 to vector<16x16xf32>
    %662 = arith.mulf %661, %660 : vector<16x16xf32>
    %663 = arith.addf %643, %662 : vector<16x16xf32>
    %c19_122 = arith.constant 19 : index
    %664 = memref.load %arg1[%c19_122] : memref<98xf32, #tpu.memory_space<smem>>
    %665 = vector.extract_strided_slice %563 {offsets = [2, 0], sizes = [16, 16], strides = [1, 1]} : vector<22x16xf32> to vector<16x16xf32>
    %666 = vector.broadcast %664 : f32 to vector<16x16xf32>
    %667 = arith.mulf %666, %665 : vector<16x16xf32>
    %668 = arith.addf %648, %667 : vector<16x16xf32>
    %c20_123 = arith.constant 20 : index
    %669 = memref.load %arg1[%c20_123] : memref<98xf32, #tpu.memory_space<smem>>
    %670 = vector.extract_strided_slice %564 {offsets = [2, 0], sizes = [16, 16], strides = [1, 1]} : vector<22x16xf32> to vector<16x16xf32>
    %671 = vector.broadcast %669 : f32 to vector<16x16xf32>
    %672 = arith.mulf %671, %670 : vector<16x16xf32>
    %673 = arith.addf %653, %672 : vector<16x16xf32>
    %c21_124 = arith.constant 21 : index
    %674 = memref.load %arg1[%c21_124] : memref<98xf32, #tpu.memory_space<smem>>
    %675 = vector.extract_strided_slice %558 {offsets = [3, 0], sizes = [16, 16], strides = [1, 1]} : vector<22x16xf32> to vector<16x16xf32>
    %676 = vector.broadcast %674 : f32 to vector<16x16xf32>
    %677 = arith.mulf %676, %675 : vector<16x16xf32>
    %678 = arith.addf %658, %677 : vector<16x16xf32>
    %c22_125 = arith.constant 22 : index
    %679 = memref.load %arg1[%c22_125] : memref<98xf32, #tpu.memory_space<smem>>
    %680 = vector.extract_strided_slice %559 {offsets = [3, 0], sizes = [16, 16], strides = [1, 1]} : vector<22x16xf32> to vector<16x16xf32>
    %681 = vector.broadcast %679 : f32 to vector<16x16xf32>
    %682 = arith.mulf %681, %680 : vector<16x16xf32>
    %683 = arith.addf %663, %682 : vector<16x16xf32>
    %c23_126 = arith.constant 23 : index
    %684 = memref.load %arg1[%c23_126] : memref<98xf32, #tpu.memory_space<smem>>
    %685 = vector.extract_strided_slice %560 {offsets = [3, 0], sizes = [16, 16], strides = [1, 1]} : vector<22x16xf32> to vector<16x16xf32>
    %686 = vector.broadcast %684 : f32 to vector<16x16xf32>
    %687 = arith.mulf %686, %685 : vector<16x16xf32>
    %688 = arith.addf %668, %687 : vector<16x16xf32>
    %c24_127 = arith.constant 24 : index
    %689 = memref.load %arg1[%c24_127] : memref<98xf32, #tpu.memory_space<smem>>
    %690 = vector.extract_strided_slice %561 {offsets = [3, 0], sizes = [16, 16], strides = [1, 1]} : vector<22x16xf32> to vector<16x16xf32>
    %691 = vector.broadcast %689 : f32 to vector<16x16xf32>
    %692 = arith.mulf %691, %690 : vector<16x16xf32>
    %693 = arith.addf %673, %692 : vector<16x16xf32>
    %c25_128 = arith.constant 25 : index
    %694 = memref.load %arg1[%c25_128] : memref<98xf32, #tpu.memory_space<smem>>
    %695 = vector.extract_strided_slice %562 {offsets = [3, 0], sizes = [16, 16], strides = [1, 1]} : vector<22x16xf32> to vector<16x16xf32>
    %696 = vector.broadcast %694 : f32 to vector<16x16xf32>
    %697 = arith.mulf %696, %695 : vector<16x16xf32>
    %698 = arith.addf %678, %697 : vector<16x16xf32>
    %c26_129 = arith.constant 26 : index
    %699 = memref.load %arg1[%c26_129] : memref<98xf32, #tpu.memory_space<smem>>
    %700 = vector.extract_strided_slice %563 {offsets = [3, 0], sizes = [16, 16], strides = [1, 1]} : vector<22x16xf32> to vector<16x16xf32>
    %701 = vector.broadcast %699 : f32 to vector<16x16xf32>
    %702 = arith.mulf %701, %700 : vector<16x16xf32>
    %703 = arith.addf %683, %702 : vector<16x16xf32>
    %c27_130 = arith.constant 27 : index
    %704 = memref.load %arg1[%c27_130] : memref<98xf32, #tpu.memory_space<smem>>
    %705 = vector.extract_strided_slice %564 {offsets = [3, 0], sizes = [16, 16], strides = [1, 1]} : vector<22x16xf32> to vector<16x16xf32>
    %706 = vector.broadcast %704 : f32 to vector<16x16xf32>
    %707 = arith.mulf %706, %705 : vector<16x16xf32>
    %708 = arith.addf %688, %707 : vector<16x16xf32>
    %c28_131 = arith.constant 28 : index
    %709 = memref.load %arg1[%c28_131] : memref<98xf32, #tpu.memory_space<smem>>
    %710 = vector.extract_strided_slice %558 {offsets = [4, 0], sizes = [16, 16], strides = [1, 1]} : vector<22x16xf32> to vector<16x16xf32>
    %711 = vector.broadcast %709 : f32 to vector<16x16xf32>
    %712 = arith.mulf %711, %710 : vector<16x16xf32>
    %713 = arith.addf %693, %712 : vector<16x16xf32>
    %c29_132 = arith.constant 29 : index
    %714 = memref.load %arg1[%c29_132] : memref<98xf32, #tpu.memory_space<smem>>
    %715 = vector.extract_strided_slice %559 {offsets = [4, 0], sizes = [16, 16], strides = [1, 1]} : vector<22x16xf32> to vector<16x16xf32>
    %716 = vector.broadcast %714 : f32 to vector<16x16xf32>
    %717 = arith.mulf %716, %715 : vector<16x16xf32>
    %718 = arith.addf %698, %717 : vector<16x16xf32>
    %c30_133 = arith.constant 30 : index
    %719 = memref.load %arg1[%c30_133] : memref<98xf32, #tpu.memory_space<smem>>
    %720 = vector.extract_strided_slice %560 {offsets = [4, 0], sizes = [16, 16], strides = [1, 1]} : vector<22x16xf32> to vector<16x16xf32>
    %721 = vector.broadcast %719 : f32 to vector<16x16xf32>
    %722 = arith.mulf %721, %720 : vector<16x16xf32>
    %723 = arith.addf %703, %722 : vector<16x16xf32>
    %c31_134 = arith.constant 31 : index
    %724 = memref.load %arg1[%c31_134] : memref<98xf32, #tpu.memory_space<smem>>
    %725 = vector.extract_strided_slice %561 {offsets = [4, 0], sizes = [16, 16], strides = [1, 1]} : vector<22x16xf32> to vector<16x16xf32>
    %726 = vector.broadcast %724 : f32 to vector<16x16xf32>
    %727 = arith.mulf %726, %725 : vector<16x16xf32>
    %728 = arith.addf %708, %727 : vector<16x16xf32>
    %c32_135 = arith.constant 32 : index
    %729 = memref.load %arg1[%c32_135] : memref<98xf32, #tpu.memory_space<smem>>
    %730 = vector.extract_strided_slice %562 {offsets = [4, 0], sizes = [16, 16], strides = [1, 1]} : vector<22x16xf32> to vector<16x16xf32>
    %731 = vector.broadcast %729 : f32 to vector<16x16xf32>
    %732 = arith.mulf %731, %730 : vector<16x16xf32>
    %733 = arith.addf %713, %732 : vector<16x16xf32>
    %c33_136 = arith.constant 33 : index
    %734 = memref.load %arg1[%c33_136] : memref<98xf32, #tpu.memory_space<smem>>
    %735 = vector.extract_strided_slice %563 {offsets = [4, 0], sizes = [16, 16], strides = [1, 1]} : vector<22x16xf32> to vector<16x16xf32>
    %736 = vector.broadcast %734 : f32 to vector<16x16xf32>
    %737 = arith.mulf %736, %735 : vector<16x16xf32>
    %738 = arith.addf %718, %737 : vector<16x16xf32>
    %c34_137 = arith.constant 34 : index
    %739 = memref.load %arg1[%c34_137] : memref<98xf32, #tpu.memory_space<smem>>
    %740 = vector.extract_strided_slice %564 {offsets = [4, 0], sizes = [16, 16], strides = [1, 1]} : vector<22x16xf32> to vector<16x16xf32>
    %741 = vector.broadcast %739 : f32 to vector<16x16xf32>
    %742 = arith.mulf %741, %740 : vector<16x16xf32>
    %743 = arith.addf %723, %742 : vector<16x16xf32>
    %c35_138 = arith.constant 35 : index
    %744 = memref.load %arg1[%c35_138] : memref<98xf32, #tpu.memory_space<smem>>
    %745 = vector.extract_strided_slice %558 {offsets = [5, 0], sizes = [16, 16], strides = [1, 1]} : vector<22x16xf32> to vector<16x16xf32>
    %746 = vector.broadcast %744 : f32 to vector<16x16xf32>
    %747 = arith.mulf %746, %745 : vector<16x16xf32>
    %748 = arith.addf %728, %747 : vector<16x16xf32>
    %c36_139 = arith.constant 36 : index
    %749 = memref.load %arg1[%c36_139] : memref<98xf32, #tpu.memory_space<smem>>
    %750 = vector.extract_strided_slice %559 {offsets = [5, 0], sizes = [16, 16], strides = [1, 1]} : vector<22x16xf32> to vector<16x16xf32>
    %751 = vector.broadcast %749 : f32 to vector<16x16xf32>
    %752 = arith.mulf %751, %750 : vector<16x16xf32>
    %753 = arith.addf %733, %752 : vector<16x16xf32>
    %c37_140 = arith.constant 37 : index
    %754 = memref.load %arg1[%c37_140] : memref<98xf32, #tpu.memory_space<smem>>
    %755 = vector.extract_strided_slice %560 {offsets = [5, 0], sizes = [16, 16], strides = [1, 1]} : vector<22x16xf32> to vector<16x16xf32>
    %756 = vector.broadcast %754 : f32 to vector<16x16xf32>
    %757 = arith.mulf %756, %755 : vector<16x16xf32>
    %758 = arith.addf %738, %757 : vector<16x16xf32>
    %c38_141 = arith.constant 38 : index
    %759 = memref.load %arg1[%c38_141] : memref<98xf32, #tpu.memory_space<smem>>
    %760 = vector.extract_strided_slice %561 {offsets = [5, 0], sizes = [16, 16], strides = [1, 1]} : vector<22x16xf32> to vector<16x16xf32>
    %761 = vector.broadcast %759 : f32 to vector<16x16xf32>
    %762 = arith.mulf %761, %760 : vector<16x16xf32>
    %763 = arith.addf %743, %762 : vector<16x16xf32>
    %c39_142 = arith.constant 39 : index
    %764 = memref.load %arg1[%c39_142] : memref<98xf32, #tpu.memory_space<smem>>
    %765 = vector.extract_strided_slice %562 {offsets = [5, 0], sizes = [16, 16], strides = [1, 1]} : vector<22x16xf32> to vector<16x16xf32>
    %766 = vector.broadcast %764 : f32 to vector<16x16xf32>
    %767 = arith.mulf %766, %765 : vector<16x16xf32>
    %768 = arith.addf %748, %767 : vector<16x16xf32>
    %c40_143 = arith.constant 40 : index
    %769 = memref.load %arg1[%c40_143] : memref<98xf32, #tpu.memory_space<smem>>
    %770 = vector.extract_strided_slice %563 {offsets = [5, 0], sizes = [16, 16], strides = [1, 1]} : vector<22x16xf32> to vector<16x16xf32>
    %771 = vector.broadcast %769 : f32 to vector<16x16xf32>
    %772 = arith.mulf %771, %770 : vector<16x16xf32>
    %773 = arith.addf %753, %772 : vector<16x16xf32>
    %c41_144 = arith.constant 41 : index
    %774 = memref.load %arg1[%c41_144] : memref<98xf32, #tpu.memory_space<smem>>
    %775 = vector.extract_strided_slice %564 {offsets = [5, 0], sizes = [16, 16], strides = [1, 1]} : vector<22x16xf32> to vector<16x16xf32>
    %776 = vector.broadcast %774 : f32 to vector<16x16xf32>
    %777 = arith.mulf %776, %775 : vector<16x16xf32>
    %778 = arith.addf %758, %777 : vector<16x16xf32>
    %c42_145 = arith.constant 42 : index
    %779 = memref.load %arg1[%c42_145] : memref<98xf32, #tpu.memory_space<smem>>
    %780 = vector.extract_strided_slice %558 {offsets = [6, 0], sizes = [16, 16], strides = [1, 1]} : vector<22x16xf32> to vector<16x16xf32>
    %781 = vector.broadcast %779 : f32 to vector<16x16xf32>
    %782 = arith.mulf %781, %780 : vector<16x16xf32>
    %783 = arith.addf %763, %782 : vector<16x16xf32>
    %c43_146 = arith.constant 43 : index
    %784 = memref.load %arg1[%c43_146] : memref<98xf32, #tpu.memory_space<smem>>
    %785 = vector.extract_strided_slice %559 {offsets = [6, 0], sizes = [16, 16], strides = [1, 1]} : vector<22x16xf32> to vector<16x16xf32>
    %786 = vector.broadcast %784 : f32 to vector<16x16xf32>
    %787 = arith.mulf %786, %785 : vector<16x16xf32>
    %788 = arith.addf %768, %787 : vector<16x16xf32>
    %c44_147 = arith.constant 44 : index
    %789 = memref.load %arg1[%c44_147] : memref<98xf32, #tpu.memory_space<smem>>
    %790 = vector.extract_strided_slice %560 {offsets = [6, 0], sizes = [16, 16], strides = [1, 1]} : vector<22x16xf32> to vector<16x16xf32>
    %791 = vector.broadcast %789 : f32 to vector<16x16xf32>
    %792 = arith.mulf %791, %790 : vector<16x16xf32>
    %793 = arith.addf %773, %792 : vector<16x16xf32>
    %c45_148 = arith.constant 45 : index
    %794 = memref.load %arg1[%c45_148] : memref<98xf32, #tpu.memory_space<smem>>
    %795 = vector.extract_strided_slice %561 {offsets = [6, 0], sizes = [16, 16], strides = [1, 1]} : vector<22x16xf32> to vector<16x16xf32>
    %796 = vector.broadcast %794 : f32 to vector<16x16xf32>
    %797 = arith.mulf %796, %795 : vector<16x16xf32>
    %798 = arith.addf %778, %797 : vector<16x16xf32>
    %c46_149 = arith.constant 46 : index
    %799 = memref.load %arg1[%c46_149] : memref<98xf32, #tpu.memory_space<smem>>
    %800 = vector.extract_strided_slice %562 {offsets = [6, 0], sizes = [16, 16], strides = [1, 1]} : vector<22x16xf32> to vector<16x16xf32>
    %801 = vector.broadcast %799 : f32 to vector<16x16xf32>
    %802 = arith.mulf %801, %800 : vector<16x16xf32>
    %803 = arith.addf %783, %802 : vector<16x16xf32>
    %c47_150 = arith.constant 47 : index
    %804 = memref.load %arg1[%c47_150] : memref<98xf32, #tpu.memory_space<smem>>
    %805 = vector.extract_strided_slice %563 {offsets = [6, 0], sizes = [16, 16], strides = [1, 1]} : vector<22x16xf32> to vector<16x16xf32>
    %806 = vector.broadcast %804 : f32 to vector<16x16xf32>
    %807 = arith.mulf %806, %805 : vector<16x16xf32>
    %808 = arith.addf %788, %807 : vector<16x16xf32>
    %c48_151 = arith.constant 48 : index
    %809 = memref.load %arg1[%c48_151] : memref<98xf32, #tpu.memory_space<smem>>
    %810 = vector.extract_strided_slice %564 {offsets = [6, 0], sizes = [16, 16], strides = [1, 1]} : vector<22x16xf32> to vector<16x16xf32>
    %811 = vector.broadcast %809 : f32 to vector<16x16xf32>
    %812 = arith.mulf %811, %810 : vector<16x16xf32>
    %813 = arith.addf %793, %812 : vector<16x16xf32>
    %814 = arith.addf %813, %798 : vector<16x16xf32>
    %815 = arith.addf %803, %808 : vector<16x16xf32>
    %816 = arith.addf %814, %815 : vector<16x16xf32>
    %c0_152 = arith.constant 0 : index
    %c0_153 = arith.constant 0 : index
    %817 = vector.load %arg5[%c0_152, %c0_153] : memref<22x22xf32, #tpu.memory_space<vmem>>, vector<22x16xf32>
    %c0_154 = arith.constant 0 : index
    %c1_155 = arith.constant 1 : index
    %818 = vector.load %arg5[%c0_154, %c1_155] : memref<22x22xf32, #tpu.memory_space<vmem>>, vector<22x16xf32>
    %c0_156 = arith.constant 0 : index
    %c2_157 = arith.constant 2 : index
    %819 = vector.load %arg5[%c0_156, %c2_157] : memref<22x22xf32, #tpu.memory_space<vmem>>, vector<22x16xf32>
    %c0_158 = arith.constant 0 : index
    %c3_159 = arith.constant 3 : index
    %820 = vector.load %arg5[%c0_158, %c3_159] : memref<22x22xf32, #tpu.memory_space<vmem>>, vector<22x16xf32>
    %c0_160 = arith.constant 0 : index
    %c4_161 = arith.constant 4 : index
    %821 = vector.load %arg5[%c0_160, %c4_161] : memref<22x22xf32, #tpu.memory_space<vmem>>, vector<22x16xf32>
    %c0_162 = arith.constant 0 : index
    %c5_163 = arith.constant 5 : index
    %822 = vector.load %arg5[%c0_162, %c5_163] : memref<22x22xf32, #tpu.memory_space<vmem>>, vector<22x16xf32>
    %c0_164 = arith.constant 0 : index
    %c6_165 = arith.constant 6 : index
    %823 = vector.load %arg5[%c0_164, %c6_165] : memref<22x22xf32, #tpu.memory_space<vmem>>, vector<22x16xf32>
    %cst_166 = arith.constant 0.000000e+00 : f32
    %824 = vector.broadcast %cst_166 : f32 to vector<16x16xf32>
    %cst_167 = arith.constant 0.000000e+00 : f32
    %825 = vector.broadcast %cst_167 : f32 to vector<16x16xf32>
    %cst_168 = arith.constant 0.000000e+00 : f32
    %826 = vector.broadcast %cst_168 : f32 to vector<16x16xf32>
    %cst_169 = arith.constant 0.000000e+00 : f32
    %827 = vector.broadcast %cst_169 : f32 to vector<16x16xf32>
    %c49_170 = arith.constant 49 : index
    %828 = memref.load %arg1[%c49_170] : memref<98xf32, #tpu.memory_space<smem>>
    %829 = vector.extract_strided_slice %817 {offsets = [0, 0], sizes = [16, 16], strides = [1, 1]} : vector<22x16xf32> to vector<16x16xf32>
    %830 = vector.broadcast %828 : f32 to vector<16x16xf32>
    %831 = arith.mulf %830, %829 : vector<16x16xf32>
    %832 = arith.addf %824, %831 : vector<16x16xf32>
    %c50_171 = arith.constant 50 : index
    %833 = memref.load %arg1[%c50_171] : memref<98xf32, #tpu.memory_space<smem>>
    %834 = vector.extract_strided_slice %818 {offsets = [0, 0], sizes = [16, 16], strides = [1, 1]} : vector<22x16xf32> to vector<16x16xf32>
    %835 = vector.broadcast %833 : f32 to vector<16x16xf32>
    %836 = arith.mulf %835, %834 : vector<16x16xf32>
    %837 = arith.addf %825, %836 : vector<16x16xf32>
    %c51_172 = arith.constant 51 : index
    %838 = memref.load %arg1[%c51_172] : memref<98xf32, #tpu.memory_space<smem>>
    %839 = vector.extract_strided_slice %819 {offsets = [0, 0], sizes = [16, 16], strides = [1, 1]} : vector<22x16xf32> to vector<16x16xf32>
    %840 = vector.broadcast %838 : f32 to vector<16x16xf32>
    %841 = arith.mulf %840, %839 : vector<16x16xf32>
    %842 = arith.addf %826, %841 : vector<16x16xf32>
    %c52_173 = arith.constant 52 : index
    %843 = memref.load %arg1[%c52_173] : memref<98xf32, #tpu.memory_space<smem>>
    %844 = vector.extract_strided_slice %820 {offsets = [0, 0], sizes = [16, 16], strides = [1, 1]} : vector<22x16xf32> to vector<16x16xf32>
    %845 = vector.broadcast %843 : f32 to vector<16x16xf32>
    %846 = arith.mulf %845, %844 : vector<16x16xf32>
    %847 = arith.addf %827, %846 : vector<16x16xf32>
    %c53_174 = arith.constant 53 : index
    %848 = memref.load %arg1[%c53_174] : memref<98xf32, #tpu.memory_space<smem>>
    %849 = vector.extract_strided_slice %821 {offsets = [0, 0], sizes = [16, 16], strides = [1, 1]} : vector<22x16xf32> to vector<16x16xf32>
    %850 = vector.broadcast %848 : f32 to vector<16x16xf32>
    %851 = arith.mulf %850, %849 : vector<16x16xf32>
    %852 = arith.addf %832, %851 : vector<16x16xf32>
    %c54_175 = arith.constant 54 : index
    %853 = memref.load %arg1[%c54_175] : memref<98xf32, #tpu.memory_space<smem>>
    %854 = vector.extract_strided_slice %822 {offsets = [0, 0], sizes = [16, 16], strides = [1, 1]} : vector<22x16xf32> to vector<16x16xf32>
    %855 = vector.broadcast %853 : f32 to vector<16x16xf32>
    %856 = arith.mulf %855, %854 : vector<16x16xf32>
    %857 = arith.addf %837, %856 : vector<16x16xf32>
    %c55_176 = arith.constant 55 : index
    %858 = memref.load %arg1[%c55_176] : memref<98xf32, #tpu.memory_space<smem>>
    %859 = vector.extract_strided_slice %823 {offsets = [0, 0], sizes = [16, 16], strides = [1, 1]} : vector<22x16xf32> to vector<16x16xf32>
    %860 = vector.broadcast %858 : f32 to vector<16x16xf32>
    %861 = arith.mulf %860, %859 : vector<16x16xf32>
    %862 = arith.addf %842, %861 : vector<16x16xf32>
    %c56_177 = arith.constant 56 : index
    %863 = memref.load %arg1[%c56_177] : memref<98xf32, #tpu.memory_space<smem>>
    %864 = vector.extract_strided_slice %817 {offsets = [1, 0], sizes = [16, 16], strides = [1, 1]} : vector<22x16xf32> to vector<16x16xf32>
    %865 = vector.broadcast %863 : f32 to vector<16x16xf32>
    %866 = arith.mulf %865, %864 : vector<16x16xf32>
    %867 = arith.addf %847, %866 : vector<16x16xf32>
    %c57_178 = arith.constant 57 : index
    %868 = memref.load %arg1[%c57_178] : memref<98xf32, #tpu.memory_space<smem>>
    %869 = vector.extract_strided_slice %818 {offsets = [1, 0], sizes = [16, 16], strides = [1, 1]} : vector<22x16xf32> to vector<16x16xf32>
    %870 = vector.broadcast %868 : f32 to vector<16x16xf32>
    %871 = arith.mulf %870, %869 : vector<16x16xf32>
    %872 = arith.addf %852, %871 : vector<16x16xf32>
    %c58_179 = arith.constant 58 : index
    %873 = memref.load %arg1[%c58_179] : memref<98xf32, #tpu.memory_space<smem>>
    %874 = vector.extract_strided_slice %819 {offsets = [1, 0], sizes = [16, 16], strides = [1, 1]} : vector<22x16xf32> to vector<16x16xf32>
    %875 = vector.broadcast %873 : f32 to vector<16x16xf32>
    %876 = arith.mulf %875, %874 : vector<16x16xf32>
    %877 = arith.addf %857, %876 : vector<16x16xf32>
    %c59_180 = arith.constant 59 : index
    %878 = memref.load %arg1[%c59_180] : memref<98xf32, #tpu.memory_space<smem>>
    %879 = vector.extract_strided_slice %820 {offsets = [1, 0], sizes = [16, 16], strides = [1, 1]} : vector<22x16xf32> to vector<16x16xf32>
    %880 = vector.broadcast %878 : f32 to vector<16x16xf32>
    %881 = arith.mulf %880, %879 : vector<16x16xf32>
    %882 = arith.addf %862, %881 : vector<16x16xf32>
    %c60_181 = arith.constant 60 : index
    %883 = memref.load %arg1[%c60_181] : memref<98xf32, #tpu.memory_space<smem>>
    %884 = vector.extract_strided_slice %821 {offsets = [1, 0], sizes = [16, 16], strides = [1, 1]} : vector<22x16xf32> to vector<16x16xf32>
    %885 = vector.broadcast %883 : f32 to vector<16x16xf32>
    %886 = arith.mulf %885, %884 : vector<16x16xf32>
    %887 = arith.addf %867, %886 : vector<16x16xf32>
    %c61_182 = arith.constant 61 : index
    %888 = memref.load %arg1[%c61_182] : memref<98xf32, #tpu.memory_space<smem>>
    %889 = vector.extract_strided_slice %822 {offsets = [1, 0], sizes = [16, 16], strides = [1, 1]} : vector<22x16xf32> to vector<16x16xf32>
    %890 = vector.broadcast %888 : f32 to vector<16x16xf32>
    %891 = arith.mulf %890, %889 : vector<16x16xf32>
    %892 = arith.addf %872, %891 : vector<16x16xf32>
    %c62_183 = arith.constant 62 : index
    %893 = memref.load %arg1[%c62_183] : memref<98xf32, #tpu.memory_space<smem>>
    %894 = vector.extract_strided_slice %823 {offsets = [1, 0], sizes = [16, 16], strides = [1, 1]} : vector<22x16xf32> to vector<16x16xf32>
    %895 = vector.broadcast %893 : f32 to vector<16x16xf32>
    %896 = arith.mulf %895, %894 : vector<16x16xf32>
    %897 = arith.addf %877, %896 : vector<16x16xf32>
    %c63_184 = arith.constant 63 : index
    %898 = memref.load %arg1[%c63_184] : memref<98xf32, #tpu.memory_space<smem>>
    %899 = vector.extract_strided_slice %817 {offsets = [2, 0], sizes = [16, 16], strides = [1, 1]} : vector<22x16xf32> to vector<16x16xf32>
    %900 = vector.broadcast %898 : f32 to vector<16x16xf32>
    %901 = arith.mulf %900, %899 : vector<16x16xf32>
    %902 = arith.addf %882, %901 : vector<16x16xf32>
    %c64_185 = arith.constant 64 : index
    %903 = memref.load %arg1[%c64_185] : memref<98xf32, #tpu.memory_space<smem>>
    %904 = vector.extract_strided_slice %818 {offsets = [2, 0], sizes = [16, 16], strides = [1, 1]} : vector<22x16xf32> to vector<16x16xf32>
    %905 = vector.broadcast %903 : f32 to vector<16x16xf32>
    %906 = arith.mulf %905, %904 : vector<16x16xf32>
    %907 = arith.addf %887, %906 : vector<16x16xf32>
    %c65_186 = arith.constant 65 : index
    %908 = memref.load %arg1[%c65_186] : memref<98xf32, #tpu.memory_space<smem>>
    %909 = vector.extract_strided_slice %819 {offsets = [2, 0], sizes = [16, 16], strides = [1, 1]} : vector<22x16xf32> to vector<16x16xf32>
    %910 = vector.broadcast %908 : f32 to vector<16x16xf32>
    %911 = arith.mulf %910, %909 : vector<16x16xf32>
    %912 = arith.addf %892, %911 : vector<16x16xf32>
    %c66_187 = arith.constant 66 : index
    %913 = memref.load %arg1[%c66_187] : memref<98xf32, #tpu.memory_space<smem>>
    %914 = vector.extract_strided_slice %820 {offsets = [2, 0], sizes = [16, 16], strides = [1, 1]} : vector<22x16xf32> to vector<16x16xf32>
    %915 = vector.broadcast %913 : f32 to vector<16x16xf32>
    %916 = arith.mulf %915, %914 : vector<16x16xf32>
    %917 = arith.addf %897, %916 : vector<16x16xf32>
    %c67_188 = arith.constant 67 : index
    %918 = memref.load %arg1[%c67_188] : memref<98xf32, #tpu.memory_space<smem>>
    %919 = vector.extract_strided_slice %821 {offsets = [2, 0], sizes = [16, 16], strides = [1, 1]} : vector<22x16xf32> to vector<16x16xf32>
    %920 = vector.broadcast %918 : f32 to vector<16x16xf32>
    %921 = arith.mulf %920, %919 : vector<16x16xf32>
    %922 = arith.addf %902, %921 : vector<16x16xf32>
    %c68_189 = arith.constant 68 : index
    %923 = memref.load %arg1[%c68_189] : memref<98xf32, #tpu.memory_space<smem>>
    %924 = vector.extract_strided_slice %822 {offsets = [2, 0], sizes = [16, 16], strides = [1, 1]} : vector<22x16xf32> to vector<16x16xf32>
    %925 = vector.broadcast %923 : f32 to vector<16x16xf32>
    %926 = arith.mulf %925, %924 : vector<16x16xf32>
    %927 = arith.addf %907, %926 : vector<16x16xf32>
    %c69_190 = arith.constant 69 : index
    %928 = memref.load %arg1[%c69_190] : memref<98xf32, #tpu.memory_space<smem>>
    %929 = vector.extract_strided_slice %823 {offsets = [2, 0], sizes = [16, 16], strides = [1, 1]} : vector<22x16xf32> to vector<16x16xf32>
    %930 = vector.broadcast %928 : f32 to vector<16x16xf32>
    %931 = arith.mulf %930, %929 : vector<16x16xf32>
    %932 = arith.addf %912, %931 : vector<16x16xf32>
    %c70_191 = arith.constant 70 : index
    %933 = memref.load %arg1[%c70_191] : memref<98xf32, #tpu.memory_space<smem>>
    %934 = vector.extract_strided_slice %817 {offsets = [3, 0], sizes = [16, 16], strides = [1, 1]} : vector<22x16xf32> to vector<16x16xf32>
    %935 = vector.broadcast %933 : f32 to vector<16x16xf32>
    %936 = arith.mulf %935, %934 : vector<16x16xf32>
    %937 = arith.addf %917, %936 : vector<16x16xf32>
    %c71_192 = arith.constant 71 : index
    %938 = memref.load %arg1[%c71_192] : memref<98xf32, #tpu.memory_space<smem>>
    %939 = vector.extract_strided_slice %818 {offsets = [3, 0], sizes = [16, 16], strides = [1, 1]} : vector<22x16xf32> to vector<16x16xf32>
    %940 = vector.broadcast %938 : f32 to vector<16x16xf32>
    %941 = arith.mulf %940, %939 : vector<16x16xf32>
    %942 = arith.addf %922, %941 : vector<16x16xf32>
    %c72_193 = arith.constant 72 : index
    %943 = memref.load %arg1[%c72_193] : memref<98xf32, #tpu.memory_space<smem>>
    %944 = vector.extract_strided_slice %819 {offsets = [3, 0], sizes = [16, 16], strides = [1, 1]} : vector<22x16xf32> to vector<16x16xf32>
    %945 = vector.broadcast %943 : f32 to vector<16x16xf32>
    %946 = arith.mulf %945, %944 : vector<16x16xf32>
    %947 = arith.addf %927, %946 : vector<16x16xf32>
    %c73_194 = arith.constant 73 : index
    %948 = memref.load %arg1[%c73_194] : memref<98xf32, #tpu.memory_space<smem>>
    %949 = vector.extract_strided_slice %820 {offsets = [3, 0], sizes = [16, 16], strides = [1, 1]} : vector<22x16xf32> to vector<16x16xf32>
    %950 = vector.broadcast %948 : f32 to vector<16x16xf32>
    %951 = arith.mulf %950, %949 : vector<16x16xf32>
    %952 = arith.addf %932, %951 : vector<16x16xf32>
    %c74_195 = arith.constant 74 : index
    %953 = memref.load %arg1[%c74_195] : memref<98xf32, #tpu.memory_space<smem>>
    %954 = vector.extract_strided_slice %821 {offsets = [3, 0], sizes = [16, 16], strides = [1, 1]} : vector<22x16xf32> to vector<16x16xf32>
    %955 = vector.broadcast %953 : f32 to vector<16x16xf32>
    %956 = arith.mulf %955, %954 : vector<16x16xf32>
    %957 = arith.addf %937, %956 : vector<16x16xf32>
    %c75_196 = arith.constant 75 : index
    %958 = memref.load %arg1[%c75_196] : memref<98xf32, #tpu.memory_space<smem>>
    %959 = vector.extract_strided_slice %822 {offsets = [3, 0], sizes = [16, 16], strides = [1, 1]} : vector<22x16xf32> to vector<16x16xf32>
    %960 = vector.broadcast %958 : f32 to vector<16x16xf32>
    %961 = arith.mulf %960, %959 : vector<16x16xf32>
    %962 = arith.addf %942, %961 : vector<16x16xf32>
    %c76_197 = arith.constant 76 : index
    %963 = memref.load %arg1[%c76_197] : memref<98xf32, #tpu.memory_space<smem>>
    %964 = vector.extract_strided_slice %823 {offsets = [3, 0], sizes = [16, 16], strides = [1, 1]} : vector<22x16xf32> to vector<16x16xf32>
    %965 = vector.broadcast %963 : f32 to vector<16x16xf32>
    %966 = arith.mulf %965, %964 : vector<16x16xf32>
    %967 = arith.addf %947, %966 : vector<16x16xf32>
    %c77_198 = arith.constant 77 : index
    %968 = memref.load %arg1[%c77_198] : memref<98xf32, #tpu.memory_space<smem>>
    %969 = vector.extract_strided_slice %817 {offsets = [4, 0], sizes = [16, 16], strides = [1, 1]} : vector<22x16xf32> to vector<16x16xf32>
    %970 = vector.broadcast %968 : f32 to vector<16x16xf32>
    %971 = arith.mulf %970, %969 : vector<16x16xf32>
    %972 = arith.addf %952, %971 : vector<16x16xf32>
    %c78_199 = arith.constant 78 : index
    %973 = memref.load %arg1[%c78_199] : memref<98xf32, #tpu.memory_space<smem>>
    %974 = vector.extract_strided_slice %818 {offsets = [4, 0], sizes = [16, 16], strides = [1, 1]} : vector<22x16xf32> to vector<16x16xf32>
    %975 = vector.broadcast %973 : f32 to vector<16x16xf32>
    %976 = arith.mulf %975, %974 : vector<16x16xf32>
    %977 = arith.addf %957, %976 : vector<16x16xf32>
    %c79_200 = arith.constant 79 : index
    %978 = memref.load %arg1[%c79_200] : memref<98xf32, #tpu.memory_space<smem>>
    %979 = vector.extract_strided_slice %819 {offsets = [4, 0], sizes = [16, 16], strides = [1, 1]} : vector<22x16xf32> to vector<16x16xf32>
    %980 = vector.broadcast %978 : f32 to vector<16x16xf32>
    %981 = arith.mulf %980, %979 : vector<16x16xf32>
    %982 = arith.addf %962, %981 : vector<16x16xf32>
    %c80_201 = arith.constant 80 : index
    %983 = memref.load %arg1[%c80_201] : memref<98xf32, #tpu.memory_space<smem>>
    %984 = vector.extract_strided_slice %820 {offsets = [4, 0], sizes = [16, 16], strides = [1, 1]} : vector<22x16xf32> to vector<16x16xf32>
    %985 = vector.broadcast %983 : f32 to vector<16x16xf32>
    %986 = arith.mulf %985, %984 : vector<16x16xf32>
    %987 = arith.addf %967, %986 : vector<16x16xf32>
    %c81_202 = arith.constant 81 : index
    %988 = memref.load %arg1[%c81_202] : memref<98xf32, #tpu.memory_space<smem>>
    %989 = vector.extract_strided_slice %821 {offsets = [4, 0], sizes = [16, 16], strides = [1, 1]} : vector<22x16xf32> to vector<16x16xf32>
    %990 = vector.broadcast %988 : f32 to vector<16x16xf32>
    %991 = arith.mulf %990, %989 : vector<16x16xf32>
    %992 = arith.addf %972, %991 : vector<16x16xf32>
    %c82_203 = arith.constant 82 : index
    %993 = memref.load %arg1[%c82_203] : memref<98xf32, #tpu.memory_space<smem>>
    %994 = vector.extract_strided_slice %822 {offsets = [4, 0], sizes = [16, 16], strides = [1, 1]} : vector<22x16xf32> to vector<16x16xf32>
    %995 = vector.broadcast %993 : f32 to vector<16x16xf32>
    %996 = arith.mulf %995, %994 : vector<16x16xf32>
    %997 = arith.addf %977, %996 : vector<16x16xf32>
    %c83_204 = arith.constant 83 : index
    %998 = memref.load %arg1[%c83_204] : memref<98xf32, #tpu.memory_space<smem>>
    %999 = vector.extract_strided_slice %823 {offsets = [4, 0], sizes = [16, 16], strides = [1, 1]} : vector<22x16xf32> to vector<16x16xf32>
    %1000 = vector.broadcast %998 : f32 to vector<16x16xf32>
    %1001 = arith.mulf %1000, %999 : vector<16x16xf32>
    %1002 = arith.addf %982, %1001 : vector<16x16xf32>
    %c84_205 = arith.constant 84 : index
    %1003 = memref.load %arg1[%c84_205] : memref<98xf32, #tpu.memory_space<smem>>
    %1004 = vector.extract_strided_slice %817 {offsets = [5, 0], sizes = [16, 16], strides = [1, 1]} : vector<22x16xf32> to vector<16x16xf32>
    %1005 = vector.broadcast %1003 : f32 to vector<16x16xf32>
    %1006 = arith.mulf %1005, %1004 : vector<16x16xf32>
    %1007 = arith.addf %987, %1006 : vector<16x16xf32>
    %c85_206 = arith.constant 85 : index
    %1008 = memref.load %arg1[%c85_206] : memref<98xf32, #tpu.memory_space<smem>>
    %1009 = vector.extract_strided_slice %818 {offsets = [5, 0], sizes = [16, 16], strides = [1, 1]} : vector<22x16xf32> to vector<16x16xf32>
    %1010 = vector.broadcast %1008 : f32 to vector<16x16xf32>
    %1011 = arith.mulf %1010, %1009 : vector<16x16xf32>
    %1012 = arith.addf %992, %1011 : vector<16x16xf32>
    %c86_207 = arith.constant 86 : index
    %1013 = memref.load %arg1[%c86_207] : memref<98xf32, #tpu.memory_space<smem>>
    %1014 = vector.extract_strided_slice %819 {offsets = [5, 0], sizes = [16, 16], strides = [1, 1]} : vector<22x16xf32> to vector<16x16xf32>
    %1015 = vector.broadcast %1013 : f32 to vector<16x16xf32>
    %1016 = arith.mulf %1015, %1014 : vector<16x16xf32>
    %1017 = arith.addf %997, %1016 : vector<16x16xf32>
    %c87_208 = arith.constant 87 : index
    %1018 = memref.load %arg1[%c87_208] : memref<98xf32, #tpu.memory_space<smem>>
    %1019 = vector.extract_strided_slice %820 {offsets = [5, 0], sizes = [16, 16], strides = [1, 1]} : vector<22x16xf32> to vector<16x16xf32>
    %1020 = vector.broadcast %1018 : f32 to vector<16x16xf32>
    %1021 = arith.mulf %1020, %1019 : vector<16x16xf32>
    %1022 = arith.addf %1002, %1021 : vector<16x16xf32>
    %c88_209 = arith.constant 88 : index
    %1023 = memref.load %arg1[%c88_209] : memref<98xf32, #tpu.memory_space<smem>>
    %1024 = vector.extract_strided_slice %821 {offsets = [5, 0], sizes = [16, 16], strides = [1, 1]} : vector<22x16xf32> to vector<16x16xf32>
    %1025 = vector.broadcast %1023 : f32 to vector<16x16xf32>
    %1026 = arith.mulf %1025, %1024 : vector<16x16xf32>
    %1027 = arith.addf %1007, %1026 : vector<16x16xf32>
    %c89_210 = arith.constant 89 : index
    %1028 = memref.load %arg1[%c89_210] : memref<98xf32, #tpu.memory_space<smem>>
    %1029 = vector.extract_strided_slice %822 {offsets = [5, 0], sizes = [16, 16], strides = [1, 1]} : vector<22x16xf32> to vector<16x16xf32>
    %1030 = vector.broadcast %1028 : f32 to vector<16x16xf32>
    %1031 = arith.mulf %1030, %1029 : vector<16x16xf32>
    %1032 = arith.addf %1012, %1031 : vector<16x16xf32>
    %c90_211 = arith.constant 90 : index
    %1033 = memref.load %arg1[%c90_211] : memref<98xf32, #tpu.memory_space<smem>>
    %1034 = vector.extract_strided_slice %823 {offsets = [5, 0], sizes = [16, 16], strides = [1, 1]} : vector<22x16xf32> to vector<16x16xf32>
    %1035 = vector.broadcast %1033 : f32 to vector<16x16xf32>
    %1036 = arith.mulf %1035, %1034 : vector<16x16xf32>
    %1037 = arith.addf %1017, %1036 : vector<16x16xf32>
    %c91_212 = arith.constant 91 : index
    %1038 = memref.load %arg1[%c91_212] : memref<98xf32, #tpu.memory_space<smem>>
    %1039 = vector.extract_strided_slice %817 {offsets = [6, 0], sizes = [16, 16], strides = [1, 1]} : vector<22x16xf32> to vector<16x16xf32>
    %1040 = vector.broadcast %1038 : f32 to vector<16x16xf32>
    %1041 = arith.mulf %1040, %1039 : vector<16x16xf32>
    %1042 = arith.addf %1022, %1041 : vector<16x16xf32>
    %c92_213 = arith.constant 92 : index
    %1043 = memref.load %arg1[%c92_213] : memref<98xf32, #tpu.memory_space<smem>>
    %1044 = vector.extract_strided_slice %818 {offsets = [6, 0], sizes = [16, 16], strides = [1, 1]} : vector<22x16xf32> to vector<16x16xf32>
    %1045 = vector.broadcast %1043 : f32 to vector<16x16xf32>
    %1046 = arith.mulf %1045, %1044 : vector<16x16xf32>
    %1047 = arith.addf %1027, %1046 : vector<16x16xf32>
    %c93_214 = arith.constant 93 : index
    %1048 = memref.load %arg1[%c93_214] : memref<98xf32, #tpu.memory_space<smem>>
    %1049 = vector.extract_strided_slice %819 {offsets = [6, 0], sizes = [16, 16], strides = [1, 1]} : vector<22x16xf32> to vector<16x16xf32>
    %1050 = vector.broadcast %1048 : f32 to vector<16x16xf32>
    %1051 = arith.mulf %1050, %1049 : vector<16x16xf32>
    %1052 = arith.addf %1032, %1051 : vector<16x16xf32>
    %c94_215 = arith.constant 94 : index
    %1053 = memref.load %arg1[%c94_215] : memref<98xf32, #tpu.memory_space<smem>>
    %1054 = vector.extract_strided_slice %820 {offsets = [6, 0], sizes = [16, 16], strides = [1, 1]} : vector<22x16xf32> to vector<16x16xf32>
    %1055 = vector.broadcast %1053 : f32 to vector<16x16xf32>
    %1056 = arith.mulf %1055, %1054 : vector<16x16xf32>
    %1057 = arith.addf %1037, %1056 : vector<16x16xf32>
    %c95_216 = arith.constant 95 : index
    %1058 = memref.load %arg1[%c95_216] : memref<98xf32, #tpu.memory_space<smem>>
    %1059 = vector.extract_strided_slice %821 {offsets = [6, 0], sizes = [16, 16], strides = [1, 1]} : vector<22x16xf32> to vector<16x16xf32>
    %1060 = vector.broadcast %1058 : f32 to vector<16x16xf32>
    %1061 = arith.mulf %1060, %1059 : vector<16x16xf32>
    %1062 = arith.addf %1042, %1061 : vector<16x16xf32>
    %c96_217 = arith.constant 96 : index
    %1063 = memref.load %arg1[%c96_217] : memref<98xf32, #tpu.memory_space<smem>>
    %1064 = vector.extract_strided_slice %822 {offsets = [6, 0], sizes = [16, 16], strides = [1, 1]} : vector<22x16xf32> to vector<16x16xf32>
    %1065 = vector.broadcast %1063 : f32 to vector<16x16xf32>
    %1066 = arith.mulf %1065, %1064 : vector<16x16xf32>
    %1067 = arith.addf %1047, %1066 : vector<16x16xf32>
    %c97_218 = arith.constant 97 : index
    %1068 = memref.load %arg1[%c97_218] : memref<98xf32, #tpu.memory_space<smem>>
    %1069 = vector.extract_strided_slice %823 {offsets = [6, 0], sizes = [16, 16], strides = [1, 1]} : vector<22x16xf32> to vector<16x16xf32>
    %1070 = vector.broadcast %1068 : f32 to vector<16x16xf32>
    %1071 = arith.mulf %1070, %1069 : vector<16x16xf32>
    %1072 = arith.addf %1052, %1071 : vector<16x16xf32>
    %1073 = arith.addf %1072, %1057 : vector<16x16xf32>
    %1074 = arith.addf %1062, %1067 : vector<16x16xf32>
    %1075 = arith.addf %1073, %1074 : vector<16x16xf32>
    %1076 = arith.addf %816, %1075 : vector<16x16xf32>
    %c1_219 = arith.constant 1 : index
    %c0_220 = arith.constant 0 : index
    %c0_221 = arith.constant 0 : index
    %c0_222 = arith.constant 0 : index
    %1077 = vector.load %arg3[%c1_219, %c0_220, %c0_221, %c0_222] : memref<2x1x16x16xf32, #tpu.memory_space<vmem>>, vector<1x1x16x16xf32>
    %1078 = vector.shape_cast %1077 : vector<1x1x16x16xf32> to vector<16x16xf32>
    %1079 = vector.shape_cast %1076 : vector<16x16xf32> to vector<1x1x16x16xf32>
    tpu.vector_store %arg3[%c1_219, %c0_220, %c0_221, %c0_222], %1079 {strides = array<i32>} : memref<2x1x16x16xf32, #tpu.memory_space<vmem>>, vector<1x1x16x16xf32>,
    return
  }
  func.func @transform_0(%arg0: i32) -> i32 {
    %c0_i32 = arith.constant 0 : i32
    %c0_i32_0 = arith.constant 0 : i32
    return %c0_i32 : i32
  }
  func.func @transform_1(%arg0: i32) -> (i32, i32, i32, i32) {
    %c0_i32 = arith.constant 0 : i32
    %c0_i32_0 = arith.constant 0 : i32
    %c0_i32_1 = arith.constant 0 : i32
    %c0_i32_2 = arith.constant 0 : i32
    return %arg0, %c0_i32, %c0_i32_0, %c0_i32_1 : i32, i32, i32, i32
  }
  func.func @transform_2(%arg0: i32) -> (i32, i32, i32, i32) {
    %c0_i32 = arith.constant 0 : i32
    %c0_i32_0 = arith.constant 0 : i32
    %c0_i32_1 = arith.constant 0 : i32
    %c0_i32_2 = arith.constant 0 : i32
    return %arg0, %c0_i32, %c0_i32_0, %c0_i32_1 : i32, i32, i32, i32
  }
}

</mosaic_0001>

<llo_original>
// kernel: tpu_custom_call.1
$region0: #{tpu_custom_call.1}
  #allocation0 [shape = 'u32[]', space=smem, size = 0x4, offset = 0x4, fixed_abs, tag = 'smem constant byte address 0x4 - core index']
  #allocation1 [shape = 'u32[72,128]{1,0:T(1,128)}', space=vmem, size = 0x9000, scoped, tag = 'internal scratch']
  #allocation2 [shape = 'f32[22,22]{1,0:T(8,128)}', space=vmem, size = 0x3000, scoped, tag = 'scratch operand']
  #allocation3 [shape = 'f32[22,22]{1,0:T(8,128)}', space=vmem, size = 0x3000, scoped, tag = 'scratch operand']
  %s0 = inlined_call_operand.hbm [shape: f32[98], index: 0, kind: input, shape index: {}]
  %s1 = inlined_call_operand.hbm [shape: f32[2,4,16,16], index: 1, kind: input, shape index: {}]
  %s2 = inlined_call_operand.hbm [shape: f32[2,1,16,16], index: 2, kind: output, shape index: {}]
  %s3 = sld [smem:[#allocation0]]
  $region26: #{tpu_custom_call.1} parent=0
    _
  %s5 = ssub.s32 1, %s3
  %s6 = scalar_select 0, %s5, %s3
  $region1: #{tpu_custom_call.1} parent=0
    #allocation4 [shape = 'u8[512]{0}', space=smem, size = 0x200, scoped, tag = 'input window, operand 0, single buffered']
    #allocation5 [shape = 's32[1]{0}', space=sflag, size = 0x4, scoped, tag = 'scoped memory for tpu_custom_call.1']
    #allocation6 [shape = 's32[1]{0}', space=sflag, size = 0x4, scoped, tag = 'scoped memory for tpu_custom_call.1']
    #allocation7 [shape = 's32[1]{0}', space=sflag, size = 0x4, scoped, tag = 'scoped memory for tpu_custom_call.1']
    #allocation8 [shape = 'u8[65536]{0}', space=vmem, size = 0x10000, scoped, tag = 'input window, operand 1, single buffered']
    #allocation9 [shape = 'u8[16384]{0}', space=vmem, size = 0x4000, scoped, tag = 'output window, operand 0, single buffered']
    %7 = vsyncpa [#allocation7], 0
    %8 = vsyncpa [#allocation5], 0
    %9 = vsyncpa [#allocation6], 0
    // Predicated region
    $region2: #{tpu_custom_call.1} parent=1 // pred_check
      _
    $region3: #{tpu_custom_call.1} parent=1 // pred_check_branch
      %11 = sbr.rel (0) target = $region5
    $region4: #{tpu_custom_call.1} parent=1 // pred_region
      %13 = vsyncadd [#allocation7], 0
      %s15 = sshll.u32 %s0, 4
      %s16 = int_to_ptr.hbm [resolvable:$true] %s15
      %18 = dma.hbm_to_smem %s16, 16, [#allocation4], [#allocation7]
    $region5: #{tpu_custom_call.1} parent=1 // pred_fallthru
      _
    // Predicated region
    $region6: #{tpu_custom_call.1} parent=1 // pred_check
      _
    $region7: #{tpu_custom_call.1} parent=1 // pred_check_branch
      %20 = sbr.rel (0) target = $region9
    $region8: #{tpu_custom_call.1} parent=1 // pred_region
      %22 = vsyncadd [#allocation5], 0
      %s23 = sshll.u32 %s1, 4
      %s24 = int_to_ptr.hbm [resolvable:$true] %s23
      %s25 = sshll.u32 [#allocation8], 4
      %s26 = int_to_ptr.vmem [resolvable:$true] %s25
      %31 = dma.hbm_to_vmem [thread:$0]  %s24, 2048, %s26, [#allocation5], 128, 128, 8
    $region9: #{tpu_custom_call.1} parent=1 // pred_fallthru
      _
    // Predicated region
    $region10: #{tpu_custom_call.1} parent=1 // pred_check
      _
    $region11: #{tpu_custom_call.1} parent=1 // pred_check_branch
      %33 = sbr.rel (0) target = $region13
    $region12: #{tpu_custom_call.1} parent=1 // pred_region
      %35 = dma.done [#allocation7], 16
    $region13: #{tpu_custom_call.1} parent=1 // pred_fallthru
      _
    // Predicated region
    $region14: #{tpu_custom_call.1} parent=1 // pred_check
      _
    $region15: #{tpu_custom_call.1} parent=1 // pred_check_branch
      %37 = sbr.rel (0) target = $region17
    $region16: #{tpu_custom_call.1} parent=1 // pred_region
      %39 = dma.done [#allocation5], 2048
    $region17: #{tpu_custom_call.1} parent=1 // pred_fallthru
      _
    %40 = sfence
    %vm41 = vcmask 179200
    %42 = vst.msk [vmem:[#allocation2] sm:$0xff] %vm41, 0.0
    %43 = vst.msk [vmem:[#allocation2 + $0x8] sm:$0xff] %vm41, 0.0
    %vm44 = vcmask 177152
    %45 = vst.msk [vmem:[#allocation2 + $0x10] sm:$0x3f] %vm44, 0.0
    %46 = vst.msk [vmem:[#allocation3] sm:$0xff] %vm41, 0.0
    %47 = vst.msk [vmem:[#allocation3 + $0x8] sm:$0xff] %vm41, 0.0
    %48 = vst.msk [vmem:[#allocation3 + $0x10] sm:$0x3f] %vm44, 0.0
    %v49 = vld [vmem:[#allocation8] sm:$0xff]
    %v50 = vld [vmem:[#allocation8 + $0x8] sm:$0xff]
    %s51 = scalar_lea.vmem [#allocation8], 16
    %v52 = vld [vmem:[%s51] sm:$0xff]
    %v53 = vld [vmem:[%s51 + $0x8] sm:$0xff]
    %s54 = scalar_lea.vmem [#allocation8], 32
    %v55 = vld [vmem:[%s54] sm:$0xff]
    %v56 = vld [vmem:[%s54 + $0x8] sm:$0xff]
    %s57 = scalar_lea.vmem [#allocation8], 48
    %v58 = vld [vmem:[%s57] sm:$0xff]
    %v59 = vld [vmem:[%s57 + $0x8] sm:$0xff]
    %v60 = vadd.f32 %v49, %v52
    %v61 = vadd.f32 %v50, %v53
    %v62 = vadd.f32 %v55, %v58
    %v63 = vadd.f32 %v56, %v59
    %v64 = vadd.f32 %v60, %v62
    %v65 = vadd.f32 %v61, %v63
    %v66 = vmax.f32 %v49, %v52
    %v67 = vmax.f32 %v50, %v53
    %v68 = vmax.f32 %v55, %v58
    %v69 = vmax.f32 %v56, %v59
    %v70 = vmax.f32 %v66, %v68
    %v71 = vmax.f32 %v67, %v69
    %74 = vrot.lane.b32.xlu0 %v64, 3
    %v75 = vpop.permute.xlu0 %74
    %76 = vrot.lane.b32.xlu0 %v65, 3
    %v77 = vpop.permute.xlu0 %76
    %vm80 = vcmask 154648
    %81 = vst.msk [vmem:[#allocation2 + $0x3] sm:$0xff] %vm80, %v75
    %82 = vst.msk [vmem:[#allocation2 + $0xb] sm:$0xff] %vm80, %v77
    %85 = vrot.lane.b32.xlu0 %v70, 3
    %v86 = vpop.permute.xlu0 %85
    %87 = vrot.lane.b32.xlu0 %v71, 3
    %v88 = vpop.permute.xlu0 %87
    %91 = vst.msk [vmem:[#allocation3 + $0x3] sm:$0xff] %vm80, %v86
    %92 = vst.msk [vmem:[#allocation3 + $0xb] sm:$0xff] %vm80, %v88
    %v93 = vld [vmem:[#allocation2] sm:$0xff]
    %v94 = vld [vmem:[#allocation2 + $0x8] sm:$0xff]
    %v95 = vld [vmem:[#allocation2 + $0x10] sm:$0x3f]
    %s96 = sld [smem:[#allocation4]]
    %v97 = vstv %s96
    %v98 = vmul.f32 %v97, %v93
    %v99 = vmul.f32 %v97, %v94
    %v100 = vadd.f32 %v98, 0.0
    %v101 = vadd.f32 %v99, 0.0
    %s102 = sld [smem:[#allocation4 + $0x1]]
    %v103 = vstv %s102
    %v104 = vmul.f32 %v103, %v93
    %v105 = vmul.f32 %v103, %v94
    %v106 = vadd.f32 %v104, 0.0
    %v107 = vadd.f32 %v105, 0.0
    %s108 = sld [smem:[#allocation4 + $0x2]]
    %v109 = vstv %s108
    %v110 = vmul.f32 %v109, %v93
    %v111 = vmul.f32 %v109, %v94
    %v112 = vadd.f32 %v110, 0.0
    %v113 = vadd.f32 %v111, 0.0
    %s114 = sld [smem:[#allocation4 + $0x3]]
    %v115 = vstv %s114
    %v116 = vmul.f32 %v115, %v93
    %v117 = vmul.f32 %v115, %v94
    %v118 = vadd.f32 %v116, 0.0
    %v119 = vadd.f32 %v117, 0.0
    %s120 = sld [smem:[#allocation4 + $0x4]]
    %v121 = vstv %s120
    %v122 = vmul.f32 %v121, %v93
    %v123 = vmul.f32 %v121, %v94
    %126 = vrot.lane.b32.xlu0 %v122, 124
    %v127 = vpop.permute.xlu0 %126
    %128 = vrot.lane.b32.xlu0 %v123, 124
    %v129 = vpop.permute.xlu0 %128
    %v132 = vadd.f32 %v100, %v127
    %v133 = vadd.f32 %v101, %v129
    %s134 = sld [smem:[#allocation4 + $0x5]]
    %v135 = vstv %s134
    %v136 = vmul.f32 %v135, %v93
    %v137 = vmul.f32 %v135, %v94
    %140 = vrot.lane.b32.xlu0 %v136, 124
    %v141 = vpop.permute.xlu0 %140
    %142 = vrot.lane.b32.xlu0 %v137, 124
    %v143 = vpop.permute.xlu0 %142
    %v146 = vadd.f32 %v106, %v141
    %v147 = vadd.f32 %v107, %v143
    %s148 = sld [smem:[#allocation4 + $0x6]]
    %v149 = vstv %s148
    %v150 = vmul.f32 %v149, %v93
    %v151 = vmul.f32 %v149, %v94
    %154 = vrot.lane.b32.xlu0 %v150, 124
    %v155 = vpop.permute.xlu0 %154
    %156 = vrot.lane.b32.xlu0 %v151, 124
    %v157 = vpop.permute.xlu0 %156
    %v160 = vadd.f32 %v112, %v155
    %v161 = vadd.f32 %v113, %v157
    %s162 = sld [smem:[#allocation4 + $0x7]]
    %v163 = vstv %s162
    %v164 = vmul.f32 %v163, %v93
    %v165 = vmul.f32 %v163, %v94
    %v166 = vmul.f32 %v163, %v95
    %vm170 = vcmask 1046528
    %v171 = vrot.slane %v164, 1
    %v172 = vrot.slane %v165, 1
    %v173 = vsel %vm170, %v171, %v172
    %v174 = vrot.slane %v166, 1
    %v175 = vsel %vm170, %v172, %v174
    %176 = vrot.lane.b32.xlu0 %v173, 3
    %v177 = vpop.permute.xlu0 %176
    %178 = vrot.lane.b32.xlu0 %v175, 3
    %v179 = vpop.permute.xlu0 %178
    %v182 = vadd.f32 %v118, %v177
    %v183 = vadd.f32 %v119, %v179
    %s184 = sld [smem:[#allocation4 + $0x8]]
    %v185 = vstv %s184
    %v186 = vmul.f32 %v185, %v93
    %v187 = vmul.f32 %v185, %v94
    %v188 = vmul.f32 %v185, %v95
    %v192 = vrot.slane %v186, 1
    %v193 = vrot.slane %v187, 1
    %v194 = vsel %vm170, %v192, %v193
    %v195 = vrot.slane %v188, 1
    %v196 = vsel %vm170, %v193, %v195
    %197 = vrot.lane.b32.xlu0 %v194, 127
    %v198 = vpop.permute.xlu0 %197
    %199 = vrot.lane.b32.xlu0 %v196, 127
    %v200 = vpop.permute.xlu0 %199
    %v203 = vadd.f32 %v132, %v198
    %v204 = vadd.f32 %v133, %v200
    %s205 = sld [smem:[#allocation4 + $0x9]]
    %v206 = vstv %s205
    %v207 = vmul.f32 %v206, %v93
    %v208 = vmul.f32 %v206, %v94
    %v209 = vmul.f32 %v206, %v95
    %v213 = vrot.slane %v207, 1
    %v214 = vrot.slane %v208, 1
    %v215 = vsel %vm170, %v213, %v214
    %v216 = vrot.slane %v209, 1
    %v217 = vsel %vm170, %v214, %v216
    %218 = vrot.lane.b32.xlu0 %v215, 127
    %v219 = vpop.permute.xlu0 %218
    %220 = vrot.lane.b32.xlu0 %v217, 127
    %v221 = vpop.permute.xlu0 %220
    %v224 = vadd.f32 %v146, %v219
    %v225 = vadd.f32 %v147, %v221
    %s226 = sld [smem:[#allocation4 + $0xa]]
    %v227 = vstv %s226
    %v228 = vmul.f32 %v227, %v93
    %v229 = vmul.f32 %v227, %v94
    %v230 = vmul.f32 %v227, %v95
    %v234 = vrot.slane %v228, 1
    %v235 = vrot.slane %v229, 1
    %v236 = vsel %vm170, %v234, %v235
    %v237 = vrot.slane %v230, 1
    %v238 = vsel %vm170, %v235, %v237
    %239 = vrot.lane.b32.xlu0 %v236, 127
    %v240 = vpop.permute.xlu0 %239
    %241 = vrot.lane.b32.xlu0 %v238, 127
    %v242 = vpop.permute.xlu0 %241
    %v245 = vadd.f32 %v160, %v240
    %v246 = vadd.f32 %v161, %v242
    %s247 = sld [smem:[#allocation4 + $0xb]]
    %v248 = vstv %s247
    %v249 = vmul.f32 %v248, %v93
    %v250 = vmul.f32 %v248, %v94
    %v251 = vmul.f32 %v248, %v95
    %v255 = vrot.slane %v249, 1
    %v256 = vrot.slane %v250, 1
    %v257 = vsel %vm170, %v255, %v256
    %v258 = vrot.slane %v251, 1
    %v259 = vsel %vm170, %v256, %v258
    %260 = vrot.lane.b32.xlu0 %v257, 127
    %v261 = vpop.permute.xlu0 %260
    %262 = vrot.lane.b32.xlu0 %v259, 127
    %v263 = vpop.permute.xlu0 %262
    %v266 = vadd.f32 %v182, %v261
    %v267 = vadd.f32 %v183, %v263
    %s268 = sld [smem:[#allocation4 + $0xc]]
    %v269 = vstv %s268
    %v270 = vmul.f32 %v269, %v93
    %v271 = vmul.f32 %v269, %v94
    %v272 = vmul.f32 %v269, %v95
    %v276 = vrot.slane %v270, 1
    %v277 = vrot.slane %v271, 1
    %v278 = vsel %vm170, %v276, %v277
    %v279 = vrot.slane %v272, 1
    %v280 = vsel %vm170, %v277, %v279
    %281 = vrot.lane.b32.xlu0 %v278, 123
    %v282 = vpop.permute.xlu0 %281
    %283 = vrot.lane.b32.xlu0 %v280, 123
    %v284 = vpop.permute.xlu0 %283
    %v287 = vadd.f32 %v203, %v282
    %v288 = vadd.f32 %v204, %v284
    %s289 = sld [smem:[#allocation4 + $0xd]]
    %v290 = vstv %s289
    %v291 = vmul.f32 %v290, %v93
    %v292 = vmul.f32 %v290, %v94
    %v293 = vmul.f32 %v290, %v95
    %v297 = vrot.slane %v291, 1
    %v298 = vrot.slane %v292, 1
    %v299 = vsel %vm170, %v297, %v298
    %v300 = vrot.slane %v293, 1
    %v301 = vsel %vm170, %v298, %v300
    %302 = vrot.lane.b32.xlu0 %v299, 123
    %v303 = vpop.permute.xlu0 %302
    %304 = vrot.lane.b32.xlu0 %v301, 123
    %v305 = vpop.permute.xlu0 %304
    %v308 = vadd.f32 %v224, %v303
    %v309 = vadd.f32 %v225, %v305
    %s310 = sld [smem:[#allocation4 + $0xe]]
    %v311 = vstv %s310
    %v312 = vmul.f32 %v311, %v93
    %v313 = vmul.f32 %v311, %v94
    %v314 = vmul.f32 %v311, %v95
    %vm318 = vcmask 1045504
    %v319 = vrot.slane %v312, 2
    %v320 = vrot.slane %v313, 2
    %v321 = vsel %vm318, %v319, %v320
    %v322 = vrot.slane %v314, 2
    %v323 = vsel %vm318, %v320, %v322
    %324 = vrot.lane.b32.xlu0 %v321, 2
    %v325 = vpop.permute.xlu0 %324
    %326 = vrot.lane.b32.xlu0 %v323, 2
    %v327 = vpop.permute.xlu0 %326
    %v330 = vadd.f32 %v245, %v325
    %v331 = vadd.f32 %v246, %v327
    %s332 = sld [smem:[#allocation4 + $0xf]]
    %v333 = vstv %s332
    %v334 = vmul.f32 %v333, %v93
    %v335 = vmul.f32 %v333, %v94
    %v336 = vmul.f32 %v333, %v95
    %v340 = vrot.slane %v334, 2
    %v341 = vrot.slane %v335, 2
    %v342 = vsel %vm318, %v340, %v341
    %v343 = vrot.slane %v336, 2
    %v344 = vsel %vm318, %v341, %v343
    %345 = vrot.lane.b32.xlu0 %v342, 2
    %v346 = vpop.permute.xlu0 %345
    %347 = vrot.lane.b32.xlu0 %v344, 2
    %v348 = vpop.permute.xlu0 %347
    %v351 = vadd.f32 %v266, %v346
    %v352 = vadd.f32 %v267, %v348
    %s353 = sld [smem:[#allocation4 + $0x10]]
    %v354 = vstv %s353
    %v355 = vmul.f32 %v354, %v93
    %v356 = vmul.f32 %v354, %v94
    %v357 = vmul.f32 %v354, %v95
    %v361 = vrot.slane %v355, 2
    %v362 = vrot.slane %v356, 2
    %v363 = vsel %vm318, %v361, %v362
    %v364 = vrot.slane %v357, 2
    %v365 = vsel %vm318, %v362, %v364
    %366 = vrot.lane.b32.xlu0 %v363, 126
    %v367 = vpop.permute.xlu0 %366
    %368 = vrot.lane.b32.xlu0 %v365, 126
    %v369 = vpop.permute.xlu0 %368
    %v372 = vadd.f32 %v287, %v367
    %v373 = vadd.f32 %v288, %v369
    %s374 = sld [smem:[#allocation4 + $0x11]]
    %v375 = vstv %s374
    %v376 = vmul.f32 %v375, %v93
    %v377 = vmul.f32 %v375, %v94
    %v378 = vmul.f32 %v375, %v95
    %v382 = vrot.slane %v376, 2
    %v383 = vrot.slane %v377, 2
    %v384 = vsel %vm318, %v382, %v383
    %v385 = vrot.slane %v378, 2
    %v386 = vsel %vm318, %v383, %v385
    %387 = vrot.lane.b32.xlu0 %v384, 126
    %v388 = vpop.permute.xlu0 %387
    %389 = vrot.lane.b32.xlu0 %v386, 126
    %v390 = vpop.permute.xlu0 %389
    %v393 = vadd.f32 %v308, %v388
    %v394 = vadd.f32 %v309, %v390
    %s395 = sld [smem:[#allocation4 + $0x12]]
    %v396 = vstv %s395
    %v397 = vmul.f32 %v396, %v93
    %v398 = vmul.f32 %v396, %v94
    %v399 = vmul.f32 %v396, %v95
    %v403 = vrot.slane %v397, 2
    %v404 = vrot.slane %v398, 2
    %v405 = vsel %vm318, %v403, %v404
    %v406 = vrot.slane %v399, 2
    %v407 = vsel %vm318, %v404, %v406
    %408 = vrot.lane.b32.xlu0 %v405, 126
    %v409 = vpop.permute.xlu0 %408
    %410 = vrot.lane.b32.xlu0 %v407, 126
    %v411 = vpop.permute.xlu0 %410
    %v414 = vadd.f32 %v330, %v409
    %v415 = vadd.f32 %v331, %v411
    %s416 = sld [smem:[#allocation4 + $0x13]]
    %v417 = vstv %s416
    %v418 = vmul.f32 %v417, %v93
    %v419 = vmul.f32 %v417, %v94
    %v420 = vmul.f32 %v417, %v95
    %v424 = vrot.slane %v418, 2
    %v425 = vrot.slane %v419, 2
    %v426 = vsel %vm318, %v424, %v425
    %v427 = vrot.slane %v420, 2
    %v428 = vsel %vm318, %v425, %v427
    %429 = vrot.lane.b32.xlu0 %v426, 126
    %v430 = vpop.permute.xlu0 %429
    %431 = vrot.lane.b32.xlu0 %v428, 126
    %v432 = vpop.permute.xlu0 %431
    %v435 = vadd.f32 %v351, %v430
    %v436 = vadd.f32 %v352, %v432
    %s437 = sld [smem:[#allocation4 + $0x14]]
    %v438 = vstv %s437
    %v439 = vmul.f32 %v438, %v93
    %v440 = vmul.f32 %v438, %v94
    %v441 = vmul.f32 %v438, %v95
    %v445 = vrot.slane %v439, 2
    %v446 = vrot.slane %v440, 2
    %v447 = vsel %vm318, %v445, %v446
    %v448 = vrot.slane %v441, 2
    %v449 = vsel %vm318, %v446, %v448
    %450 = vrot.lane.b32.xlu0 %v447, 122
    %v451 = vpop.permute.xlu0 %450
    %452 = vrot.lane.b32.xlu0 %v449, 122
    %v453 = vpop.permute.xlu0 %452
    %v456 = vadd.f32 %v372, %v451
    %v457 = vadd.f32 %v373, %v453
    %s458 = sld [smem:[#allocation4 + $0x15]]
    %v459 = vstv %s458
    %v460 = vmul.f32 %v459, %v93
    %v461 = vmul.f32 %v459, %v94
    %v462 = vmul.f32 %v459, %v95
    %vm466 = vcmask 1044480
    %v467 = vrot.slane %v460, 3
    %v468 = vrot.slane %v461, 3
    %v469 = vsel %vm466, %v467, %v468
    %v470 = vrot.slane %v462, 3
    %v471 = vsel %vm466, %v468, %v470
    %472 = vrot.lane.b32.xlu0 %v469, 1
    %v473 = vpop.permute.xlu0 %472
    %474 = vrot.lane.b32.xlu0 %v471, 1
    %v475 = vpop.permute.xlu0 %474
    %v478 = vadd.f32 %v393, %v473
    %v479 = vadd.f32 %v394, %v475
    %s480 = sld [smem:[#allocation4 + $0x16]]
    %v481 = vstv %s480
    %v482 = vmul.f32 %v481, %v93
    %v483 = vmul.f32 %v481, %v94
    %v484 = vmul.f32 %v481, %v95
    %v488 = vrot.slane %v482, 3
    %v489 = vrot.slane %v483, 3
    %v490 = vsel %vm466, %v488, %v489
    %v491 = vrot.slane %v484, 3
    %v492 = vsel %vm466, %v489, %v491
    %493 = vrot.lane.b32.xlu0 %v490, 1
    %v494 = vpop.permute.xlu0 %493
    %495 = vrot.lane.b32.xlu0 %v492, 1
    %v496 = vpop.permute.xlu0 %495
    %v499 = vadd.f32 %v414, %v494
    %v500 = vadd.f32 %v415, %v496
    %s501 = sld [smem:[#allocation4 + $0x17]]
    %v502 = vstv %s501
    %v503 = vmul.f32 %v502, %v93
    %v504 = vmul.f32 %v502, %v94
    %v505 = vmul.f32 %v502, %v95
    %v509 = vrot.slane %v503, 3
    %v510 = vrot.slane %v504, 3
    %v511 = vsel %vm466, %v509, %v510
    %v512 = vrot.slane %v505, 3
    %v513 = vsel %vm466, %v510, %v512
    %514 = vrot.lane.b32.xlu0 %v511, 1
    %v515 = vpop.permute.xlu0 %514
    %516 = vrot.lane.b32.xlu0 %v513, 1
    %v517 = vpop.permute.xlu0 %516
    %v520 = vadd.f32 %v435, %v515
    %v521 = vadd.f32 %v436, %v517
    %s522 = sld [smem:[#allocation4 + $0x18]]
    %v523 = vstv %s522
    %v524 = vmul.f32 %v523, %v93
    %v525 = vmul.f32 %v523, %v94
    %v526 = vmul.f32 %v523, %v95
    %v530 = vrot.slane %v524, 3
    %v531 = vrot.slane %v525, 3
    %v532 = vsel %vm466, %v530, %v531
    %v533 = vrot.slane %v526, 3
    %v534 = vsel %vm466, %v531, %v533
    %535 = vrot.lane.b32.xlu0 %v532, 125
    %v536 = vpop.permute.xlu0 %535
    %537 = vrot.lane.b32.xlu0 %v534, 125
    %v538 = vpop.permute.xlu0 %537
    %v541 = vadd.f32 %v456, %v536
    %v542 = vadd.f32 %v457, %v538
    %s543 = sld [smem:[#allocation4 + $0x19]]
    %v544 = vstv %s543
    %v545 = vmul.f32 %v544, %v93
    %v546 = vmul.f32 %v544, %v94
    %v547 = vmul.f32 %v544, %v95
    %v551 = vrot.slane %v545, 3
    %v552 = vrot.slane %v546, 3
    %v553 = vsel %vm466, %v551, %v552
    %v554 = vrot.slane %v547, 3
    %v555 = vsel %vm466, %v552, %v554
    %556 = vrot.lane.b32.xlu0 %v553, 125
    %v557 = vpop.permute.xlu0 %556
    %558 = vrot.lane.b32.xlu0 %v555, 125
    %v559 = vpop.permute.xlu0 %558
    %v562 = vadd.f32 %v478, %v557
    %v563 = vadd.f32 %v479, %v559
    %s564 = sld [smem:[#allocation4 + $0x1a]]
    %v565 = vstv %s564
    %v566 = vmul.f32 %v565, %v93
    %v567 = vmul.f32 %v565, %v94
    %v568 = vmul.f32 %v565, %v95
    %v572 = vrot.slane %v566, 3
    %v573 = vrot.slane %v567, 3
    %v574 = vsel %vm466, %v572, %v573
    %v575 = vrot.slane %v568, 3
    %v576 = vsel %vm466, %v573, %v575
    %577 = vrot.lane.b32.xlu0 %v574, 125
    %v578 = vpop.permute.xlu0 %577
    %579 = vrot.lane.b32.xlu0 %v576, 125
    %v580 = vpop.permute.xlu0 %579
    %v583 = vadd.f32 %v499, %v578
    %v584 = vadd.f32 %v500, %v580
    %s585 = sld [smem:[#allocation4 + $0x1b]]
    %v586 = vstv %s585
    %v587 = vmul.f32 %v586, %v93
    %v588 = vmul.f32 %v586, %v94
    %v589 = vmul.f32 %v586, %v95
    %v593 = vrot.slane %v587, 3
    %v594 = vrot.slane %v588, 3
    %v595 = vsel %vm466, %v593, %v594
    %v596 = vrot.slane %v589, 3
    %v597 = vsel %vm466, %v594, %v596
    %598 = vrot.lane.b32.xlu0 %v595, 125
    %v599 = vpop.permute.xlu0 %598
    %600 = vrot.lane.b32.xlu0 %v597, 125
    %v601 = vpop.permute.xlu0 %600
    %v604 = vadd.f32 %v520, %v599
    %v605 = vadd.f32 %v521, %v601
    %s606 = sld [smem:[#allocation4 + $0x1c]]
    %v607 = vstv %s606
    %v608 = vmul.f32 %v607, %v93
    %v609 = vmul.f32 %v607, %v94
    %v610 = vmul.f32 %v607, %v95
    %vm614 = vcmask 1043456
    %v615 = vrot.slane %v608, 4
    %v616 = vrot.slane %v609, 4
    %v617 = vsel %vm614, %v615, %v616
    %v618 = vrot.slane %v610, 4
    %v619 = vsel %vm614, %v616, %v618
    %v622 = vadd.f32 %v541, %v617
    %v623 = vadd.f32 %v542, %v619
    %s624 = sld [smem:[#allocation4 + $0x1d]]
    %v625 = vstv %s624
    %v626 = vmul.f32 %v625, %v93
    %v627 = vmul.f32 %v625, %v94
    %v628 = vmul.f32 %v625, %v95
    %v632 = vrot.slane %v626, 4
    %v633 = vrot.slane %v627, 4
    %v634 = vsel %vm614, %v632, %v633
    %v635 = vrot.slane %v628, 4
    %v636 = vsel %vm614, %v633, %v635
    %v639 = vadd.f32 %v562, %v634
    %v640 = vadd.f32 %v563, %v636
    %s641 = sld [smem:[#allocation4 + $0x1e]]
    %v642 = vstv %s641
    %v643 = vmul.f32 %v642, %v93
    %v644 = vmul.f32 %v642, %v94
    %v645 = vmul.f32 %v642, %v95
    %v649 = vrot.slane %v643, 4
    %v650 = vrot.slane %v644, 4
    %v651 = vsel %vm614, %v649, %v650
    %v652 = vrot.slane %v645, 4
    %v653 = vsel %vm614, %v650, %v652
    %v656 = vadd.f32 %v583, %v651
    %v657 = vadd.f32 %v584, %v653
    %s658 = sld [smem:[#allocation4 + $0x1f]]
    %v659 = vstv %s658
    %v660 = vmul.f32 %v659, %v93
    %v661 = vmul.f32 %v659, %v94
    %v662 = vmul.f32 %v659, %v95
    %v666 = vrot.slane %v660, 4
    %v667 = vrot.slane %v661, 4
    %v668 = vsel %vm614, %v666, %v667
    %v669 = vrot.slane %v662, 4
    %v670 = vsel %vm614, %v667, %v669
    %v673 = vadd.f32 %v604, %v668
    %v674 = vadd.f32 %v605, %v670
    %s675 = sld [smem:[#allocation4 + $0x20]]
    %v676 = vstv %s675
    %v677 = vmul.f32 %v676, %v93
    %v678 = vmul.f32 %v676, %v94
    %v679 = vmul.f32 %v676, %v95
    %v683 = vrot.slane %v677, 4
    %v684 = vrot.slane %v678, 4
    %v685 = vsel %vm614, %v683, %v684
    %v686 = vrot.slane %v679, 4
    %v687 = vsel %vm614, %v684, %v686
    %688 = vrot.lane.b32.xlu0 %v685, 124
    %v689 = vpop.permute.xlu0 %688
    %690 = vrot.lane.b32.xlu0 %v687, 124
    %v691 = vpop.permute.xlu0 %690
    %v694 = vadd.f32 %v622, %v689
    %v695 = vadd.f32 %v623, %v691
    %s696 = sld [smem:[#allocation4 + $0x21]]
    %v697 = vstv %s696
    %v698 = vmul.f32 %v697, %v93
    %v699 = vmul.f32 %v697, %v94
    %v700 = vmul.f32 %v697, %v95
    %v704 = vrot.slane %v698, 4
    %v705 = vrot.slane %v699, 4
    %v706 = vsel %vm614, %v704, %v705
    %v707 = vrot.slane %v700, 4
    %v708 = vsel %vm614, %v705, %v707
    %709 = vrot.lane.b32.xlu0 %v706, 124
    %v710 = vpop.permute.xlu0 %709
    %711 = vrot.lane.b32.xlu0 %v708, 124
    %v712 = vpop.permute.xlu0 %711
    %v715 = vadd.f32 %v639, %v710
    %v716 = vadd.f32 %v640, %v712
    %s717 = sld [smem:[#allocation4 + $0x22]]
    %v718 = vstv %s717
    %v719 = vmul.f32 %v718, %v93
    %v720 = vmul.f32 %v718, %v94
    %v721 = vmul.f32 %v718, %v95
    %v725 = vrot.slane %v719, 4
    %v726 = vrot.slane %v720, 4
    %v727 = vsel %vm614, %v725, %v726
    %v728 = vrot.slane %v721, 4
    %v729 = vsel %vm614, %v726, %v728
    %730 = vrot.lane.b32.xlu0 %v727, 124
    %v731 = vpop.permute.xlu0 %730
    %732 = vrot.lane.b32.xlu0 %v729, 124
    %v733 = vpop.permute.xlu0 %732
    %v736 = vadd.f32 %v656, %v731
    %v737 = vadd.f32 %v657, %v733
    %s738 = sld [smem:[#allocation4 + $0x23]]
    %v739 = vstv %s738
    %v740 = vmul.f32 %v739, %v93
    %v741 = vmul.f32 %v739, %v94
    %v742 = vmul.f32 %v739, %v95
    %vm746 = vcmask 1042432
    %v747 = vrot.slane %v740, 5
    %v748 = vrot.slane %v741, 5
    %v749 = vsel %vm746, %v747, %v748
    %v750 = vrot.slane %v742, 5
    %v751 = vsel %vm746, %v748, %v750
    %752 = vrot.lane.b32.xlu0 %v749, 3
    %v753 = vpop.permute.xlu0 %752
    %754 = vrot.lane.b32.xlu0 %v751, 3
    %v755 = vpop.permute.xlu0 %754
    %v758 = vadd.f32 %v673, %v753
    %v759 = vadd.f32 %v674, %v755
    %s760 = sld [smem:[#allocation4 + $0x24]]
    %v761 = vstv %s760
    %v762 = vmul.f32 %v761, %v93
    %v763 = vmul.f32 %v761, %v94
    %v764 = vmul.f32 %v761, %v95
    %v768 = vrot.slane %v762, 5
    %v769 = vrot.slane %v763, 5
    %v770 = vsel %vm746, %v768, %v769
    %v771 = vrot.slane %v764, 5
    %v772 = vsel %vm746, %v769, %v771
    %773 = vrot.lane.b32.xlu0 %v770, 127
    %v774 = vpop.permute.xlu0 %773
    %775 = vrot.lane.b32.xlu0 %v772, 127
    %v776 = vpop.permute.xlu0 %775
    %v779 = vadd.f32 %v694, %v774
    %v780 = vadd.f32 %v695, %v776
    %s781 = sld [smem:[#allocation4 + $0x25]]
    %v782 = vstv %s781
    %v783 = vmul.f32 %v782, %v93
    %v784 = vmul.f32 %v782, %v94
    %v785 = vmul.f32 %v782, %v95
    %v789 = vrot.slane %v783, 5
    %v790 = vrot.slane %v784, 5
    %v791 = vsel %vm746, %v789, %v790
    %v792 = vrot.slane %v785, 5
    %v793 = vsel %vm746, %v790, %v792
    %794 = vrot.lane.b32.xlu0 %v791, 127
    %v795 = vpop.permute.xlu0 %794
    %796 = vrot.lane.b32.xlu0 %v793, 127
    %v797 = vpop.permute.xlu0 %796
    %v800 = vadd.f32 %v715, %v795
    %v801 = vadd.f32 %v716, %v797
    %s802 = sld [smem:[#allocation4 + $0x26]]
    %v803 = vstv %s802
    %v804 = vmul.f32 %v803, %v93
    %v805 = vmul.f32 %v803, %v94
    %v806 = vmul.f32 %v803, %v95
    %v810 = vrot.slane %v804, 5
    %v811 = vrot.slane %v805, 5
    %v812 = vsel %vm746, %v810, %v811
    %v813 = vrot.slane %v806, 5
    %v814 = vsel %vm746, %v811, %v813
    %815 = vrot.lane.b32.xlu0 %v812, 127
    %v816 = vpop.permute.xlu0 %815
    %817 = vrot.lane.b32.xlu0 %v814, 127
    %v818 = vpop.permute.xlu0 %817
    %v821 = vadd.f32 %v736, %v816
    %v822 = vadd.f32 %v737, %v818
    %s823 = sld [smem:[#allocation4 + $0x27]]
    %v824 = vstv %s823
    %v825 = vmul.f32 %v824, %v93
    %v826 = vmul.f32 %v824, %v94
    %v827 = vmul.f32 %v824, %v95
    %v831 = vrot.slane %v825, 5
    %v832 = vrot.slane %v826, 5
    %v833 = vsel %vm746, %v831, %v832
    %v834 = vrot.slane %v827, 5
    %v835 = vsel %vm746, %v832, %v834
    %836 = vrot.lane.b32.xlu0 %v833, 127
    %v837 = vpop.permute.xlu0 %836
    %838 = vrot.lane.b32.xlu0 %v835, 127
    %v839 = vpop.permute.xlu0 %838
    %v842 = vadd.f32 %v758, %v837
    %v843 = vadd.f32 %v759, %v839
    %s844 = sld [smem:[#allocation4 + $0x28]]
    %v845 = vstv %s844
    %v846 = vmul.f32 %v845, %v93
    %v847 = vmul.f32 %v845, %v94
    %v848 = vmul.f32 %v845, %v95
    %v852 = vrot.slane %v846, 5
    %v853 = vrot.slane %v847, 5
    %v854 = vsel %vm746, %v852, %v853
    %v855 = vrot.slane %v848, 5
    %v856 = vsel %vm746, %v853, %v855
    %857 = vrot.lane.b32.xlu0 %v854, 123
    %v858 = vpop.permute.xlu0 %857
    %859 = vrot.lane.b32.xlu0 %v856, 123
    %v860 = vpop.permute.xlu0 %859
    %v863 = vadd.f32 %v779, %v858
    %v864 = vadd.f32 %v780, %v860
    %s865 = sld [smem:[#allocation4 + $0x29]]
    %v866 = vstv %s865
    %v867 = vmul.f32 %v866, %v93
    %v868 = vmul.f32 %v866, %v94
    %v869 = vmul.f32 %v866, %v95
    %v873 = vrot.slane %v867, 5
    %v874 = vrot.slane %v868, 5
    %v875 = vsel %vm746, %v873, %v874
    %v876 = vrot.slane %v869, 5
    %v877 = vsel %vm746, %v874, %v876
    %878 = vrot.lane.b32.xlu0 %v875, 123
    %v879 = vpop.permute.xlu0 %878
    %880 = vrot.lane.b32.xlu0 %v877, 123
    %v881 = vpop.permute.xlu0 %880
    %v884 = vadd.f32 %v800, %v879
    %v885 = vadd.f32 %v801, %v881
    %s886 = sld [smem:[#allocation4 + $0x2a]]
    %v887 = vstv %s886
    %v888 = vmul.f32 %v887, %v93
    %v889 = vmul.f32 %v887, %v94
    %v890 = vmul.f32 %v887, %v95
    %vm894 = vcmask 1041408
    %v895 = vrot.slane %v888, 6
    %v896 = vrot.slane %v889, 6
    %v897 = vsel %vm894, %v895, %v896
    %v898 = vrot.slane %v890, 6
    %v899 = vsel %vm894, %v896, %v898
    %900 = vrot.lane.b32.xlu0 %v897, 2
    %v901 = vpop.permute.xlu0 %900
    %902 = vrot.lane.b32.xlu0 %v899, 2
    %v903 = vpop.permute.xlu0 %902
    %v906 = vadd.f32 %v821, %v901
    %v907 = vadd.f32 %v822, %v903
    %s908 = sld [smem:[#allocation4 + $0x2b]]
    %v909 = vstv %s908
    %v910 = vmul.f32 %v909, %v93
    %v911 = vmul.f32 %v909, %v94
    %v912 = vmul.f32 %v909, %v95
    %v916 = vrot.slane %v910, 6
    %v917 = vrot.slane %v911, 6
    %v918 = vsel %vm894, %v916, %v917
    %v919 = vrot.slane %v912, 6
    %v920 = vsel %vm894, %v917, %v919
    %921 = vrot.lane.b32.xlu0 %v918, 2
    %v922 = vpop.permute.xlu0 %921
    %923 = vrot.lane.b32.xlu0 %v920, 2
    %v924 = vpop.permute.xlu0 %923
    %v927 = vadd.f32 %v842, %v922
    %v928 = vadd.f32 %v843, %v924
    %s929 = sld [smem:[#allocation4 + $0x2c]]
    %v930 = vstv %s929
    %v931 = vmul.f32 %v930, %v93
    %v932 = vmul.f32 %v930, %v94
    %v933 = vmul.f32 %v930, %v95
    %v937 = vrot.slane %v931, 6
    %v938 = vrot.slane %v932, 6
    %v939 = vsel %vm894, %v937, %v938
    %v940 = vrot.slane %v933, 6
    %v941 = vsel %vm894, %v938, %v940
    %942 = vrot.lane.b32.xlu0 %v939, 126
    %v943 = vpop.permute.xlu0 %942
    %944 = vrot.lane.b32.xlu0 %v941, 126
    %v945 = vpop.permute.xlu0 %944
    %v948 = vadd.f32 %v863, %v943
    %v949 = vadd.f32 %v864, %v945
    %s950 = sld [smem:[#allocation4 + $0x2d]]
    %v951 = vstv %s950
    %v952 = vmul.f32 %v951, %v93
    %v953 = vmul.f32 %v951, %v94
    %v954 = vmul.f32 %v951, %v95
    %v958 = vrot.slane %v952, 6
    %v959 = vrot.slane %v953, 6
    %v960 = vsel %vm894, %v958, %v959
    %v961 = vrot.slane %v954, 6
    %v962 = vsel %vm894, %v959, %v961
    %963 = vrot.lane.b32.xlu0 %v960, 126
    %v964 = vpop.permute.xlu0 %963
    %965 = vrot.lane.b32.xlu0 %v962, 126
    %v966 = vpop.permute.xlu0 %965
    %v969 = vadd.f32 %v884, %v964
    %v970 = vadd.f32 %v885, %v966
    %s971 = sld [smem:[#allocation4 + $0x2e]]
    %v972 = vstv %s971
    %v973 = vmul.f32 %v972, %v93
    %v974 = vmul.f32 %v972, %v94
    %v975 = vmul.f32 %v972, %v95
    %v979 = vrot.slane %v973, 6
    %v980 = vrot.slane %v974, 6
    %v981 = vsel %vm894, %v979, %v980
    %v982 = vrot.slane %v975, 6
    %v983 = vsel %vm894, %v980, %v982
    %984 = vrot.lane.b32.xlu0 %v981, 126
    %v985 = vpop.permute.xlu0 %984
    %986 = vrot.lane.b32.xlu0 %v983, 126
    %v987 = vpop.permute.xlu0 %986
    %v990 = vadd.f32 %v906, %v985
    %v991 = vadd.f32 %v907, %v987
    %s992 = sld [smem:[#allocation4 + $0x2f]]
    %v993 = vstv %s992
    %v994 = vmul.f32 %v993, %v93
    %v995 = vmul.f32 %v993, %v94
    %v996 = vmul.f32 %v993, %v95
    %v1000 = vrot.slane %v994, 6
    %v1001 = vrot.slane %v995, 6
    %v1002 = vsel %vm894, %v1000, %v1001
    %v1003 = vrot.slane %v996, 6
    %v1004 = vsel %vm894, %v1001, %v1003
    %1005 = vrot.lane.b32.xlu0 %v1002, 126
    %v1006 = vpop.permute.xlu0 %1005
    %1007 = vrot.lane.b32.xlu0 %v1004, 126
    %v1008 = vpop.permute.xlu0 %1007
    %v1011 = vadd.f32 %v927, %v1006
    %v1012 = vadd.f32 %v928, %v1008
    %s1013 = sld [smem:[#allocation4 + $0x30]]
    %v1014 = vstv %s1013
    %v1015 = vmul.f32 %v1014, %v93
    %v1016 = vmul.f32 %v1014, %v94
    %v1017 = vmul.f32 %v1014, %v95
    %v1021 = vrot.slane %v1015, 6
    %v1022 = vrot.slane %v1016, 6
    %v1023 = vsel %vm894, %v1021, %v1022
    %v1024 = vrot.slane %v1017, 6
    %v1025 = vsel %vm894, %v1022, %v1024
    %1026 = vrot.lane.b32.xlu0 %v1023, 122
    %v1027 = vpop.permute.xlu0 %1026
    %1028 = vrot.lane.b32.xlu0 %v1025, 122
    %v1029 = vpop.permute.xlu0 %1028
    %v1032 = vadd.f32 %v948, %v1027
    %v1033 = vadd.f32 %v949, %v1029
    %1036 = vrot.lane.b32.xlu0 %v969, 127
    %v1037 = vpop.permute.xlu0 %1036
    %1038 = vrot.lane.b32.xlu0 %v970, 127
    %v1039 = vpop.permute.xlu0 %1038
    %v1042 = vadd.f32 %v1032, %v1037
    %v1043 = vadd.f32 %v1033, %v1039
    %1046 = vrot.lane.b32.xlu0 %v1011, 127
    %v1047 = vpop.permute.xlu0 %1046
    %1048 = vrot.lane.b32.xlu0 %v1012, 127
    %v1049 = vpop.permute.xlu0 %1048
    %v1052 = vadd.f32 %v990, %v1047
    %v1053 = vadd.f32 %v991, %v1049
    %1056 = vrot.lane.b32.xlu0 %v1052, 126
    %v1057 = vpop.permute.xlu0 %1056
    %1058 = vrot.lane.b32.xlu0 %v1053, 126
    %v1059 = vpop.permute.xlu0 %1058
    %v1062 = vadd.f32 %v1042, %v1057
    %v1063 = vadd.f32 %v1043, %v1059
    %v1064 = vld [vmem:[#allocation3] sm:$0xff]
    %v1065 = vld [vmem:[#allocation3 + $0x8] sm:$0xff]
    %v1066 = vld [vmem:[#allocation3 + $0x10] sm:$0x3f]
    %s1067 = sld [smem:[#allocation4 + $0x31]]
    %v1068 = vstv %s1067
    %v1069 = vmul.f32 %v1068, %v1064
    %v1070 = vmul.f32 %v1068, %v1065
    %v1071 = vadd.f32 %v1069, 0.0
    %v1072 = vadd.f32 %v1070, 0.0
    %s1073 = sld [smem:[#allocation4 + $0x32]]
    %v1074 = vstv %s1073
    %v1075 = vmul.f32 %v1074, %v1064
    %v1076 = vmul.f32 %v1074, %v1065
    %v1077 = vadd.f32 %v1075, 0.0
    %v1078 = vadd.f32 %v1076, 0.0
    %s1079 = sld [smem:[#allocation4 + $0x33]]
    %v1080 = vstv %s1079
    %v1081 = vmul.f32 %v1080, %v1064
    %v1082 = vmul.f32 %v1080, %v1065
    %v1083 = vadd.f32 %v1081, 0.0
    %v1084 = vadd.f32 %v1082, 0.0
    %s1085 = sld [smem:[#allocation4 + $0x34]]
    %v1086 = vstv %s1085
    %v1087 = vmul.f32 %v1086, %v1064
    %v1088 = vmul.f32 %v1086, %v1065
    %v1089 = vadd.f32 %v1087, 0.0
    %v1090 = vadd.f32 %v1088, 0.0
    %s1091 = sld [smem:[#allocation4 + $0x35]]
    %v1092 = vstv %s1091
    %v1093 = vmul.f32 %v1092, %v1064
    %v1094 = vmul.f32 %v1092, %v1065
    %1097 = vrot.lane.b32.xlu0 %v1093, 124
    %v1098 = vpop.permute.xlu0 %1097
    %1099 = vrot.lane.b32.xlu0 %v1094, 124
    %v1100 = vpop.permute.xlu0 %1099
    %v1103 = vadd.f32 %v1071, %v1098
    %v1104 = vadd.f32 %v1072, %v1100
    %s1105 = sld [smem:[#allocation4 + $0x36]]
    %v1106 = vstv %s1105
    %v1107 = vmul.f32 %v1106, %v1064
    %v1108 = vmul.f32 %v1106, %v1065
    %1111 = vrot.lane.b32.xlu0 %v1107, 124
    %v1112 = vpop.permute.xlu0 %1111
    %1113 = vrot.lane.b32.xlu0 %v1108, 124
    %v1114 = vpop.permute.xlu0 %1113
    %v1117 = vadd.f32 %v1077, %v1112
    %v1118 = vadd.f32 %v1078, %v1114
    %s1119 = sld [smem:[#allocation4 + $0x37]]
    %v1120 = vstv %s1119
    %v1121 = vmul.f32 %v1120, %v1064
    %v1122 = vmul.f32 %v1120, %v1065
    %1125 = vrot.lane.b32.xlu0 %v1121, 124
    %v1126 = vpop.permute.xlu0 %1125
    %1127 = vrot.lane.b32.xlu0 %v1122, 124
    %v1128 = vpop.permute.xlu0 %1127
    %v1131 = vadd.f32 %v1083, %v1126
    %v1132 = vadd.f32 %v1084, %v1128
    %s1133 = sld [smem:[#allocation4 + $0x38]]
    %v1134 = vstv %s1133
    %v1135 = vmul.f32 %v1134, %v1064
    %v1136 = vmul.f32 %v1134, %v1065
    %v1137 = vmul.f32 %v1134, %v1066
    %v1141 = vrot.slane %v1135, 1
    %v1142 = vrot.slane %v1136, 1
    %v1143 = vsel %vm170, %v1141, %v1142
    %v1144 = vrot.slane %v1137, 1
    %v1145 = vsel %vm170, %v1142, %v1144
    %1146 = vrot.lane.b32.xlu0 %v1143, 3
    %v1147 = vpop.permute.xlu0 %1146
    %1148 = vrot.lane.b32.xlu0 %v1145, 3
    %v1149 = vpop.permute.xlu0 %1148
    %v1152 = vadd.f32 %v1089, %v1147
    %v1153 = vadd.f32 %v1090, %v1149
    %s1154 = sld [smem:[#allocation4 + $0x39]]
    %v1155 = vstv %s1154
    %v1156 = vmul.f32 %v1155, %v1064
    %v1157 = vmul.f32 %v1155, %v1065
    %v1158 = vmul.f32 %v1155, %v1066
    %v1162 = vrot.slane %v1156, 1
    %v1163 = vrot.slane %v1157, 1
    %v1164 = vsel %vm170, %v1162, %v1163
    %v1165 = vrot.slane %v1158, 1
    %v1166 = vsel %vm170, %v1163, %v1165
    %1167 = vrot.lane.b32.xlu0 %v1164, 127
    %v1168 = vpop.permute.xlu0 %1167
    %1169 = vrot.lane.b32.xlu0 %v1166, 127
    %v1170 = vpop.permute.xlu0 %1169
    %v1173 = vadd.f32 %v1103, %v1168
    %v1174 = vadd.f32 %v1104, %v1170
    %s1175 = sld [smem:[#allocation4 + $0x3a]]
    %v1176 = vstv %s1175
    %v1177 = vmul.f32 %v1176, %v1064
    %v1178 = vmul.f32 %v1176, %v1065
    %v1179 = vmul.f32 %v1176, %v1066
    %v1183 = vrot.slane %v1177, 1
    %v1184 = vrot.slane %v1178, 1
    %v1185 = vsel %vm170, %v1183, %v1184
    %v1186 = vrot.slane %v1179, 1
    %v1187 = vsel %vm170, %v1184, %v1186
    %1188 = vrot.lane.b32.xlu0 %v1185, 127
    %v1189 = vpop.permute.xlu0 %1188
    %1190 = vrot.lane.b32.xlu0 %v1187, 127
    %v1191 = vpop.permute.xlu0 %1190
    %v1194 = vadd.f32 %v1117, %v1189
    %v1195 = vadd.f32 %v1118, %v1191
    %s1196 = sld [smem:[#allocation4 + $0x3b]]
    %v1197 = vstv %s1196
    %v1198 = vmul.f32 %v1197, %v1064
    %v1199 = vmul.f32 %v1197, %v1065
    %v1200 = vmul.f32 %v1197, %v1066
    %v1204 = vrot.slane %v1198, 1
    %v1205 = vrot.slane %v1199, 1
    %v1206 = vsel %vm170, %v1204, %v1205
    %v1207 = vrot.slane %v1200, 1
    %v1208 = vsel %vm170, %v1205, %v1207
    %1209 = vrot.lane.b32.xlu0 %v1206, 127
    %v1210 = vpop.permute.xlu0 %1209
    %1211 = vrot.lane.b32.xlu0 %v1208, 127
    %v1212 = vpop.permute.xlu0 %1211
    %v1215 = vadd.f32 %v1131, %v1210
    %v1216 = vadd.f32 %v1132, %v1212
    %s1217 = sld [smem:[#allocation4 + $0x3c]]
    %v1218 = vstv %s1217
    %v1219 = vmul.f32 %v1218, %v1064
    %v1220 = vmul.f32 %v1218, %v1065
    %v1221 = vmul.f32 %v1218, %v1066
    %v1225 = vrot.slane %v1219, 1
    %v1226 = vrot.slane %v1220, 1
    %v1227 = vsel %vm170, %v1225, %v1226
    %v1228 = vrot.slane %v1221, 1
    %v1229 = vsel %vm170, %v1226, %v1228
    %1230 = vrot.lane.b32.xlu0 %v1227, 127
    %v1231 = vpop.permute.xlu0 %1230
    %1232 = vrot.lane.b32.xlu0 %v1229, 127
    %v1233 = vpop.permute.xlu0 %1232
    %v1236 = vadd.f32 %v1152, %v1231
    %v1237 = vadd.f32 %v1153, %v1233
    %s1238 = sld [smem:[#allocation4 + $0x3d]]
    %v1239 = vstv %s1238
    %v1240 = vmul.f32 %v1239, %v1064
    %v1241 = vmul.f32 %v1239, %v1065
    %v1242 = vmul.f32 %v1239, %v1066
    %v1246 = vrot.slane %v1240, 1
    %v1247 = vrot.slane %v1241, 1
    %v1248 = vsel %vm170, %v1246, %v1247
    %v1249 = vrot.slane %v1242, 1
    %v1250 = vsel %vm170, %v1247, %v1249
    %1251 = vrot.lane.b32.xlu0 %v1248, 123
    %v1252 = vpop.permute.xlu0 %1251
    %1253 = vrot.lane.b32.xlu0 %v1250, 123
    %v1254 = vpop.permute.xlu0 %1253
    %v1257 = vadd.f32 %v1173, %v1252
    %v1258 = vadd.f32 %v1174, %v1254
    %s1259 = sld [smem:[#allocation4 + $0x3e]]
    %v1260 = vstv %s1259
    %v1261 = vmul.f32 %v1260, %v1064
    %v1262 = vmul.f32 %v1260, %v1065
    %v1263 = vmul.f32 %v1260, %v1066
    %v1267 = vrot.slane %v1261, 1
    %v1268 = vrot.slane %v1262, 1
    %v1269 = vsel %vm170, %v1267, %v1268
    %v1270 = vrot.slane %v1263, 1
    %v1271 = vsel %vm170, %v1268, %v1270
    %1272 = vrot.lane.b32.xlu0 %v1269, 123
    %v1273 = vpop.permute.xlu0 %1272
    %1274 = vrot.lane.b32.xlu0 %v1271, 123
    %v1275 = vpop.permute.xlu0 %1274
    %v1278 = vadd.f32 %v1194, %v1273
    %v1279 = vadd.f32 %v1195, %v1275
    %s1280 = sld [smem:[#allocation4 + $0x3f]]
    %v1281 = vstv %s1280
    %v1282 = vmul.f32 %v1281, %v1064
    %v1283 = vmul.f32 %v1281, %v1065
    %v1284 = vmul.f32 %v1281, %v1066
    %v1288 = vrot.slane %v1282, 2
    %v1289 = vrot.slane %v1283, 2
    %v1290 = vsel %vm318, %v1288, %v1289
    %v1291 = vrot.slane %v1284, 2
    %v1292 = vsel %vm318, %v1289, %v1291
    %1293 = vrot.lane.b32.xlu0 %v1290, 2
    %v1294 = vpop.permute.xlu0 %1293
    %1295 = vrot.lane.b32.xlu0 %v1292, 2
    %v1296 = vpop.permute.xlu0 %1295
    %v1299 = vadd.f32 %v1215, %v1294
    %v1300 = vadd.f32 %v1216, %v1296
    %s1301 = sld [smem:[#allocation4 + $0x40]]
    %v1302 = vstv %s1301
    %v1303 = vmul.f32 %v1302, %v1064
    %v1304 = vmul.f32 %v1302, %v1065
    %v1305 = vmul.f32 %v1302, %v1066
    %v1309 = vrot.slane %v1303, 2
    %v1310 = vrot.slane %v1304, 2
    %v1311 = vsel %vm318, %v1309, %v1310
    %v1312 = vrot.slane %v1305, 2
    %v1313 = vsel %vm318, %v1310, %v1312
    %1314 = vrot.lane.b32.xlu0 %v1311, 2
    %v1315 = vpop.permute.xlu0 %1314
    %1316 = vrot.lane.b32.xlu0 %v1313, 2
    %v1317 = vpop.permute.xlu0 %1316
    %v1320 = vadd.f32 %v1236, %v1315
    %v1321 = vadd.f32 %v1237, %v1317
    %s1322 = sld [smem:[#allocation4 + $0x41]]
    %v1323 = vstv %s1322
    %v1324 = vmul.f32 %v1323, %v1064
    %v1325 = vmul.f32 %v1323, %v1065
    %v1326 = vmul.f32 %v1323, %v1066
    %v1330 = vrot.slane %v1324, 2
    %v1331 = vrot.slane %v1325, 2
    %v1332 = vsel %vm318, %v1330, %v1331
    %v1333 = vrot.slane %v1326, 2
    %v1334 = vsel %vm318, %v1331, %v1333
    %1335 = vrot.lane.b32.xlu0 %v1332, 126
    %v1336 = vpop.permute.xlu0 %1335
    %1337 = vrot.lane.b32.xlu0 %v1334, 126
    %v1338 = vpop.permute.xlu0 %1337
    %v1341 = vadd.f32 %v1257, %v1336
    %v1342 = vadd.f32 %v1258, %v1338
    %s1343 = sld [smem:[#allocation4 + $0x42]]
    %v1344 = vstv %s1343
    %v1345 = vmul.f32 %v1344, %v1064
    %v1346 = vmul.f32 %v1344, %v1065
    %v1347 = vmul.f32 %v1344, %v1066
    %v1351 = vrot.slane %v1345, 2
    %v1352 = vrot.slane %v1346, 2
    %v1353 = vsel %vm318, %v1351, %v1352
    %v1354 = vrot.slane %v1347, 2
    %v1355 = vsel %vm318, %v1352, %v1354
    %1356 = vrot.lane.b32.xlu0 %v1353, 126
    %v1357 = vpop.permute.xlu0 %1356
    %1358 = vrot.lane.b32.xlu0 %v1355, 126
    %v1359 = vpop.permute.xlu0 %1358
    %v1362 = vadd.f32 %v1278, %v1357
    %v1363 = vadd.f32 %v1279, %v1359
    %s1364 = sld [smem:[#allocation4 + $0x43]]
    %v1365 = vstv %s1364
    %v1366 = vmul.f32 %v1365, %v1064
    %v1367 = vmul.f32 %v1365, %v1065
    %v1368 = vmul.f32 %v1365, %v1066
    %v1372 = vrot.slane %v1366, 2
    %v1373 = vrot.slane %v1367, 2
    %v1374 = vsel %vm318, %v1372, %v1373
    %v1375 = vrot.slane %v1368, 2
    %v1376 = vsel %vm318, %v1373, %v1375
    %1377 = vrot.lane.b32.xlu0 %v1374, 126
    %v1378 = vpop.permute.xlu0 %1377
    %1379 = vrot.lane.b32.xlu0 %v1376, 126
    %v1380 = vpop.permute.xlu0 %1379
    %v1383 = vadd.f32 %v1299, %v1378
    %v1384 = vadd.f32 %v1300, %v1380
    %s1385 = sld [smem:[#allocation4 + $0x44]]
    %v1386 = vstv %s1385
    %v1387 = vmul.f32 %v1386, %v1064
    %v1388 = vmul.f32 %v1386, %v1065
    %v1389 = vmul.f32 %v1386, %v1066
    %v1393 = vrot.slane %v1387, 2
    %v1394 = vrot.slane %v1388, 2
    %v1395 = vsel %vm318, %v1393, %v1394
    %v1396 = vrot.slane %v1389, 2
    %v1397 = vsel %vm318, %v1394, %v1396
    %1398 = vrot.lane.b32.xlu0 %v1395, 126
    %v1399 = vpop.permute.xlu0 %1398
    %1400 = vrot.lane.b32.xlu0 %v1397, 126
    %v1401 = vpop.permute.xlu0 %1400
    %v1404 = vadd.f32 %v1320, %v1399
    %v1405 = vadd.f32 %v1321, %v1401
    %s1406 = sld [smem:[#allocation4 + $0x45]]
    %v1407 = vstv %s1406
    %v1408 = vmul.f32 %v1407, %v1064
    %v1409 = vmul.f32 %v1407, %v1065
    %v1410 = vmul.f32 %v1407, %v1066
    %v1414 = vrot.slane %v1408, 2
    %v1415 = vrot.slane %v1409, 2
    %v1416 = vsel %vm318, %v1414, %v1415
    %v1417 = vrot.slane %v1410, 2
    %v1418 = vsel %vm318, %v1415, %v1417
    %1419 = vrot.lane.b32.xlu0 %v1416, 122
    %v1420 = vpop.permute.xlu0 %1419
    %1421 = vrot.lane.b32.xlu0 %v1418, 122
    %v1422 = vpop.permute.xlu0 %1421
    %v1425 = vadd.f32 %v1341, %v1420
    %v1426 = vadd.f32 %v1342, %v1422
    %s1427 = sld [smem:[#allocation4 + $0x46]]
    %v1428 = vstv %s1427
    %v1429 = vmul.f32 %v1428, %v1064
    %v1430 = vmul.f32 %v1428, %v1065
    %v1431 = vmul.f32 %v1428, %v1066
    %v1435 = vrot.slane %v1429, 3
    %v1436 = vrot.slane %v1430, 3
    %v1437 = vsel %vm466, %v1435, %v1436
    %v1438 = vrot.slane %v1431, 3
    %v1439 = vsel %vm466, %v1436, %v1438
    %1440 = vrot.lane.b32.xlu0 %v1437, 1
    %v1441 = vpop.permute.xlu0 %1440
    %1442 = vrot.lane.b32.xlu0 %v1439, 1
    %v1443 = vpop.permute.xlu0 %1442
    %v1446 = vadd.f32 %v1362, %v1441
    %v1447 = vadd.f32 %v1363, %v1443
    %s1448 = sld [smem:[#allocation4 + $0x47]]
    %v1449 = vstv %s1448
    %v1450 = vmul.f32 %v1449, %v1064
    %v1451 = vmul.f32 %v1449, %v1065
    %v1452 = vmul.f32 %v1449, %v1066
    %v1456 = vrot.slane %v1450, 3
    %v1457 = vrot.slane %v1451, 3
    %v1458 = vsel %vm466, %v1456, %v1457
    %v1459 = vrot.slane %v1452, 3
    %v1460 = vsel %vm466, %v1457, %v1459
    %1461 = vrot.lane.b32.xlu0 %v1458, 1
    %v1462 = vpop.permute.xlu0 %1461
    %1463 = vrot.lane.b32.xlu0 %v1460, 1
    %v1464 = vpop.permute.xlu0 %1463
    %v1467 = vadd.f32 %v1383, %v1462
    %v1468 = vadd.f32 %v1384, %v1464
    %s1469 = sld [smem:[#allocation4 + $0x48]]
    %v1470 = vstv %s1469
    %v1471 = vmul.f32 %v1470, %v1064
    %v1472 = vmul.f32 %v1470, %v1065
    %v1473 = vmul.f32 %v1470, %v1066
    %v1477 = vrot.slane %v1471, 3
    %v1478 = vrot.slane %v1472, 3
    %v1479 = vsel %vm466, %v1477, %v1478
    %v1480 = vrot.slane %v1473, 3
    %v1481 = vsel %vm466, %v1478, %v1480
    %1482 = vrot.lane.b32.xlu0 %v1479, 1
    %v1483 = vpop.permute.xlu0 %1482
    %1484 = vrot.lane.b32.xlu0 %v1481, 1
    %v1485 = vpop.permute.xlu0 %1484
    %v1488 = vadd.f32 %v1404, %v1483
    %v1489 = vadd.f32 %v1405, %v1485
    %s1490 = sld [smem:[#allocation4 + $0x49]]
    %v1491 = vstv %s1490
    %v1492 = vmul.f32 %v1491, %v1064
    %v1493 = vmul.f32 %v1491, %v1065
    %v1494 = vmul.f32 %v1491, %v1066
    %v1498 = vrot.slane %v1492, 3
    %v1499 = vrot.slane %v1493, 3
    %v1500 = vsel %vm466, %v1498, %v1499
    %v1501 = vrot.slane %v1494, 3
    %v1502 = vsel %vm466, %v1499, %v1501
    %1503 = vrot.lane.b32.xlu0 %v1500, 125
    %v1504 = vpop.permute.xlu0 %1503
    %1505 = vrot.lane.b32.xlu0 %v1502, 125
    %v1506 = vpop.permute.xlu0 %1505
    %v1509 = vadd.f32 %v1425, %v1504
    %v1510 = vadd.f32 %v1426, %v1506
    %s1511 = sld [smem:[#allocation4 + $0x4a]]
    %v1512 = vstv %s1511
    %v1513 = vmul.f32 %v1512, %v1064
    %v1514 = vmul.f32 %v1512, %v1065
    %v1515 = vmul.f32 %v1512, %v1066
    %v1519 = vrot.slane %v1513, 3
    %v1520 = vrot.slane %v1514, 3
    %v1521 = vsel %vm466, %v1519, %v1520
    %v1522 = vrot.slane %v1515, 3
    %v1523 = vsel %vm466, %v1520, %v1522
    %1524 = vrot.lane.b32.xlu0 %v1521, 125
    %v1525 = vpop.permute.xlu0 %1524
    %1526 = vrot.lane.b32.xlu0 %v1523, 125
    %v1527 = vpop.permute.xlu0 %1526
    %v1530 = vadd.f32 %v1446, %v1525
    %v1531 = vadd.f32 %v1447, %v1527
    %s1532 = sld [smem:[#allocation4 + $0x4b]]
    %v1533 = vstv %s1532
    %v1534 = vmul.f32 %v1533, %v1064
    %v1535 = vmul.f32 %v1533, %v1065
    %v1536 = vmul.f32 %v1533, %v1066
    %v1540 = vrot.slane %v1534, 3
    %v1541 = vrot.slane %v1535, 3
    %v1542 = vsel %vm466, %v1540, %v1541
    %v1543 = vrot.slane %v1536, 3
    %v1544 = vsel %vm466, %v1541, %v1543
    %1545 = vrot.lane.b32.xlu0 %v1542, 125
    %v1546 = vpop.permute.xlu0 %1545
    %1547 = vrot.lane.b32.xlu0 %v1544, 125
    %v1548 = vpop.permute.xlu0 %1547
    %v1551 = vadd.f32 %v1467, %v1546
    %v1552 = vadd.f32 %v1468, %v1548
    %s1553 = sld [smem:[#allocation4 + $0x4c]]
    %v1554 = vstv %s1553
    %v1555 = vmul.f32 %v1554, %v1064
    %v1556 = vmul.f32 %v1554, %v1065
    %v1557 = vmul.f32 %v1554, %v1066
    %v1561 = vrot.slane %v1555, 3
    %v1562 = vrot.slane %v1556, 3
    %v1563 = vsel %vm466, %v1561, %v1562
    %v1564 = vrot.slane %v1557, 3
    %v1565 = vsel %vm466, %v1562, %v1564
    %1566 = vrot.lane.b32.xlu0 %v1563, 125
    %v1567 = vpop.permute.xlu0 %1566
    %1568 = vrot.lane.b32.xlu0 %v1565, 125
    %v1569 = vpop.permute.xlu0 %1568
    %v1572 = vadd.f32 %v1488, %v1567
    %v1573 = vadd.f32 %v1489, %v1569
    %s1574 = sld [smem:[#allocation4 + $0x4d]]
    %v1575 = vstv %s1574
    %v1576 = vmul.f32 %v1575, %v1064
    %v1577 = vmul.f32 %v1575, %v1065
    %v1578 = vmul.f32 %v1575, %v1066
    %v1582 = vrot.slane %v1576, 4
    %v1583 = vrot.slane %v1577, 4
    %v1584 = vsel %vm614, %v1582, %v1583
    %v1585 = vrot.slane %v1578, 4
    %v1586 = vsel %vm614, %v1583, %v1585
    %v1589 = vadd.f32 %v1509, %v1584
    %v1590 = vadd.f32 %v1510, %v1586
    %s1591 = sld [smem:[#allocation4 + $0x4e]]
    %v1592 = vstv %s1591
    %v1593 = vmul.f32 %v1592, %v1064
    %v1594 = vmul.f32 %v1592, %v1065
    %v1595 = vmul.f32 %v1592, %v1066
    %v1599 = vrot.slane %v1593, 4
    %v1600 = vrot.slane %v1594, 4
    %v1601 = vsel %vm614, %v1599, %v1600
    %v1602 = vrot.slane %v1595, 4
    %v1603 = vsel %vm614, %v1600, %v1602
    %v1606 = vadd.f32 %v1530, %v1601
    %v1607 = vadd.f32 %v1531, %v1603
    %s1608 = sld [smem:[#allocation4 + $0x4f]]
    %v1609 = vstv %s1608
    %v1610 = vmul.f32 %v1609, %v1064
    %v1611 = vmul.f32 %v1609, %v1065
    %v1612 = vmul.f32 %v1609, %v1066
    %v1616 = vrot.slane %v1610, 4
    %v1617 = vrot.slane %v1611, 4
    %v1618 = vsel %vm614, %v1616, %v1617
    %v1619 = vrot.slane %v1612, 4
    %v1620 = vsel %vm614, %v1617, %v1619
    %v1623 = vadd.f32 %v1551, %v1618
    %v1624 = vadd.f32 %v1552, %v1620
    %s1625 = sld [smem:[#allocation4 + $0x50]]
    %v1626 = vstv %s1625
    %v1627 = vmul.f32 %v1626, %v1064
    %v1628 = vmul.f32 %v1626, %v1065
    %v1629 = vmul.f32 %v1626, %v1066
    %v1633 = vrot.slane %v1627, 4
    %v1634 = vrot.slane %v1628, 4
    %v1635 = vsel %vm614, %v1633, %v1634
    %v1636 = vrot.slane %v1629, 4
    %v1637 = vsel %vm614, %v1634, %v1636
    %v1640 = vadd.f32 %v1572, %v1635
    %v1641 = vadd.f32 %v1573, %v1637
    %s1642 = sld [smem:[#allocation4 + $0x51]]
    %v1643 = vstv %s1642
    %v1644 = vmul.f32 %v1643, %v1064
    %v1645 = vmul.f32 %v1643, %v1065
    %v1646 = vmul.f32 %v1643, %v1066
    %v1650 = vrot.slane %v1644, 4
    %v1651 = vrot.slane %v1645, 4
    %v1652 = vsel %vm614, %v1650, %v1651
    %v1653 = vrot.slane %v1646, 4
    %v1654 = vsel %vm614, %v1651, %v1653
    %1655 = vrot.lane.b32.xlu0 %v1652, 124
    %v1656 = vpop.permute.xlu0 %1655
    %1657 = vrot.lane.b32.xlu0 %v1654, 124
    %v1658 = vpop.permute.xlu0 %1657
    %v1661 = vadd.f32 %v1589, %v1656
    %v1662 = vadd.f32 %v1590, %v1658
    %s1663 = sld [smem:[#allocation4 + $0x52]]
    %v1664 = vstv %s1663
    %v1665 = vmul.f32 %v1664, %v1064
    %v1666 = vmul.f32 %v1664, %v1065
    %v1667 = vmul.f32 %v1664, %v1066
    %v1671 = vrot.slane %v1665, 4
    %v1672 = vrot.slane %v1666, 4
    %v1673 = vsel %vm614, %v1671, %v1672
    %v1674 = vrot.slane %v1667, 4
    %v1675 = vsel %vm614, %v1672, %v1674
    %1676 = vrot.lane.b32.xlu0 %v1673, 124
    %v1677 = vpop.permute.xlu0 %1676
    %1678 = vrot.lane.b32.xlu0 %v1675, 124
    %v1679 = vpop.permute.xlu0 %1678
    %v1682 = vadd.f32 %v1606, %v1677
    %v1683 = vadd.f32 %v1607, %v1679
    %s1684 = sld [smem:[#allocation4 + $0x53]]
    %v1685 = vstv %s1684
    %v1686 = vmul.f32 %v1685, %v1064
    %v1687 = vmul.f32 %v1685, %v1065
    %v1688 = vmul.f32 %v1685, %v1066
    %v1692 = vrot.slane %v1686, 4
    %v1693 = vrot.slane %v1687, 4
    %v1694 = vsel %vm614, %v1692, %v1693
    %v1695 = vrot.slane %v1688, 4
    %v1696 = vsel %vm614, %v1693, %v1695
    %1697 = vrot.lane.b32.xlu0 %v1694, 124
    %v1698 = vpop.permute.xlu0 %1697
    %1699 = vrot.lane.b32.xlu0 %v1696, 124
    %v1700 = vpop.permute.xlu0 %1699
    %v1703 = vadd.f32 %v1623, %v1698
    %v1704 = vadd.f32 %v1624, %v1700
    %s1705 = sld [smem:[#allocation4 + $0x54]]
    %v1706 = vstv %s1705
    %v1707 = vmul.f32 %v1706, %v1064
    %v1708 = vmul.f32 %v1706, %v1065
    %v1709 = vmul.f32 %v1706, %v1066
    %v1713 = vrot.slane %v1707, 5
    %v1714 = vrot.slane %v1708, 5
    %v1715 = vsel %vm746, %v1713, %v1714
    %v1716 = vrot.slane %v1709, 5
    %v1717 = vsel %vm746, %v1714, %v1716
    %1718 = vrot.lane.b32.xlu0 %v1715, 3
    %v1719 = vpop.permute.xlu0 %1718
    %1720 = vrot.lane.b32.xlu0 %v1717, 3
    %v1721 = vpop.permute.xlu0 %1720
    %v1724 = vadd.f32 %v1640, %v1719
    %v1725 = vadd.f32 %v1641, %v1721
    %s1726 = sld [smem:[#allocation4 + $0x55]]
    %v1727 = vstv %s1726
    %v1728 = vmul.f32 %v1727, %v1064
    %v1729 = vmul.f32 %v1727, %v1065
    %v1730 = vmul.f32 %v1727, %v1066
    %v1734 = vrot.slane %v1728, 5
    %v1735 = vrot.slane %v1729, 5
    %v1736 = vsel %vm746, %v1734, %v1735
    %v1737 = vrot.slane %v1730, 5
    %v1738 = vsel %vm746, %v1735, %v1737
    %1739 = vrot.lane.b32.xlu0 %v1736, 127
    %v1740 = vpop.permute.xlu0 %1739
    %1741 = vrot.lane.b32.xlu0 %v1738, 127
    %v1742 = vpop.permute.xlu0 %1741
    %v1745 = vadd.f32 %v1661, %v1740
    %v1746 = vadd.f32 %v1662, %v1742
    %s1747 = sld [smem:[#allocation4 + $0x56]]
    %v1748 = vstv %s1747
    %v1749 = vmul.f32 %v1748, %v1064
    %v1750 = vmul.f32 %v1748, %v1065
    %v1751 = vmul.f32 %v1748, %v1066
    %v1755 = vrot.slane %v1749, 5
    %v1756 = vrot.slane %v1750, 5
    %v1757 = vsel %vm746, %v1755, %v1756
    %v1758 = vrot.slane %v1751, 5
    %v1759 = vsel %vm746, %v1756, %v1758
    %1760 = vrot.lane.b32.xlu0 %v1757, 127
    %v1761 = vpop.permute.xlu0 %1760
    %1762 = vrot.lane.b32.xlu0 %v1759, 127
    %v1763 = vpop.permute.xlu0 %1762
    %v1766 = vadd.f32 %v1682, %v1761
    %v1767 = vadd.f32 %v1683, %v1763
    %s1768 = sld [smem:[#allocation4 + $0x57]]
    %v1769 = vstv %s1768
    %v1770 = vmul.f32 %v1769, %v1064
    %v1771 = vmul.f32 %v1769, %v1065
    %v1772 = vmul.f32 %v1769, %v1066
    %v1776 = vrot.slane %v1770, 5
    %v1777 = vrot.slane %v1771, 5
    %v1778 = vsel %vm746, %v1776, %v1777
    %v1779 = vrot.slane %v1772, 5
    %v1780 = vsel %vm746, %v1777, %v1779
    %1781 = vrot.lane.b32.xlu0 %v1778, 127
    %v1782 = vpop.permute.xlu0 %1781
    %1783 = vrot.lane.b32.xlu0 %v1780, 127
    %v1784 = vpop.permute.xlu0 %1783
    %v1787 = vadd.f32 %v1703, %v1782
    %v1788 = vadd.f32 %v1704, %v1784
    %s1789 = sld [smem:[#allocation4 + $0x58]]
    %v1790 = vstv %s1789
    %v1791 = vmul.f32 %v1790, %v1064
    %v1792 = vmul.f32 %v1790, %v1065
    %v1793 = vmul.f32 %v1790, %v1066
    %v1797 = vrot.slane %v1791, 5
    %v1798 = vrot.slane %v1792, 5
    %v1799 = vsel %vm746, %v1797, %v1798
    %v1800 = vrot.slane %v1793, 5
    %v1801 = vsel %vm746, %v1798, %v1800
    %1802 = vrot.lane.b32.xlu0 %v1799, 127
    %v1803 = vpop.permute.xlu0 %1802
    %1804 = vrot.lane.b32.xlu0 %v1801, 127
    %v1805 = vpop.permute.xlu0 %1804
    %v1808 = vadd.f32 %v1724, %v1803
    %v1809 = vadd.f32 %v1725, %v1805
    %s1810 = sld [smem:[#allocation4 + $0x59]]
    %v1811 = vstv %s1810
    %v1812 = vmul.f32 %v1811, %v1064
    %v1813 = vmul.f32 %v1811, %v1065
    %v1814 = vmul.f32 %v1811, %v1066
    %v1818 = vrot.slane %v1812, 5
    %v1819 = vrot.slane %v1813, 5
    %v1820 = vsel %vm746, %v1818, %v1819
    %v1821 = vrot.slane %v1814, 5
    %v1822 = vsel %vm746, %v1819, %v1821
    %1823 = vrot.lane.b32.xlu0 %v1820, 123
    %v1824 = vpop.permute.xlu0 %1823
    %1825 = vrot.lane.b32.xlu0 %v1822, 123
    %v1826 = vpop.permute.xlu0 %1825
    %v1829 = vadd.f32 %v1745, %v1824
    %v1830 = vadd.f32 %v1746, %v1826
    %s1831 = sld [smem:[#allocation4 + $0x5a]]
    %v1832 = vstv %s1831
    %v1833 = vmul.f32 %v1832, %v1064
    %v1834 = vmul.f32 %v1832, %v1065
    %v1835 = vmul.f32 %v1832, %v1066
    %v1839 = vrot.slane %v1833, 5
    %v1840 = vrot.slane %v1834, 5
    %v1841 = vsel %vm746, %v1839, %v1840
    %v1842 = vrot.slane %v1835, 5
    %v1843 = vsel %vm746, %v1840, %v1842
    %1844 = vrot.lane.b32.xlu0 %v1841, 123
    %v1845 = vpop.permute.xlu0 %1844
    %1846 = vrot.lane.b32.xlu0 %v1843, 123
    %v1847 = vpop.permute.xlu0 %1846
    %v1850 = vadd.f32 %v1766, %v1845
    %v1851 = vadd.f32 %v1767, %v1847
    %s1852 = sld [smem:[#allocation4 + $0x5b]]
    %v1853 = vstv %s1852
    %v1854 = vmul.f32 %v1853, %v1064
    %v1855 = vmul.f32 %v1853, %v1065
    %v1856 = vmul.f32 %v1853, %v1066
    %v1860 = vrot.slane %v1854, 6
    %v1861 = vrot.slane %v1855, 6
    %v1862 = vsel %vm894, %v1860, %v1861
    %v1863 = vrot.slane %v1856, 6
    %v1864 = vsel %vm894, %v1861, %v1863
    %1865 = vrot.lane.b32.xlu0 %v1862, 2
    %v1866 = vpop.permute.xlu0 %1865
    %1867 = vrot.lane.b32.xlu0 %v1864, 2
    %v1868 = vpop.permute.xlu0 %1867
    %v1871 = vadd.f32 %v1787, %v1866
    %v1872 = vadd.f32 %v1788, %v1868
    %s1873 = sld [smem:[#allocation4 + $0x5c]]
    %v1874 = vstv %s1873
    %v1875 = vmul.f32 %v1874, %v1064
    %v1876 = vmul.f32 %v1874, %v1065
    %v1877 = vmul.f32 %v1874, %v1066
    %v1881 = vrot.slane %v1875, 6
    %v1882 = vrot.slane %v1876, 6
    %v1883 = vsel %vm894, %v1881, %v1882
    %v1884 = vrot.slane %v1877, 6
    %v1885 = vsel %vm894, %v1882, %v1884
    %1886 = vrot.lane.b32.xlu0 %v1883, 2
    %v1887 = vpop.permute.xlu0 %1886
    %1888 = vrot.lane.b32.xlu0 %v1885, 2
    %v1889 = vpop.permute.xlu0 %1888
    %v1892 = vadd.f32 %v1808, %v1887
    %v1893 = vadd.f32 %v1809, %v1889
    %s1894 = sld [smem:[#allocation4 + $0x5d]]
    %v1895 = vstv %s1894
    %v1896 = vmul.f32 %v1895, %v1064
    %v1897 = vmul.f32 %v1895, %v1065
    %v1898 = vmul.f32 %v1895, %v1066
    %v1902 = vrot.slane %v1896, 6
    %v1903 = vrot.slane %v1897, 6
    %v1904 = vsel %vm894, %v1902, %v1903
    %v1905 = vrot.slane %v1898, 6
    %v1906 = vsel %vm894, %v1903, %v1905
    %1907 = vrot.lane.b32.xlu0 %v1904, 126
    %v1908 = vpop.permute.xlu0 %1907
    %1909 = vrot.lane.b32.xlu0 %v1906, 126
    %v1910 = vpop.permute.xlu0 %1909
    %v1913 = vadd.f32 %v1829, %v1908
    %v1914 = vadd.f32 %v1830, %v1910
    %s1915 = sld [smem:[#allocation4 + $0x5e]]
    %v1916 = vstv %s1915
    %v1917 = vmul.f32 %v1916, %v1064
    %v1918 = vmul.f32 %v1916, %v1065
    %v1919 = vmul.f32 %v1916, %v1066
    %v1923 = vrot.slane %v1917, 6
    %v1924 = vrot.slane %v1918, 6
    %v1925 = vsel %vm894, %v1923, %v1924
    %v1926 = vrot.slane %v1919, 6
    %v1927 = vsel %vm894, %v1924, %v1926
    %1928 = vrot.lane.b32.xlu0 %v1925, 126
    %v1929 = vpop.permute.xlu0 %1928
    %1930 = vrot.lane.b32.xlu0 %v1927, 126
    %v1931 = vpop.permute.xlu0 %1930
    %v1934 = vadd.f32 %v1850, %v1929
    %v1935 = vadd.f32 %v1851, %v1931
    %s1936 = sld [smem:[#allocation4 + $0x5f]]
    %v1937 = vstv %s1936
    %v1938 = vmul.f32 %v1937, %v1064
    %v1939 = vmul.f32 %v1937, %v1065
    %v1940 = vmul.f32 %v1937, %v1066
    %v1944 = vrot.slane %v1938, 6
    %v1945 = vrot.slane %v1939, 6
    %v1946 = vsel %vm894, %v1944, %v1945
    %v1947 = vrot.slane %v1940, 6
    %v1948 = vsel %vm894, %v1945, %v1947
    %1949 = vrot.lane.b32.xlu0 %v1946, 126
    %v1950 = vpop.permute.xlu0 %1949
    %1951 = vrot.lane.b32.xlu0 %v1948, 126
    %v1952 = vpop.permute.xlu0 %1951
    %v1955 = vadd.f32 %v1871, %v1950
    %v1956 = vadd.f32 %v1872, %v1952
    %s1957 = sld [smem:[#allocation4 + $0x60]]
    %v1958 = vstv %s1957
    %v1959 = vmul.f32 %v1958, %v1064
    %v1960 = vmul.f32 %v1958, %v1065
    %v1961 = vmul.f32 %v1958, %v1066
    %v1965 = vrot.slane %v1959, 6
    %v1966 = vrot.slane %v1960, 6
    %v1967 = vsel %vm894, %v1965, %v1966
    %v1968 = vrot.slane %v1961, 6
    %v1969 = vsel %vm894, %v1966, %v1968
    %1970 = vrot.lane.b32.xlu0 %v1967, 126
    %v1971 = vpop.permute.xlu0 %1970
    %1972 = vrot.lane.b32.xlu0 %v1969, 126
    %v1973 = vpop.permute.xlu0 %1972
    %v1976 = vadd.f32 %v1892, %v1971
    %v1977 = vadd.f32 %v1893, %v1973
    %s1978 = sld [smem:[#allocation4 + $0x61]]
    %v1979 = vstv %s1978
    %v1980 = vmul.f32 %v1979, %v1064
    %v1981 = vmul.f32 %v1979, %v1065
    %v1982 = vmul.f32 %v1979, %v1066
    %v1986 = vrot.slane %v1980, 6
    %v1987 = vrot.slane %v1981, 6
    %v1988 = vsel %vm894, %v1986, %v1987
    %v1989 = vrot.slane %v1982, 6
    %v1990 = vsel %vm894, %v1987, %v1989
    %1991 = vrot.lane.b32.xlu0 %v1988, 122
    %v1992 = vpop.permute.xlu0 %1991
    %1993 = vrot.lane.b32.xlu0 %v1990, 122
    %v1994 = vpop.permute.xlu0 %1993
    %v1997 = vadd.f32 %v1913, %v1992
    %v1998 = vadd.f32 %v1914, %v1994
    %2001 = vrot.lane.b32.xlu0 %v1934, 127
    %v2002 = vpop.permute.xlu0 %2001
    %2003 = vrot.lane.b32.xlu0 %v1935, 127
    %v2004 = vpop.permute.xlu0 %2003
    %v2007 = vadd.f32 %v1997, %v2002
    %v2008 = vadd.f32 %v1998, %v2004
    %2011 = vrot.lane.b32.xlu0 %v1976, 127
    %v2012 = vpop.permute.xlu0 %2011
    %2013 = vrot.lane.b32.xlu0 %v1977, 127
    %v2014 = vpop.permute.xlu0 %2013
    %v2017 = vadd.f32 %v1955, %v2012
    %v2018 = vadd.f32 %v1956, %v2014
    %2021 = vrot.lane.b32.xlu0 %v2017, 126
    %v2022 = vpop.permute.xlu0 %2021
    %2023 = vrot.lane.b32.xlu0 %v2018, 126
    %v2024 = vpop.permute.xlu0 %2023
    %v2027 = vadd.f32 %v2007, %v2022
    %v2028 = vadd.f32 %v2008, %v2024
    %v2029 = vadd.f32 %v1062, %v2027
    %v2030 = vadd.f32 %v1063, %v2028
    %vm2031 = vcmask 130048
    %2032 = vst.msk [vmem:[#allocation9] sm:$0xff] %vm2031, %v2029
    %2033 = vst.msk [vmem:[#allocation9 + $0x8] sm:$0xff] %vm2031, %v2030
    %s2034 = scalar_lea.vmem [#allocation8], 64
    %v2035 = vld [vmem:[%s2034] sm:$0xff]
    %v2036 = vld [vmem:[%s2034 + $0x8] sm:$0xff]
    %s2037 = scalar_lea.vmem [#allocation8], 80
    %v2038 = vld [vmem:[%s2037] sm:$0xff]
    %v2039 = vld [vmem:[%s2037 + $0x8] sm:$0xff]
    %s2040 = scalar_lea.vmem [#allocation8], 96
    %v2041 = vld [vmem:[%s2040] sm:$0xff]
    %v2042 = vld [vmem:[%s2040 + $0x8] sm:$0xff]
    %s2043 = scalar_lea.vmem [#allocation8], 112
    %v2044 = vld [vmem:[%s2043] sm:$0xff]
    %v2045 = vld [vmem:[%s2043 + $0x8] sm:$0xff]
    %v2046 = vadd.f32 %v2035, %v2038
    %v2047 = vadd.f32 %v2036, %v2039
    %v2048 = vadd.f32 %v2041, %v2044
    %v2049 = vadd.f32 %v2042, %v2045
    %v2050 = vadd.f32 %v2046, %v2048
    %v2051 = vadd.f32 %v2047, %v2049
    %v2052 = vmax.f32 %v2035, %v2038
    %v2053 = vmax.f32 %v2036, %v2039
    %v2054 = vmax.f32 %v2041, %v2044
    %v2055 = vmax.f32 %v2042, %v2045
    %v2056 = vmax.f32 %v2052, %v2054
    %v2057 = vmax.f32 %v2053, %v2055
    %2060 = vrot.lane.b32.xlu0 %v2050, 3
    %v2061 = vpop.permute.xlu0 %2060
    %2062 = vrot.lane.b32.xlu0 %v2051, 3
    %v2063 = vpop.permute.xlu0 %2062
    %2066 = vst.msk [vmem:[#allocation2 + $0x3] sm:$0xff] %vm80, %v2061
    %2067 = vst.msk [vmem:[#allocation2 + $0xb] sm:$0xff] %vm80, %v2063
    %2070 = vrot.lane.b32.xlu0 %v2056, 3
    %v2071 = vpop.permute.xlu0 %2070
    %2072 = vrot.lane.b32.xlu0 %v2057, 3
    %v2073 = vpop.permute.xlu0 %2072
    %2076 = vst.msk [vmem:[#allocation3 + $0x3] sm:$0xff] %vm80, %v2071
    %2077 = vst.msk [vmem:[#allocation3 + $0xb] sm:$0xff] %vm80, %v2073
    %v2078 = vld [vmem:[#allocation2] sm:$0xff]
    %v2079 = vld [vmem:[#allocation2 + $0x8] sm:$0xff]
    %v2080 = vld [vmem:[#allocation2 + $0x10] sm:$0x3f]
    %s2081 = sld [smem:[#allocation4]]
    %v2082 = vstv %s2081
    %v2083 = vmul.f32 %v2082, %v2078
    %v2084 = vmul.f32 %v2082, %v2079
    %v2085 = vadd.f32 %v2083, 0.0
    %v2086 = vadd.f32 %v2084, 0.0
    %s2087 = sld [smem:[#allocation4 + $0x1]]
    %v2088 = vstv %s2087
    %v2089 = vmul.f32 %v2088, %v2078
    %v2090 = vmul.f32 %v2088, %v2079
    %v2091 = vadd.f32 %v2089, 0.0
    %v2092 = vadd.f32 %v2090, 0.0
    %s2093 = sld [smem:[#allocation4 + $0x2]]
    %v2094 = vstv %s2093
    %v2095 = vmul.f32 %v2094, %v2078
    %v2096 = vmul.f32 %v2094, %v2079
    %v2097 = vadd.f32 %v2095, 0.0
    %v2098 = vadd.f32 %v2096, 0.0
    %s2099 = sld [smem:[#allocation4 + $0x3]]
    %v2100 = vstv %s2099
    %v2101 = vmul.f32 %v2100, %v2078
    %v2102 = vmul.f32 %v2100, %v2079
    %v2103 = vadd.f32 %v2101, 0.0
    %v2104 = vadd.f32 %v2102, 0.0
    %s2105 = sld [smem:[#allocation4 + $0x4]]
    %v2106 = vstv %s2105
    %v2107 = vmul.f32 %v2106, %v2078
    %v2108 = vmul.f32 %v2106, %v2079
    %2111 = vrot.lane.b32.xlu0 %v2107, 124
    %v2112 = vpop.permute.xlu0 %2111
    %2113 = vrot.lane.b32.xlu0 %v2108, 124
    %v2114 = vpop.permute.xlu0 %2113
    %v2117 = vadd.f32 %v2085, %v2112
    %v2118 = vadd.f32 %v2086, %v2114
    %s2119 = sld [smem:[#allocation4 + $0x5]]
    %v2120 = vstv %s2119
    %v2121 = vmul.f32 %v2120, %v2078
    %v2122 = vmul.f32 %v2120, %v2079
    %2125 = vrot.lane.b32.xlu0 %v2121, 124
    %v2126 = vpop.permute.xlu0 %2125
    %2127 = vrot.lane.b32.xlu0 %v2122, 124
    %v2128 = vpop.permute.xlu0 %2127
    %v2131 = vadd.f32 %v2091, %v2126
    %v2132 = vadd.f32 %v2092, %v2128
    %s2133 = sld [smem:[#allocation4 + $0x6]]
    %v2134 = vstv %s2133
    %v2135 = vmul.f32 %v2134, %v2078
    %v2136 = vmul.f32 %v2134, %v2079
    %2139 = vrot.lane.b32.xlu0 %v2135, 124
    %v2140 = vpop.permute.xlu0 %2139
    %2141 = vrot.lane.b32.xlu0 %v2136, 124
    %v2142 = vpop.permute.xlu0 %2141
    %v2145 = vadd.f32 %v2097, %v2140
    %v2146 = vadd.f32 %v2098, %v2142
    %s2147 = sld [smem:[#allocation4 + $0x7]]
    %v2148 = vstv %s2147
    %v2149 = vmul.f32 %v2148, %v2078
    %v2150 = vmul.f32 %v2148, %v2079
    %v2151 = vmul.f32 %v2148, %v2080
    %v2155 = vrot.slane %v2149, 1
    %v2156 = vrot.slane %v2150, 1
    %v2157 = vsel %vm170, %v2155, %v2156
    %v2158 = vrot.slane %v2151, 1
    %v2159 = vsel %vm170, %v2156, %v2158
    %2160 = vrot.lane.b32.xlu0 %v2157, 3
    %v2161 = vpop.permute.xlu0 %2160
    %2162 = vrot.lane.b32.xlu0 %v2159, 3
    %v2163 = vpop.permute.xlu0 %2162
    %v2166 = vadd.f32 %v2103, %v2161
    %v2167 = vadd.f32 %v2104, %v2163
    %s2168 = sld [smem:[#allocation4 + $0x8]]
    %v2169 = vstv %s2168
    %v2170 = vmul.f32 %v2169, %v2078
    %v2171 = vmul.f32 %v2169, %v2079
    %v2172 = vmul.f32 %v2169, %v2080
    %v2176 = vrot.slane %v2170, 1
    %v2177 = vrot.slane %v2171, 1
    %v2178 = vsel %vm170, %v2176, %v2177
    %v2179 = vrot.slane %v2172, 1
    %v2180 = vsel %vm170, %v2177, %v2179
    %2181 = vrot.lane.b32.xlu0 %v2178, 127
    %v2182 = vpop.permute.xlu0 %2181
    %2183 = vrot.lane.b32.xlu0 %v2180, 127
    %v2184 = vpop.permute.xlu0 %2183
    %v2187 = vadd.f32 %v2117, %v2182
    %v2188 = vadd.f32 %v2118, %v2184
    %s2189 = sld [smem:[#allocation4 + $0x9]]
    %v2190 = vstv %s2189
    %v2191 = vmul.f32 %v2190, %v2078
    %v2192 = vmul.f32 %v2190, %v2079
    %v2193 = vmul.f32 %v2190, %v2080
    %v2197 = vrot.slane %v2191, 1
    %v2198 = vrot.slane %v2192, 1
    %v2199 = vsel %vm170, %v2197, %v2198
    %v2200 = vrot.slane %v2193, 1
    %v2201 = vsel %vm170, %v2198, %v2200
    %2202 = vrot.lane.b32.xlu0 %v2199, 127
    %v2203 = vpop.permute.xlu0 %2202
    %2204 = vrot.lane.b32.xlu0 %v2201, 127
    %v2205 = vpop.permute.xlu0 %2204
    %v2208 = vadd.f32 %v2131, %v2203
    %v2209 = vadd.f32 %v2132, %v2205
    %s2210 = sld [smem:[#allocation4 + $0xa]]
    %v2211 = vstv %s2210
    %v2212 = vmul.f32 %v2211, %v2078
    %v2213 = vmul.f32 %v2211, %v2079
    %v2214 = vmul.f32 %v2211, %v2080
    %v2218 = vrot.slane %v2212, 1
    %v2219 = vrot.slane %v2213, 1
    %v2220 = vsel %vm170, %v2218, %v2219
    %v2221 = vrot.slane %v2214, 1
    %v2222 = vsel %vm170, %v2219, %v2221
    %2223 = vrot.lane.b32.xlu0 %v2220, 127
    %v2224 = vpop.permute.xlu0 %2223
    %2225 = vrot.lane.b32.xlu0 %v2222, 127
    %v2226 = vpop.permute.xlu0 %2225
    %v2229 = vadd.f32 %v2145, %v2224
    %v2230 = vadd.f32 %v2146, %v2226
    %s2231 = sld [smem:[#allocation4 + $0xb]]
    %v2232 = vstv %s2231
    %v2233 = vmul.f32 %v2232, %v2078
    %v2234 = vmul.f32 %v2232, %v2079
    %v2235 = vmul.f32 %v2232, %v2080
    %v2239 = vrot.slane %v2233, 1
    %v2240 = vrot.slane %v2234, 1
    %v2241 = vsel %vm170, %v2239, %v2240
    %v2242 = vrot.slane %v2235, 1
    %v2243 = vsel %vm170, %v2240, %v2242
    %2244 = vrot.lane.b32.xlu0 %v2241, 127
    %v2245 = vpop.permute.xlu0 %2244
    %2246 = vrot.lane.b32.xlu0 %v2243, 127
    %v2247 = vpop.permute.xlu0 %2246
    %v2250 = vadd.f32 %v2166, %v2245
    %v2251 = vadd.f32 %v2167, %v2247
    %s2252 = sld [smem:[#allocation4 + $0xc]]
    %v2253 = vstv %s2252
    %v2254 = vmul.f32 %v2253, %v2078
    %v2255 = vmul.f32 %v2253, %v2079
    %v2256 = vmul.f32 %v2253, %v2080
    %v2260 = vrot.slane %v2254, 1
    %v2261 = vrot.slane %v2255, 1
    %v2262 = vsel %vm170, %v2260, %v2261
    %v2263 = vrot.slane %v2256, 1
    %v2264 = vsel %vm170, %v2261, %v2263
    %2265 = vrot.lane.b32.xlu0 %v2262, 123
    %v2266 = vpop.permute.xlu0 %2265
    %2267 = vrot.lane.b32.xlu0 %v2264, 123
    %v2268 = vpop.permute.xlu0 %2267
    %v2271 = vadd.f32 %v2187, %v2266
    %v2272 = vadd.f32 %v2188, %v2268
    %s2273 = sld [smem:[#allocation4 + $0xd]]
    %v2274 = vstv %s2273
    %v2275 = vmul.f32 %v2274, %v2078
    %v2276 = vmul.f32 %v2274, %v2079
    %v2277 = vmul.f32 %v2274, %v2080
    %v2281 = vrot.slane %v2275, 1
    %v2282 = vrot.slane %v2276, 1
    %v2283 = vsel %vm170, %v2281, %v2282
    %v2284 = vrot.slane %v2277, 1
    %v2285 = vsel %vm170, %v2282, %v2284
    %2286 = vrot.lane.b32.xlu0 %v2283, 123
    %v2287 = vpop.permute.xlu0 %2286
    %2288 = vrot.lane.b32.xlu0 %v2285, 123
    %v2289 = vpop.permute.xlu0 %2288
    %v2292 = vadd.f32 %v2208, %v2287
    %v2293 = vadd.f32 %v2209, %v2289
    %s2294 = sld [smem:[#allocation4 + $0xe]]
    %v2295 = vstv %s2294
    %v2296 = vmul.f32 %v2295, %v2078
    %v2297 = vmul.f32 %v2295, %v2079
    %v2298 = vmul.f32 %v2295, %v2080
    %v2302 = vrot.slane %v2296, 2
    %v2303 = vrot.slane %v2297, 2
    %v2304 = vsel %vm318, %v2302, %v2303
    %v2305 = vrot.slane %v2298, 2
    %v2306 = vsel %vm318, %v2303, %v2305
    %2307 = vrot.lane.b32.xlu0 %v2304, 2
    %v2308 = vpop.permute.xlu0 %2307
    %2309 = vrot.lane.b32.xlu0 %v2306, 2
    %v2310 = vpop.permute.xlu0 %2309
    %v2313 = vadd.f32 %v2229, %v2308
    %v2314 = vadd.f32 %v2230, %v2310
    %s2315 = sld [smem:[#allocation4 + $0xf]]
    %v2316 = vstv %s2315
    %v2317 = vmul.f32 %v2316, %v2078
    %v2318 = vmul.f32 %v2316, %v2079
    %v2319 = vmul.f32 %v2316, %v2080
    %v2323 = vrot.slane %v2317, 2
    %v2324 = vrot.slane %v2318, 2
    %v2325 = vsel %vm318, %v2323, %v2324
    %v2326 = vrot.slane %v2319, 2
    %v2327 = vsel %vm318, %v2324, %v2326
    %2328 = vrot.lane.b32.xlu0 %v2325, 2
    %v2329 = vpop.permute.xlu0 %2328
    %2330 = vrot.lane.b32.xlu0 %v2327, 2
    %v2331 = vpop.permute.xlu0 %2330
    %v2334 = vadd.f32 %v2250, %v2329
    %v2335 = vadd.f32 %v2251, %v2331
    %s2336 = sld [smem:[#allocation4 + $0x10]]
    %v2337 = vstv %s2336
    %v2338 = vmul.f32 %v2337, %v2078
    %v2339 = vmul.f32 %v2337, %v2079
    %v2340 = vmul.f32 %v2337, %v2080
    %v2344 = vrot.slane %v2338, 2
    %v2345 = vrot.slane %v2339, 2
    %v2346 = vsel %vm318, %v2344, %v2345
    %v2347 = vrot.slane %v2340, 2
    %v2348 = vsel %vm318, %v2345, %v2347
    %2349 = vrot.lane.b32.xlu0 %v2346, 126
    %v2350 = vpop.permute.xlu0 %2349
    %2351 = vrot.lane.b32.xlu0 %v2348, 126
    %v2352 = vpop.permute.xlu0 %2351
    %v2355 = vadd.f32 %v2271, %v2350
    %v2356 = vadd.f32 %v2272, %v2352
    %s2357 = sld [smem:[#allocation4 + $0x11]]
    %v2358 = vstv %s2357
    %v2359 = vmul.f32 %v2358, %v2078
    %v2360 = vmul.f32 %v2358, %v2079
    %v2361 = vmul.f32 %v2358, %v2080
    %v2365 = vrot.slane %v2359, 2
    %v2366 = vrot.slane %v2360, 2
    %v2367 = vsel %vm318, %v2365, %v2366
    %v2368 = vrot.slane %v2361, 2
    %v2369 = vsel %vm318, %v2366, %v2368
    %2370 = vrot.lane.b32.xlu0 %v2367, 126
    %v2371 = vpop.permute.xlu0 %2370
    %2372 = vrot.lane.b32.xlu0 %v2369, 126
    %v2373 = vpop.permute.xlu0 %2372
    %v2376 = vadd.f32 %v2292, %v2371
    %v2377 = vadd.f32 %v2293, %v2373
    %s2378 = sld [smem:[#allocation4 + $0x12]]
    %v2379 = vstv %s2378
    %v2380 = vmul.f32 %v2379, %v2078
    %v2381 = vmul.f32 %v2379, %v2079
    %v2382 = vmul.f32 %v2379, %v2080
    %v2386 = vrot.slane %v2380, 2
    %v2387 = vrot.slane %v2381, 2
    %v2388 = vsel %vm318, %v2386, %v2387
    %v2389 = vrot.slane %v2382, 2
    %v2390 = vsel %vm318, %v2387, %v2389
    %2391 = vrot.lane.b32.xlu0 %v2388, 126
    %v2392 = vpop.permute.xlu0 %2391
    %2393 = vrot.lane.b32.xlu0 %v2390, 126
    %v2394 = vpop.permute.xlu0 %2393
    %v2397 = vadd.f32 %v2313, %v2392
    %v2398 = vadd.f32 %v2314, %v2394
    %s2399 = sld [smem:[#allocation4 + $0x13]]
    %v2400 = vstv %s2399
    %v2401 = vmul.f32 %v2400, %v2078
    %v2402 = vmul.f32 %v2400, %v2079
    %v2403 = vmul.f32 %v2400, %v2080
    %v2407 = vrot.slane %v2401, 2
    %v2408 = vrot.slane %v2402, 2
    %v2409 = vsel %vm318, %v2407, %v2408
    %v2410 = vrot.slane %v2403, 2
    %v2411 = vsel %vm318, %v2408, %v2410
    %2412 = vrot.lane.b32.xlu0 %v2409, 126
    %v2413 = vpop.permute.xlu0 %2412
    %2414 = vrot.lane.b32.xlu0 %v2411, 126
    %v2415 = vpop.permute.xlu0 %2414
    %v2418 = vadd.f32 %v2334, %v2413
    %v2419 = vadd.f32 %v2335, %v2415
    %s2420 = sld [smem:[#allocation4 + $0x14]]
    %v2421 = vstv %s2420
    %v2422 = vmul.f32 %v2421, %v2078
    %v2423 = vmul.f32 %v2421, %v2079
    %v2424 = vmul.f32 %v2421, %v2080
    %v2428 = vrot.slane %v2422, 2
    %v2429 = vrot.slane %v2423, 2
    %v2430 = vsel %vm318, %v2428, %v2429
    %v2431 = vrot.slane %v2424, 2
    %v2432 = vsel %vm318, %v2429, %v2431
    %2433 = vrot.lane.b32.xlu0 %v2430, 122
    %v2434 = vpop.permute.xlu0 %2433
    %2435 = vrot.lane.b32.xlu0 %v2432, 122
    %v2436 = vpop.permute.xlu0 %2435
    %v2439 = vadd.f32 %v2355, %v2434
    %v2440 = vadd.f32 %v2356, %v2436
    %s2441 = sld [smem:[#allocation4 + $0x15]]
    %v2442 = vstv %s2441
    %v2443 = vmul.f32 %v2442, %v2078
    %v2444 = vmul.f32 %v2442, %v2079
    %v2445 = vmul.f32 %v2442, %v2080
    %v2449 = vrot.slane %v2443, 3
    %v2450 = vrot.slane %v2444, 3
    %v2451 = vsel %vm466, %v2449, %v2450
    %v2452 = vrot.slane %v2445, 3
    %v2453 = vsel %vm466, %v2450, %v2452
    %2454 = vrot.lane.b32.xlu0 %v2451, 1
    %v2455 = vpop.permute.xlu0 %2454
    %2456 = vrot.lane.b32.xlu0 %v2453, 1
    %v2457 = vpop.permute.xlu0 %2456
    %v2460 = vadd.f32 %v2376, %v2455
    %v2461 = vadd.f32 %v2377, %v2457
    %s2462 = sld [smem:[#allocation4 + $0x16]]
    %v2463 = vstv %s2462
    %v2464 = vmul.f32 %v2463, %v2078
    %v2465 = vmul.f32 %v2463, %v2079
    %v2466 = vmul.f32 %v2463, %v2080
    %v2470 = vrot.slane %v2464, 3
    %v2471 = vrot.slane %v2465, 3
    %v2472 = vsel %vm466, %v2470, %v2471
    %v2473 = vrot.slane %v2466, 3
    %v2474 = vsel %vm466, %v2471, %v2473
    %2475 = vrot.lane.b32.xlu0 %v2472, 1
    %v2476 = vpop.permute.xlu0 %2475
    %2477 = vrot.lane.b32.xlu0 %v2474, 1
    %v2478 = vpop.permute.xlu0 %2477
    %v2481 = vadd.f32 %v2397, %v2476
    %v2482 = vadd.f32 %v2398, %v2478
    %s2483 = sld [smem:[#allocation4 + $0x17]]
    %v2484 = vstv %s2483
    %v2485 = vmul.f32 %v2484, %v2078
    %v2486 = vmul.f32 %v2484, %v2079
    %v2487 = vmul.f32 %v2484, %v2080
    %v2491 = vrot.slane %v2485, 3
    %v2492 = vrot.slane %v2486, 3
    %v2493 = vsel %vm466, %v2491, %v2492
    %v2494 = vrot.slane %v2487, 3
    %v2495 = vsel %vm466, %v2492, %v2494
    %2496 = vrot.lane.b32.xlu0 %v2493, 1
    %v2497 = vpop.permute.xlu0 %2496
    %2498 = vrot.lane.b32.xlu0 %v2495, 1
    %v2499 = vpop.permute.xlu0 %2498
    %v2502 = vadd.f32 %v2418, %v2497
    %v2503 = vadd.f32 %v2419, %v2499
    %s2504 = sld [smem:[#allocation4 + $0x18]]
    %v2505 = vstv %s2504
    %v2506 = vmul.f32 %v2505, %v2078
    %v2507 = vmul.f32 %v2505, %v2079
    %v2508 = vmul.f32 %v2505, %v2080
    %v2512 = vrot.slane %v2506, 3
    %v2513 = vrot.slane %v2507, 3
    %v2514 = vsel %vm466, %v2512, %v2513
    %v2515 = vrot.slane %v2508, 3
    %v2516 = vsel %vm466, %v2513, %v2515
    %2517 = vrot.lane.b32.xlu0 %v2514, 125
    %v2518 = vpop.permute.xlu0 %2517
    %2519 = vrot.lane.b32.xlu0 %v2516, 125
    %v2520 = vpop.permute.xlu0 %2519
    %v2523 = vadd.f32 %v2439, %v2518
    %v2524 = vadd.f32 %v2440, %v2520
    %s2525 = sld [smem:[#allocation4 + $0x19]]
    %v2526 = vstv %s2525
    %v2527 = vmul.f32 %v2526, %v2078
    %v2528 = vmul.f32 %v2526, %v2079
    %v2529 = vmul.f32 %v2526, %v2080
    %v2533 = vrot.slane %v2527, 3
    %v2534 = vrot.slane %v2528, 3
    %v2535 = vsel %vm466, %v2533, %v2534
    %v2536 = vrot.slane %v2529, 3
    %v2537 = vsel %vm466, %v2534, %v2536
    %2538 = vrot.lane.b32.xlu0 %v2535, 125
    %v2539 = vpop.permute.xlu0 %2538
    %2540 = vrot.lane.b32.xlu0 %v2537, 125
    %v2541 = vpop.permute.xlu0 %2540
    %v2544 = vadd.f32 %v2460, %v2539
    %v2545 = vadd.f32 %v2461, %v2541
    %s2546 = sld [smem:[#allocation4 + $0x1a]]
    %v2547 = vstv %s2546
    %v2548 = vmul.f32 %v2547, %v2078
    %v2549 = vmul.f32 %v2547, %v2079
    %v2550 = vmul.f32 %v2547, %v2080
    %v2554 = vrot.slane %v2548, 3
    %v2555 = vrot.slane %v2549, 3
    %v2556 = vsel %vm466, %v2554, %v2555
    %v2557 = vrot.slane %v2550, 3
    %v2558 = vsel %vm466, %v2555, %v2557
    %2559 = vrot.lane.b32.xlu0 %v2556, 125
    %v2560 = vpop.permute.xlu0 %2559
    %2561 = vrot.lane.b32.xlu0 %v2558, 125
    %v2562 = vpop.permute.xlu0 %2561
    %v2565 = vadd.f32 %v2481, %v2560
    %v2566 = vadd.f32 %v2482, %v2562
    %s2567 = sld [smem:[#allocation4 + $0x1b]]
    %v2568 = vstv %s2567
    %v2569 = vmul.f32 %v2568, %v2078
    %v2570 = vmul.f32 %v2568, %v2079
    %v2571 = vmul.f32 %v2568, %v2080
    %v2575 = vrot.slane %v2569, 3
    %v2576 = vrot.slane %v2570, 3
    %v2577 = vsel %vm466, %v2575, %v2576
    %v2578 = vrot.slane %v2571, 3
    %v2579 = vsel %vm466, %v2576, %v2578
    %2580 = vrot.lane.b32.xlu0 %v2577, 125
    %v2581 = vpop.permute.xlu0 %2580
    %2582 = vrot.lane.b32.xlu0 %v2579, 125
    %v2583 = vpop.permute.xlu0 %2582
    %v2586 = vadd.f32 %v2502, %v2581
    %v2587 = vadd.f32 %v2503, %v2583
    %s2588 = sld [smem:[#allocation4 + $0x1c]]
    %v2589 = vstv %s2588
    %v2590 = vmul.f32 %v2589, %v2078
    %v2591 = vmul.f32 %v2589, %v2079
    %v2592 = vmul.f32 %v2589, %v2080
    %v2596 = vrot.slane %v2590, 4
    %v2597 = vrot.slane %v2591, 4
    %v2598 = vsel %vm614, %v2596, %v2597
    %v2599 = vrot.slane %v2592, 4
    %v2600 = vsel %vm614, %v2597, %v2599
    %v2603 = vadd.f32 %v2523, %v2598
    %v2604 = vadd.f32 %v2524, %v2600
    %s2605 = sld [smem:[#allocation4 + $0x1d]]
    %v2606 = vstv %s2605
    %v2607 = vmul.f32 %v2606, %v2078
    %v2608 = vmul.f32 %v2606, %v2079
    %v2609 = vmul.f32 %v2606, %v2080
    %v2613 = vrot.slane %v2607, 4
    %v2614 = vrot.slane %v2608, 4
    %v2615 = vsel %vm614, %v2613, %v2614
    %v2616 = vrot.slane %v2609, 4
    %v2617 = vsel %vm614, %v2614, %v2616
    %v2620 = vadd.f32 %v2544, %v2615
    %v2621 = vadd.f32 %v2545, %v2617
    %s2622 = sld [smem:[#allocation4 + $0x1e]]
    %v2623 = vstv %s2622
    %v2624 = vmul.f32 %v2623, %v2078
    %v2625 = vmul.f32 %v2623, %v2079
    %v2626 = vmul.f32 %v2623, %v2080
    %v2630 = vrot.slane %v2624, 4
    %v2631 = vrot.slane %v2625, 4
    %v2632 = vsel %vm614, %v2630, %v2631
    %v2633 = vrot.slane %v2626, 4
    %v2634 = vsel %vm614, %v2631, %v2633
    %v2637 = vadd.f32 %v2565, %v2632
    %v2638 = vadd.f32 %v2566, %v2634
    %s2639 = sld [smem:[#allocation4 + $0x1f]]
    %v2640 = vstv %s2639
    %v2641 = vmul.f32 %v2640, %v2078
    %v2642 = vmul.f32 %v2640, %v2079
    %v2643 = vmul.f32 %v2640, %v2080
    %v2647 = vrot.slane %v2641, 4
    %v2648 = vrot.slane %v2642, 4
    %v2649 = vsel %vm614, %v2647, %v2648
    %v2650 = vrot.slane %v2643, 4
    %v2651 = vsel %vm614, %v2648, %v2650
    %v2654 = vadd.f32 %v2586, %v2649
    %v2655 = vadd.f32 %v2587, %v2651
    %s2656 = sld [smem:[#allocation4 + $0x20]]
    %v2657 = vstv %s2656
    %v2658 = vmul.f32 %v2657, %v2078
    %v2659 = vmul.f32 %v2657, %v2079
    %v2660 = vmul.f32 %v2657, %v2080
    %v2664 = vrot.slane %v2658, 4
    %v2665 = vrot.slane %v2659, 4
    %v2666 = vsel %vm614, %v2664, %v2665
    %v2667 = vrot.slane %v2660, 4
    %v2668 = vsel %vm614, %v2665, %v2667
    %2669 = vrot.lane.b32.xlu0 %v2666, 124
    %v2670 = vpop.permute.xlu0 %2669
    %2671 = vrot.lane.b32.xlu0 %v2668, 124
    %v2672 = vpop.permute.xlu0 %2671
    %v2675 = vadd.f32 %v2603, %v2670
    %v2676 = vadd.f32 %v2604, %v2672
    %s2677 = sld [smem:[#allocation4 + $0x21]]
    %v2678 = vstv %s2677
    %v2679 = vmul.f32 %v2678, %v2078
    %v2680 = vmul.f32 %v2678, %v2079
    %v2681 = vmul.f32 %v2678, %v2080
    %v2685 = vrot.slane %v2679, 4
    %v2686 = vrot.slane %v2680, 4
    %v2687 = vsel %vm614, %v2685, %v2686
    %v2688 = vrot.slane %v2681, 4
    %v2689 = vsel %vm614, %v2686, %v2688
    %2690 = vrot.lane.b32.xlu0 %v2687, 124
    %v2691 = vpop.permute.xlu0 %2690
    %2692 = vrot.lane.b32.xlu0 %v2689, 124
    %v2693 = vpop.permute.xlu0 %2692
    %v2696 = vadd.f32 %v2620, %v2691
    %v2697 = vadd.f32 %v2621, %v2693
    %s2698 = sld [smem:[#allocation4 + $0x22]]
    %v2699 = vstv %s2698
    %v2700 = vmul.f32 %v2699, %v2078
    %v2701 = vmul.f32 %v2699, %v2079
    %v2702 = vmul.f32 %v2699, %v2080
    %v2706 = vrot.slane %v2700, 4
    %v2707 = vrot.slane %v2701, 4
    %v2708 = vsel %vm614, %v2706, %v2707
    %v2709 = vrot.slane %v2702, 4
    %v2710 = vsel %vm614, %v2707, %v2709
    %2711 = vrot.lane.b32.xlu0 %v2708, 124
    %v2712 = vpop.permute.xlu0 %2711
    %2713 = vrot.lane.b32.xlu0 %v2710, 124
    %v2714 = vpop.permute.xlu0 %2713
    %v2717 = vadd.f32 %v2637, %v2712
    %v2718 = vadd.f32 %v2638, %v2714
    %s2719 = sld [smem:[#allocation4 + $0x23]]
    %v2720 = vstv %s2719
    %v2721 = vmul.f32 %v2720, %v2078
    %v2722 = vmul.f32 %v2720, %v2079
    %v2723 = vmul.f32 %v2720, %v2080
    %v2727 = vrot.slane %v2721, 5
    %v2728 = vrot.slane %v2722, 5
    %v2729 = vsel %vm746, %v2727, %v2728
    %v2730 = vrot.slane %v2723, 5
    %v2731 = vsel %vm746, %v2728, %v2730
    %2732 = vrot.lane.b32.xlu0 %v2729, 3
    %v2733 = vpop.permute.xlu0 %2732
    %2734 = vrot.lane.b32.xlu0 %v2731, 3
    %v2735 = vpop.permute.xlu0 %2734
    %v2738 = vadd.f32 %v2654, %v2733
    %v2739 = vadd.f32 %v2655, %v2735
    %s2740 = sld [smem:[#allocation4 + $0x24]]
    %v2741 = vstv %s2740
    %v2742 = vmul.f32 %v2741, %v2078
    %v2743 = vmul.f32 %v2741, %v2079
    %v2744 = vmul.f32 %v2741, %v2080
    %v2748 = vrot.slane %v2742, 5
    %v2749 = vrot.slane %v2743, 5
    %v2750 = vsel %vm746, %v2748, %v2749
    %v2751 = vrot.slane %v2744, 5
    %v2752 = vsel %vm746, %v2749, %v2751
    %2753 = vrot.lane.b32.xlu0 %v2750, 127
    %v2754 = vpop.permute.xlu0 %2753
    %2755 = vrot.lane.b32.xlu0 %v2752, 127
    %v2756 = vpop.permute.xlu0 %2755
    %v2759 = vadd.f32 %v2675, %v2754
    %v2760 = vadd.f32 %v2676, %v2756
    %s2761 = sld [smem:[#allocation4 + $0x25]]
    %v2762 = vstv %s2761
    %v2763 = vmul.f32 %v2762, %v2078
    %v2764 = vmul.f32 %v2762, %v2079
    %v2765 = vmul.f32 %v2762, %v2080
    %v2769 = vrot.slane %v2763, 5
    %v2770 = vrot.slane %v2764, 5
    %v2771 = vsel %vm746, %v2769, %v2770
    %v2772 = vrot.slane %v2765, 5
    %v2773 = vsel %vm746, %v2770, %v2772
    %2774 = vrot.lane.b32.xlu0 %v2771, 127
    %v2775 = vpop.permute.xlu0 %2774
    %2776 = vrot.lane.b32.xlu0 %v2773, 127
    %v2777 = vpop.permute.xlu0 %2776
    %v2780 = vadd.f32 %v2696, %v2775
    %v2781 = vadd.f32 %v2697, %v2777
    %s2782 = sld [smem:[#allocation4 + $0x26]]
    %v2783 = vstv %s2782
    %v2784 = vmul.f32 %v2783, %v2078
    %v2785 = vmul.f32 %v2783, %v2079
    %v2786 = vmul.f32 %v2783, %v2080
    %v2790 = vrot.slane %v2784, 5
    %v2791 = vrot.slane %v2785, 5
    %v2792 = vsel %vm746, %v2790, %v2791
    %v2793 = vrot.slane %v2786, 5
    %v2794 = vsel %vm746, %v2791, %v2793
    %2795 = vrot.lane.b32.xlu0 %v2792, 127
    %v2796 = vpop.permute.xlu0 %2795
    %2797 = vrot.lane.b32.xlu0 %v2794, 127
    %v2798 = vpop.permute.xlu0 %2797
    %v2801 = vadd.f32 %v2717, %v2796
    %v2802 = vadd.f32 %v2718, %v2798
    %s2803 = sld [smem:[#allocation4 + $0x27]]
    %v2804 = vstv %s2803
    %v2805 = vmul.f32 %v2804, %v2078
    %v2806 = vmul.f32 %v2804, %v2079
    %v2807 = vmul.f32 %v2804, %v2080
    %v2811 = vrot.slane %v2805, 5
    %v2812 = vrot.slane %v2806, 5
    %v2813 = vsel %vm746, %v2811, %v2812
    %v2814 = vrot.slane %v2807, 5
    %v2815 = vsel %vm746, %v2812, %v2814
    %2816 = vrot.lane.b32.xlu0 %v2813, 127
    %v2817 = vpop.permute.xlu0 %2816
    %2818 = vrot.lane.b32.xlu0 %v2815, 127
    %v2819 = vpop.permute.xlu0 %2818
    %v2822 = vadd.f32 %v2738, %v2817
    %v2823 = vadd.f32 %v2739, %v2819
    %s2824 = sld [smem:[#allocation4 + $0x28]]
    %v2825 = vstv %s2824
    %v2826 = vmul.f32 %v2825, %v2078
    %v2827 = vmul.f32 %v2825, %v2079
    %v2828 = vmul.f32 %v2825, %v2080
    %v2832 = vrot.slane %v2826, 5
    %v2833 = vrot.slane %v2827, 5
    %v2834 = vsel %vm746, %v2832, %v2833
    %v2835 = vrot.slane %v2828, 5
    %v2836 = vsel %vm746, %v2833, %v2835
    %2837 = vrot.lane.b32.xlu0 %v2834, 123
    %v2838 = vpop.permute.xlu0 %2837
    %2839 = vrot.lane.b32.xlu0 %v2836, 123
    %v2840 = vpop.permute.xlu0 %2839
    %v2843 = vadd.f32 %v2759, %v2838
    %v2844 = vadd.f32 %v2760, %v2840
    %s2845 = sld [smem:[#allocation4 + $0x29]]
    %v2846 = vstv %s2845
    %v2847 = vmul.f32 %v2846, %v2078
    %v2848 = vmul.f32 %v2846, %v2079
    %v2849 = vmul.f32 %v2846, %v2080
    %v2853 = vrot.slane %v2847, 5
    %v2854 = vrot.slane %v2848, 5
    %v2855 = vsel %vm746, %v2853, %v2854
    %v2856 = vrot.slane %v2849, 5
    %v2857 = vsel %vm746, %v2854, %v2856
    %2858 = vrot.lane.b32.xlu0 %v2855, 123
    %v2859 = vpop.permute.xlu0 %2858
    %2860 = vrot.lane.b32.xlu0 %v2857, 123
    %v2861 = vpop.permute.xlu0 %2860
    %v2864 = vadd.f32 %v2780, %v2859
    %v2865 = vadd.f32 %v2781, %v2861
    %s2866 = sld [smem:[#allocation4 + $0x2a]]
    %v2867 = vstv %s2866
    %v2868 = vmul.f32 %v2867, %v2078
    %v2869 = vmul.f32 %v2867, %v2079
    %v2870 = vmul.f32 %v2867, %v2080
    %v2874 = vrot.slane %v2868, 6
    %v2875 = vrot.slane %v2869, 6
    %v2876 = vsel %vm894, %v2874, %v2875
    %v2877 = vrot.slane %v2870, 6
    %v2878 = vsel %vm894, %v2875, %v2877
    %2879 = vrot.lane.b32.xlu0 %v2876, 2
    %v2880 = vpop.permute.xlu0 %2879
    %2881 = vrot.lane.b32.xlu0 %v2878, 2
    %v2882 = vpop.permute.xlu0 %2881
    %v2885 = vadd.f32 %v2801, %v2880
    %v2886 = vadd.f32 %v2802, %v2882
    %s2887 = sld [smem:[#allocation4 + $0x2b]]
    %v2888 = vstv %s2887
    %v2889 = vmul.f32 %v2888, %v2078
    %v2890 = vmul.f32 %v2888, %v2079
    %v2891 = vmul.f32 %v2888, %v2080
    %v2895 = vrot.slane %v2889, 6
    %v2896 = vrot.slane %v2890, 6
    %v2897 = vsel %vm894, %v2895, %v2896
    %v2898 = vrot.slane %v2891, 6
    %v2899 = vsel %vm894, %v2896, %v2898
    %2900 = vrot.lane.b32.xlu0 %v2897, 2
    %v2901 = vpop.permute.xlu0 %2900
    %2902 = vrot.lane.b32.xlu0 %v2899, 2
    %v2903 = vpop.permute.xlu0 %2902
    %v2906 = vadd.f32 %v2822, %v2901
    %v2907 = vadd.f32 %v2823, %v2903
    %s2908 = sld [smem:[#allocation4 + $0x2c]]
    %v2909 = vstv %s2908
    %v2910 = vmul.f32 %v2909, %v2078
    %v2911 = vmul.f32 %v2909, %v2079
    %v2912 = vmul.f32 %v2909, %v2080
    %v2916 = vrot.slane %v2910, 6
    %v2917 = vrot.slane %v2911, 6
    %v2918 = vsel %vm894, %v2916, %v2917
    %v2919 = vrot.slane %v2912, 6
    %v2920 = vsel %vm894, %v2917, %v2919
    %2921 = vrot.lane.b32.xlu0 %v2918, 126
    %v2922 = vpop.permute.xlu0 %2921
    %2923 = vrot.lane.b32.xlu0 %v2920, 126
    %v2924 = vpop.permute.xlu0 %2923
    %v2927 = vadd.f32 %v2843, %v2922
    %v2928 = vadd.f32 %v2844, %v2924
    %s2929 = sld [smem:[#allocation4 + $0x2d]]
    %v2930 = vstv %s2929
    %v2931 = vmul.f32 %v2930, %v2078
    %v2932 = vmul.f32 %v2930, %v2079
    %v2933 = vmul.f32 %v2930, %v2080
    %v2937 = vrot.slane %v2931, 6
    %v2938 = vrot.slane %v2932, 6
    %v2939 = vsel %vm894, %v2937, %v2938
    %v2940 = vrot.slane %v2933, 6
    %v2941 = vsel %vm894, %v2938, %v2940
    %2942 = vrot.lane.b32.xlu0 %v2939, 126
    %v2943 = vpop.permute.xlu0 %2942
    %2944 = vrot.lane.b32.xlu0 %v2941, 126
    %v2945 = vpop.permute.xlu0 %2944
    %v2948 = vadd.f32 %v2864, %v2943
    %v2949 = vadd.f32 %v2865, %v2945
    %s2950 = sld [smem:[#allocation4 + $0x2e]]
    %v2951 = vstv %s2950
    %v2952 = vmul.f32 %v2951, %v2078
    %v2953 = vmul.f32 %v2951, %v2079
    %v2954 = vmul.f32 %v2951, %v2080
    %v2958 = vrot.slane %v2952, 6
    %v2959 = vrot.slane %v2953, 6
    %v2960 = vsel %vm894, %v2958, %v2959
    %v2961 = vrot.slane %v2954, 6
    %v2962 = vsel %vm894, %v2959, %v2961
    %2963 = vrot.lane.b32.xlu0 %v2960, 126
    %v2964 = vpop.permute.xlu0 %2963
    %2965 = vrot.lane.b32.xlu0 %v2962, 126
    %v2966 = vpop.permute.xlu0 %2965
    %v2969 = vadd.f32 %v2885, %v2964
    %v2970 = vadd.f32 %v2886, %v2966
    %s2971 = sld [smem:[#allocation4 + $0x2f]]
    %v2972 = vstv %s2971
    %v2973 = vmul.f32 %v2972, %v2078
    %v2974 = vmul.f32 %v2972, %v2079
    %v2975 = vmul.f32 %v2972, %v2080
    %v2979 = vrot.slane %v2973, 6
    %v2980 = vrot.slane %v2974, 6
    %v2981 = vsel %vm894, %v2979, %v2980
    %v2982 = vrot.slane %v2975, 6
    %v2983 = vsel %vm894, %v2980, %v2982
    %2984 = vrot.lane.b32.xlu0 %v2981, 126
    %v2985 = vpop.permute.xlu0 %2984
    %2986 = vrot.lane.b32.xlu0 %v2983, 126
    %v2987 = vpop.permute.xlu0 %2986
    %v2990 = vadd.f32 %v2906, %v2985
    %v2991 = vadd.f32 %v2907, %v2987
    %s2992 = sld [smem:[#allocation4 + $0x30]]
    %v2993 = vstv %s2992
    %v2994 = vmul.f32 %v2993, %v2078
    %v2995 = vmul.f32 %v2993, %v2079
    %v2996 = vmul.f32 %v2993, %v2080
    %v3000 = vrot.slane %v2994, 6
    %v3001 = vrot.slane %v2995, 6
    %v3002 = vsel %vm894, %v3000, %v3001
    %v3003 = vrot.slane %v2996, 6
    %v3004 = vsel %vm894, %v3001, %v3003
    %3005 = vrot.lane.b32.xlu0 %v3002, 122
    %v3006 = vpop.permute.xlu0 %3005
    %3007 = vrot.lane.b32.xlu0 %v3004, 122
    %v3008 = vpop.permute.xlu0 %3007
    %v3011 = vadd.f32 %v2927, %v3006
    %v3012 = vadd.f32 %v2928, %v3008
    %3015 = vrot.lane.b32.xlu0 %v2948, 127
    %v3016 = vpop.permute.xlu0 %3015
    %3017 = vrot.lane.b32.xlu0 %v2949, 127
    %v3018 = vpop.permute.xlu0 %3017
    %v3021 = vadd.f32 %v3011, %v3016
    %v3022 = vadd.f32 %v3012, %v3018
    %3025 = vrot.lane.b32.xlu0 %v2990, 127
    %v3026 = vpop.permute.xlu0 %3025
    %3027 = vrot.lane.b32.xlu0 %v2991, 127
    %v3028 = vpop.permute.xlu0 %3027
    %v3031 = vadd.f32 %v2969, %v3026
    %v3032 = vadd.f32 %v2970, %v3028
    %3035 = vrot.lane.b32.xlu0 %v3031, 126
    %v3036 = vpop.permute.xlu0 %3035
    %3037 = vrot.lane.b32.xlu0 %v3032, 126
    %v3038 = vpop.permute.xlu0 %3037
    %v3041 = vadd.f32 %v3021, %v3036
    %v3042 = vadd.f32 %v3022, %v3038
    %v3043 = vld [vmem:[#allocation3] sm:$0xff]
    %v3044 = vld [vmem:[#allocation3 + $0x8] sm:$0xff]
    %v3045 = vld [vmem:[#allocation3 + $0x10] sm:$0x3f]
    %s3046 = sld [smem:[#allocation4 + $0x31]]
    %v3047 = vstv %s3046
    %v3048 = vmul.f32 %v3047, %v3043
    %v3049 = vmul.f32 %v3047, %v3044
    %v3050 = vadd.f32 %v3048, 0.0
    %v3051 = vadd.f32 %v3049, 0.0
    %s3052 = sld [smem:[#allocation4 + $0x32]]
    %v3053 = vstv %s3052
    %v3054 = vmul.f32 %v3053, %v3043
    %v3055 = vmul.f32 %v3053, %v3044
    %v3056 = vadd.f32 %v3054, 0.0
    %v3057 = vadd.f32 %v3055, 0.0
    %s3058 = sld [smem:[#allocation4 + $0x33]]
    %v3059 = vstv %s3058
    %v3060 = vmul.f32 %v3059, %v3043
    %v3061 = vmul.f32 %v3059, %v3044
    %v3062 = vadd.f32 %v3060, 0.0
    %v3063 = vadd.f32 %v3061, 0.0
    %s3064 = sld [smem:[#allocation4 + $0x34]]
    %v3065 = vstv %s3064
    %v3066 = vmul.f32 %v3065, %v3043
    %v3067 = vmul.f32 %v3065, %v3044
    %v3068 = vadd.f32 %v3066, 0.0
    %v3069 = vadd.f32 %v3067, 0.0
    %s3070 = sld [smem:[#allocation4 + $0x35]]
    %v3071 = vstv %s3070
    %v3072 = vmul.f32 %v3071, %v3043
    %v3073 = vmul.f32 %v3071, %v3044
    %3076 = vrot.lane.b32.xlu0 %v3072, 124
    %v3077 = vpop.permute.xlu0 %3076
    %3078 = vrot.lane.b32.xlu0 %v3073, 124
    %v3079 = vpop.permute.xlu0 %3078
    %v3082 = vadd.f32 %v3050, %v3077
    %v3083 = vadd.f32 %v3051, %v3079
    %s3084 = sld [smem:[#allocation4 + $0x36]]
    %v3085 = vstv %s3084
    %v3086 = vmul.f32 %v3085, %v3043
    %v3087 = vmul.f32 %v3085, %v3044
    %3090 = vrot.lane.b32.xlu0 %v3086, 124
    %v3091 = vpop.permute.xlu0 %3090
    %3092 = vrot.lane.b32.xlu0 %v3087, 124
    %v3093 = vpop.permute.xlu0 %3092
    %v3096 = vadd.f32 %v3056, %v3091
    %v3097 = vadd.f32 %v3057, %v3093
    %s3098 = sld [smem:[#allocation4 + $0x37]]
    %v3099 = vstv %s3098
    %v3100 = vmul.f32 %v3099, %v3043
    %v3101 = vmul.f32 %v3099, %v3044
    %3104 = vrot.lane.b32.xlu0 %v3100, 124
    %v3105 = vpop.permute.xlu0 %3104
    %3106 = vrot.lane.b32.xlu0 %v3101, 124
    %v3107 = vpop.permute.xlu0 %3106
    %v3110 = vadd.f32 %v3062, %v3105
    %v3111 = vadd.f32 %v3063, %v3107
    %s3112 = sld [smem:[#allocation4 + $0x38]]
    %v3113 = vstv %s3112
    %v3114 = vmul.f32 %v3113, %v3043
    %v3115 = vmul.f32 %v3113, %v3044
    %v3116 = vmul.f32 %v3113, %v3045
    %v3120 = vrot.slane %v3114, 1
    %v3121 = vrot.slane %v3115, 1
    %v3122 = vsel %vm170, %v3120, %v3121
    %v3123 = vrot.slane %v3116, 1
    %v3124 = vsel %vm170, %v3121, %v3123
    %3125 = vrot.lane.b32.xlu0 %v3122, 3
    %v3126 = vpop.permute.xlu0 %3125
    %3127 = vrot.lane.b32.xlu0 %v3124, 3
    %v3128 = vpop.permute.xlu0 %3127
    %v3131 = vadd.f32 %v3068, %v3126
    %v3132 = vadd.f32 %v3069, %v3128
    %s3133 = sld [smem:[#allocation4 + $0x39]]
    %v3134 = vstv %s3133
    %v3135 = vmul.f32 %v3134, %v3043
    %v3136 = vmul.f32 %v3134, %v3044
    %v3137 = vmul.f32 %v3134, %v3045
    %v3141 = vrot.slane %v3135, 1
    %v3142 = vrot.slane %v3136, 1
    %v3143 = vsel %vm170, %v3141, %v3142
    %v3144 = vrot.slane %v3137, 1
    %v3145 = vsel %vm170, %v3142, %v3144
    %3146 = vrot.lane.b32.xlu0 %v3143, 127
    %v3147 = vpop.permute.xlu0 %3146
    %3148 = vrot.lane.b32.xlu0 %v3145, 127
    %v3149 = vpop.permute.xlu0 %3148
    %v3152 = vadd.f32 %v3082, %v3147
    %v3153 = vadd.f32 %v3083, %v3149
    %s3154 = sld [smem:[#allocation4 + $0x3a]]
    %v3155 = vstv %s3154
    %v3156 = vmul.f32 %v3155, %v3043
    %v3157 = vmul.f32 %v3155, %v3044
    %v3158 = vmul.f32 %v3155, %v3045
    %v3162 = vrot.slane %v3156, 1
    %v3163 = vrot.slane %v3157, 1
    %v3164 = vsel %vm170, %v3162, %v3163
    %v3165 = vrot.slane %v3158, 1
    %v3166 = vsel %vm170, %v3163, %v3165
    %3167 = vrot.lane.b32.xlu0 %v3164, 127
    %v3168 = vpop.permute.xlu0 %3167
    %3169 = vrot.lane.b32.xlu0 %v3166, 127
    %v3170 = vpop.permute.xlu0 %3169
    %v3173 = vadd.f32 %v3096, %v3168
    %v3174 = vadd.f32 %v3097, %v3170
    %s3175 = sld [smem:[#allocation4 + $0x3b]]
    %v3176 = vstv %s3175
    %v3177 = vmul.f32 %v3176, %v3043
    %v3178 = vmul.f32 %v3176, %v3044
    %v3179 = vmul.f32 %v3176, %v3045
    %v3183 = vrot.slane %v3177, 1
    %v3184 = vrot.slane %v3178, 1
    %v3185 = vsel %vm170, %v3183, %v3184
    %v3186 = vrot.slane %v3179, 1
    %v3187 = vsel %vm170, %v3184, %v3186
    %3188 = vrot.lane.b32.xlu0 %v3185, 127
    %v3189 = vpop.permute.xlu0 %3188
    %3190 = vrot.lane.b32.xlu0 %v3187, 127
    %v3191 = vpop.permute.xlu0 %3190
    %v3194 = vadd.f32 %v3110, %v3189
    %v3195 = vadd.f32 %v3111, %v3191
    %s3196 = sld [smem:[#allocation4 + $0x3c]]
    %v3197 = vstv %s3196
    %v3198 = vmul.f32 %v3197, %v3043
    %v3199 = vmul.f32 %v3197, %v3044
    %v3200 = vmul.f32 %v3197, %v3045
    %v3204 = vrot.slane %v3198, 1
    %v3205 = vrot.slane %v3199, 1
    %v3206 = vsel %vm170, %v3204, %v3205
    %v3207 = vrot.slane %v3200, 1
    %v3208 = vsel %vm170, %v3205, %v3207
    %3209 = vrot.lane.b32.xlu0 %v3206, 127
    %v3210 = vpop.permute.xlu0 %3209
    %3211 = vrot.lane.b32.xlu0 %v3208, 127
    %v3212 = vpop.permute.xlu0 %3211
    %v3215 = vadd.f32 %v3131, %v3210
    %v3216 = vadd.f32 %v3132, %v3212
    %s3217 = sld [smem:[#allocation4 + $0x3d]]
    %v3218 = vstv %s3217
    %v3219 = vmul.f32 %v3218, %v3043
    %v3220 = vmul.f32 %v3218, %v3044
    %v3221 = vmul.f32 %v3218, %v3045
    %v3225 = vrot.slane %v3219, 1
    %v3226 = vrot.slane %v3220, 1
    %v3227 = vsel %vm170, %v3225, %v3226
    %v3228 = vrot.slane %v3221, 1
    %v3229 = vsel %vm170, %v3226, %v3228
    %3230 = vrot.lane.b32.xlu0 %v3227, 123
    %v3231 = vpop.permute.xlu0 %3230
    %3232 = vrot.lane.b32.xlu0 %v3229, 123
    %v3233 = vpop.permute.xlu0 %3232
    %v3236 = vadd.f32 %v3152, %v3231
    %v3237 = vadd.f32 %v3153, %v3233
    %s3238 = sld [smem:[#allocation4 + $0x3e]]
    %v3239 = vstv %s3238
    %v3240 = vmul.f32 %v3239, %v3043
    %v3241 = vmul.f32 %v3239, %v3044
    %v3242 = vmul.f32 %v3239, %v3045
    %v3246 = vrot.slane %v3240, 1
    %v3247 = vrot.slane %v3241, 1
    %v3248 = vsel %vm170, %v3246, %v3247
    %v3249 = vrot.slane %v3242, 1
    %v3250 = vsel %vm170, %v3247, %v3249
    %3251 = vrot.lane.b32.xlu0 %v3248, 123
    %v3252 = vpop.permute.xlu0 %3251
    %3253 = vrot.lane.b32.xlu0 %v3250, 123
    %v3254 = vpop.permute.xlu0 %3253
    %v3257 = vadd.f32 %v3173, %v3252
    %v3258 = vadd.f32 %v3174, %v3254
    %s3259 = sld [smem:[#allocation4 + $0x3f]]
    %v3260 = vstv %s3259
    %v3261 = vmul.f32 %v3260, %v3043
    %v3262 = vmul.f32 %v3260, %v3044
    %v3263 = vmul.f32 %v3260, %v3045
    %v3267 = vrot.slane %v3261, 2
    %v3268 = vrot.slane %v3262, 2
    %v3269 = vsel %vm318, %v3267, %v3268
    %v3270 = vrot.slane %v3263, 2
    %v3271 = vsel %vm318, %v3268, %v3270
    %3272 = vrot.lane.b32.xlu0 %v3269, 2
    %v3273 = vpop.permute.xlu0 %3272
    %3274 = vrot.lane.b32.xlu0 %v3271, 2
    %v3275 = vpop.permute.xlu0 %3274
    %v3278 = vadd.f32 %v3194, %v3273
    %v3279 = vadd.f32 %v3195, %v3275
    %s3280 = sld [smem:[#allocation4 + $0x40]]
    %v3281 = vstv %s3280
    %v3282 = vmul.f32 %v3281, %v3043
    %v3283 = vmul.f32 %v3281, %v3044
    %v3284 = vmul.f32 %v3281, %v3045
    %v3288 = vrot.slane %v3282, 2
    %v3289 = vrot.slane %v3283, 2
    %v3290 = vsel %vm318, %v3288, %v3289
    %v3291 = vrot.slane %v3284, 2
    %v3292 = vsel %vm318, %v3289, %v3291
    %3293 = vrot.lane.b32.xlu0 %v3290, 2
    %v3294 = vpop.permute.xlu0 %3293
    %3295 = vrot.lane.b32.xlu0 %v3292, 2
    %v3296 = vpop.permute.xlu0 %3295
    %v3299 = vadd.f32 %v3215, %v3294
    %v3300 = vadd.f32 %v3216, %v3296
    %s3301 = sld [smem:[#allocation4 + $0x41]]
    %v3302 = vstv %s3301
    %v3303 = vmul.f32 %v3302, %v3043
    %v3304 = vmul.f32 %v3302, %v3044
    %v3305 = vmul.f32 %v3302, %v3045
    %v3309 = vrot.slane %v3303, 2
    %v3310 = vrot.slane %v3304, 2
    %v3311 = vsel %vm318, %v3309, %v3310
    %v3312 = vrot.slane %v3305, 2
    %v3313 = vsel %vm318, %v3310, %v3312
    %3314 = vrot.lane.b32.xlu0 %v3311, 126
    %v3315 = vpop.permute.xlu0 %3314
    %3316 = vrot.lane.b32.xlu0 %v3313, 126
    %v3317 = vpop.permute.xlu0 %3316
    %v3320 = vadd.f32 %v3236, %v3315
    %v3321 = vadd.f32 %v3237, %v3317
    %s3322 = sld [smem:[#allocation4 + $0x42]]
    %v3323 = vstv %s3322
    %v3324 = vmul.f32 %v3323, %v3043
    %v3325 = vmul.f32 %v3323, %v3044
    %v3326 = vmul.f32 %v3323, %v3045
    %v3330 = vrot.slane %v3324, 2
    %v3331 = vrot.slane %v3325, 2
    %v3332 = vsel %vm318, %v3330, %v3331
    %v3333 = vrot.slane %v3326, 2
    %v3334 = vsel %vm318, %v3331, %v3333
    %3335 = vrot.lane.b32.xlu0 %v3332, 126
    %v3336 = vpop.permute.xlu0 %3335
    %3337 = vrot.lane.b32.xlu0 %v3334, 126
    %v3338 = vpop.permute.xlu0 %3337
    %v3341 = vadd.f32 %v3257, %v3336
    %v3342 = vadd.f32 %v3258, %v3338
    %s3343 = sld [smem:[#allocation4 + $0x43]]
    %v3344 = vstv %s3343
    %v3345 = vmul.f32 %v3344, %v3043
    %v3346 = vmul.f32 %v3344, %v3044
    %v3347 = vmul.f32 %v3344, %v3045
    %v3351 = vrot.slane %v3345, 2
    %v3352 = vrot.slane %v3346, 2
    %v3353 = vsel %vm318, %v3351, %v3352
    %v3354 = vrot.slane %v3347, 2
    %v3355 = vsel %vm318, %v3352, %v3354
    %3356 = vrot.lane.b32.xlu0 %v3353, 126
    %v3357 = vpop.permute.xlu0 %3356
    %3358 = vrot.lane.b32.xlu0 %v3355, 126
    %v3359 = vpop.permute.xlu0 %3358
    %v3362 = vadd.f32 %v3278, %v3357
    %v3363 = vadd.f32 %v3279, %v3359
    %s3364 = sld [smem:[#allocation4 + $0x44]]
    %v3365 = vstv %s3364
    %v3366 = vmul.f32 %v3365, %v3043
    %v3367 = vmul.f32 %v3365, %v3044
    %v3368 = vmul.f32 %v3365, %v3045
    %v3372 = vrot.slane %v3366, 2
    %v3373 = vrot.slane %v3367, 2
    %v3374 = vsel %vm318, %v3372, %v3373
    %v3375 = vrot.slane %v3368, 2
    %v3376 = vsel %vm318, %v3373, %v3375
    %3377 = vrot.lane.b32.xlu0 %v3374, 126
    %v3378 = vpop.permute.xlu0 %3377
    %3379 = vrot.lane.b32.xlu0 %v3376, 126
    %v3380 = vpop.permute.xlu0 %3379
    %v3383 = vadd.f32 %v3299, %v3378
    %v3384 = vadd.f32 %v3300, %v3380
    %s3385 = sld [smem:[#allocation4 + $0x45]]
    %v3386 = vstv %s3385
    %v3387 = vmul.f32 %v3386, %v3043
    %v3388 = vmul.f32 %v3386, %v3044
    %v3389 = vmul.f32 %v3386, %v3045
    %v3393 = vrot.slane %v3387, 2
    %v3394 = vrot.slane %v3388, 2
    %v3395 = vsel %vm318, %v3393, %v3394
    %v3396 = vrot.slane %v3389, 2
    %v3397 = vsel %vm318, %v3394, %v3396
    %3398 = vrot.lane.b32.xlu0 %v3395, 122
    %v3399 = vpop.permute.xlu0 %3398
    %3400 = vrot.lane.b32.xlu0 %v3397, 122
    %v3401 = vpop.permute.xlu0 %3400
    %v3404 = vadd.f32 %v3320, %v3399
    %v3405 = vadd.f32 %v3321, %v3401
    %s3406 = sld [smem:[#allocation4 + $0x46]]
    %v3407 = vstv %s3406
    %v3408 = vmul.f32 %v3407, %v3043
    %v3409 = vmul.f32 %v3407, %v3044
    %v3410 = vmul.f32 %v3407, %v3045
    %v3414 = vrot.slane %v3408, 3
    %v3415 = vrot.slane %v3409, 3
    %v3416 = vsel %vm466, %v3414, %v3415
    %v3417 = vrot.slane %v3410, 3
    %v3418 = vsel %vm466, %v3415, %v3417
    %3419 = vrot.lane.b32.xlu0 %v3416, 1
    %v3420 = vpop.permute.xlu0 %3419
    %3421 = vrot.lane.b32.xlu0 %v3418, 1
    %v3422 = vpop.permute.xlu0 %3421
    %v3425 = vadd.f32 %v3341, %v3420
    %v3426 = vadd.f32 %v3342, %v3422
    %s3427 = sld [smem:[#allocation4 + $0x47]]
    %v3428 = vstv %s3427
    %v3429 = vmul.f32 %v3428, %v3043
    %v3430 = vmul.f32 %v3428, %v3044
    %v3431 = vmul.f32 %v3428, %v3045
    %v3435 = vrot.slane %v3429, 3
    %v3436 = vrot.slane %v3430, 3
    %v3437 = vsel %vm466, %v3435, %v3436
    %v3438 = vrot.slane %v3431, 3
    %v3439 = vsel %vm466, %v3436, %v3438
    %3440 = vrot.lane.b32.xlu0 %v3437, 1
    %v3441 = vpop.permute.xlu0 %3440
    %3442 = vrot.lane.b32.xlu0 %v3439, 1
    %v3443 = vpop.permute.xlu0 %3442
    %v3446 = vadd.f32 %v3362, %v3441
    %v3447 = vadd.f32 %v3363, %v3443
    %s3448 = sld [smem:[#allocation4 + $0x48]]
    %v3449 = vstv %s3448
    %v3450 = vmul.f32 %v3449, %v3043
    %v3451 = vmul.f32 %v3449, %v3044
    %v3452 = vmul.f32 %v3449, %v3045
    %v3456 = vrot.slane %v3450, 3
    %v3457 = vrot.slane %v3451, 3
    %v3458 = vsel %vm466, %v3456, %v3457
    %v3459 = vrot.slane %v3452, 3
    %v3460 = vsel %vm466, %v3457, %v3459
    %3461 = vrot.lane.b32.xlu0 %v3458, 1
    %v3462 = vpop.permute.xlu0 %3461
    %3463 = vrot.lane.b32.xlu0 %v3460, 1
    %v3464 = vpop.permute.xlu0 %3463
    %v3467 = vadd.f32 %v3383, %v3462
    %v3468 = vadd.f32 %v3384, %v3464
    %s3469 = sld [smem:[#allocation4 + $0x49]]
    %v3470 = vstv %s3469
    %v3471 = vmul.f32 %v3470, %v3043
    %v3472 = vmul.f32 %v3470, %v3044
    %v3473 = vmul.f32 %v3470, %v3045
    %v3477 = vrot.slane %v3471, 3
    %v3478 = vrot.slane %v3472, 3
    %v3479 = vsel %vm466, %v3477, %v3478
    %v3480 = vrot.slane %v3473, 3
    %v3481 = vsel %vm466, %v3478, %v3480
    %3482 = vrot.lane.b32.xlu0 %v3479, 125
    %v3483 = vpop.permute.xlu0 %3482
    %3484 = vrot.lane.b32.xlu0 %v3481, 125
    %v3485 = vpop.permute.xlu0 %3484
    %v3488 = vadd.f32 %v3404, %v3483
    %v3489 = vadd.f32 %v3405, %v3485
    %s3490 = sld [smem:[#allocation4 + $0x4a]]
    %v3491 = vstv %s3490
    %v3492 = vmul.f32 %v3491, %v3043
    %v3493 = vmul.f32 %v3491, %v3044
    %v3494 = vmul.f32 %v3491, %v3045
    %v3498 = vrot.slane %v3492, 3
    %v3499 = vrot.slane %v3493, 3
    %v3500 = vsel %vm466, %v3498, %v3499
    %v3501 = vrot.slane %v3494, 3
    %v3502 = vsel %vm466, %v3499, %v3501
    %3503 = vrot.lane.b32.xlu0 %v3500, 125
    %v3504 = vpop.permute.xlu0 %3503
    %3505 = vrot.lane.b32.xlu0 %v3502, 125
    %v3506 = vpop.permute.xlu0 %3505
    %v3509 = vadd.f32 %v3425, %v3504
    %v3510 = vadd.f32 %v3426, %v3506
    %s3511 = sld [smem:[#allocation4 + $0x4b]]
    %v3512 = vstv %s3511
    %v3513 = vmul.f32 %v3512, %v3043
    %v3514 = vmul.f32 %v3512, %v3044
    %v3515 = vmul.f32 %v3512, %v3045
    %v3519 = vrot.slane %v3513, 3
    %v3520 = vrot.slane %v3514, 3
    %v3521 = vsel %vm466, %v3519, %v3520
    %v3522 = vrot.slane %v3515, 3
    %v3523 = vsel %vm466, %v3520, %v3522
    %3524 = vrot.lane.b32.xlu0 %v3521, 125
    %v3525 = vpop.permute.xlu0 %3524
    %3526 = vrot.lane.b32.xlu0 %v3523, 125
    %v3527 = vpop.permute.xlu0 %3526
    %v3530 = vadd.f32 %v3446, %v3525
    %v3531 = vadd.f32 %v3447, %v3527
    %s3532 = sld [smem:[#allocation4 + $0x4c]]
    %v3533 = vstv %s3532
    %v3534 = vmul.f32 %v3533, %v3043
    %v3535 = vmul.f32 %v3533, %v3044
    %v3536 = vmul.f32 %v3533, %v3045
    %v3540 = vrot.slane %v3534, 3
    %v3541 = vrot.slane %v3535, 3
    %v3542 = vsel %vm466, %v3540, %v3541
    %v3543 = vrot.slane %v3536, 3
    %v3544 = vsel %vm466, %v3541, %v3543
    %3545 = vrot.lane.b32.xlu0 %v3542, 125
    %v3546 = vpop.permute.xlu0 %3545
    %3547 = vrot.lane.b32.xlu0 %v3544, 125
    %v3548 = vpop.permute.xlu0 %3547
    %v3551 = vadd.f32 %v3467, %v3546
    %v3552 = vadd.f32 %v3468, %v3548
    %s3553 = sld [smem:[#allocation4 + $0x4d]]
    %v3554 = vstv %s3553
    %v3555 = vmul.f32 %v3554, %v3043
    %v3556 = vmul.f32 %v3554, %v3044
    %v3557 = vmul.f32 %v3554, %v3045
    %v3561 = vrot.slane %v3555, 4
    %v3562 = vrot.slane %v3556, 4
    %v3563 = vsel %vm614, %v3561, %v3562
    %v3564 = vrot.slane %v3557, 4
    %v3565 = vsel %vm614, %v3562, %v3564
    %v3568 = vadd.f32 %v3488, %v3563
    %v3569 = vadd.f32 %v3489, %v3565
    %s3570 = sld [smem:[#allocation4 + $0x4e]]
    %v3571 = vstv %s3570
    %v3572 = vmul.f32 %v3571, %v3043
    %v3573 = vmul.f32 %v3571, %v3044
    %v3574 = vmul.f32 %v3571, %v3045
    %v3578 = vrot.slane %v3572, 4
    %v3579 = vrot.slane %v3573, 4
    %v3580 = vsel %vm614, %v3578, %v3579
    %v3581 = vrot.slane %v3574, 4
    %v3582 = vsel %vm614, %v3579, %v3581
    %v3585 = vadd.f32 %v3509, %v3580
    %v3586 = vadd.f32 %v3510, %v3582
    %s3587 = sld [smem:[#allocation4 + $0x4f]]
    %v3588 = vstv %s3587
    %v3589 = vmul.f32 %v3588, %v3043
    %v3590 = vmul.f32 %v3588, %v3044
    %v3591 = vmul.f32 %v3588, %v3045
    %v3595 = vrot.slane %v3589, 4
    %v3596 = vrot.slane %v3590, 4
    %v3597 = vsel %vm614, %v3595, %v3596
    %v3598 = vrot.slane %v3591, 4
    %v3599 = vsel %vm614, %v3596, %v3598
    %v3602 = vadd.f32 %v3530, %v3597
    %v3603 = vadd.f32 %v3531, %v3599
    %s3604 = sld [smem:[#allocation4 + $0x50]]
    %v3605 = vstv %s3604
    %v3606 = vmul.f32 %v3605, %v3043
    %v3607 = vmul.f32 %v3605, %v3044
    %v3608 = vmul.f32 %v3605, %v3045
    %v3612 = vrot.slane %v3606, 4
    %v3613 = vrot.slane %v3607, 4
    %v3614 = vsel %vm614, %v3612, %v3613
    %v3615 = vrot.slane %v3608, 4
    %v3616 = vsel %vm614, %v3613, %v3615
    %v3619 = vadd.f32 %v3551, %v3614
    %v3620 = vadd.f32 %v3552, %v3616
    %s3621 = sld [smem:[#allocation4 + $0x51]]
    %v3622 = vstv %s3621
    %v3623 = vmul.f32 %v3622, %v3043
    %v3624 = vmul.f32 %v3622, %v3044
    %v3625 = vmul.f32 %v3622, %v3045
    %v3629 = vrot.slane %v3623, 4
    %v3630 = vrot.slane %v3624, 4
    %v3631 = vsel %vm614, %v3629, %v3630
    %v3632 = vrot.slane %v3625, 4
    %v3633 = vsel %vm614, %v3630, %v3632
    %3634 = vrot.lane.b32.xlu0 %v3631, 124
    %v3635 = vpop.permute.xlu0 %3634
    %3636 = vrot.lane.b32.xlu0 %v3633, 124
    %v3637 = vpop.permute.xlu0 %3636
    %v3640 = vadd.f32 %v3568, %v3635
    %v3641 = vadd.f32 %v3569, %v3637
    %s3642 = sld [smem:[#allocation4 + $0x52]]
    %v3643 = vstv %s3642
    %v3644 = vmul.f32 %v3643, %v3043
    %v3645 = vmul.f32 %v3643, %v3044
    %v3646 = vmul.f32 %v3643, %v3045
    %v3650 = vrot.slane %v3644, 4
    %v3651 = vrot.slane %v3645, 4
    %v3652 = vsel %vm614, %v3650, %v3651
    %v3653 = vrot.slane %v3646, 4
    %v3654 = vsel %vm614, %v3651, %v3653
    %3655 = vrot.lane.b32.xlu0 %v3652, 124
    %v3656 = vpop.permute.xlu0 %3655
    %3657 = vrot.lane.b32.xlu0 %v3654, 124
    %v3658 = vpop.permute.xlu0 %3657
    %v3661 = vadd.f32 %v3585, %v3656
    %v3662 = vadd.f32 %v3586, %v3658
    %s3663 = sld [smem:[#allocation4 + $0x53]]
    %v3664 = vstv %s3663
    %v3665 = vmul.f32 %v3664, %v3043
    %v3666 = vmul.f32 %v3664, %v3044
    %v3667 = vmul.f32 %v3664, %v3045
    %v3671 = vrot.slane %v3665, 4
    %v3672 = vrot.slane %v3666, 4
    %v3673 = vsel %vm614, %v3671, %v3672
    %v3674 = vrot.slane %v3667, 4
    %v3675 = vsel %vm614, %v3672, %v3674
    %3676 = vrot.lane.b32.xlu0 %v3673, 124
    %v3677 = vpop.permute.xlu0 %3676
    %3678 = vrot.lane.b32.xlu0 %v3675, 124
    %v3679 = vpop.permute.xlu0 %3678
    %v3682 = vadd.f32 %v3602, %v3677
    %v3683 = vadd.f32 %v3603, %v3679
    %s3684 = sld [smem:[#allocation4 + $0x54]]
    %v3685 = vstv %s3684
    %v3686 = vmul.f32 %v3685, %v3043
    %v3687 = vmul.f32 %v3685, %v3044
    %v3688 = vmul.f32 %v3685, %v3045
    %v3692 = vrot.slane %v3686, 5
    %v3693 = vrot.slane %v3687, 5
    %v3694 = vsel %vm746, %v3692, %v3693
    %v3695 = vrot.slane %v3688, 5
    %v3696 = vsel %vm746, %v3693, %v3695
    %3697 = vrot.lane.b32.xlu0 %v3694, 3
    %v3698 = vpop.permute.xlu0 %3697
    %3699 = vrot.lane.b32.xlu0 %v3696, 3
    %v3700 = vpop.permute.xlu0 %3699
    %v3703 = vadd.f32 %v3619, %v3698
    %v3704 = vadd.f32 %v3620, %v3700
    %s3705 = sld [smem:[#allocation4 + $0x55]]
    %v3706 = vstv %s3705
    %v3707 = vmul.f32 %v3706, %v3043
    %v3708 = vmul.f32 %v3706, %v3044
    %v3709 = vmul.f32 %v3706, %v3045
    %v3713 = vrot.slane %v3707, 5
    %v3714 = vrot.slane %v3708, 5
    %v3715 = vsel %vm746, %v3713, %v3714
    %v3716 = vrot.slane %v3709, 5
    %v3717 = vsel %vm746, %v3714, %v3716
    %3718 = vrot.lane.b32.xlu0 %v3715, 127
    %v3719 = vpop.permute.xlu0 %3718
    %3720 = vrot.lane.b32.xlu0 %v3717, 127
    %v3721 = vpop.permute.xlu0 %3720
    %v3724 = vadd.f32 %v3640, %v3719
    %v3725 = vadd.f32 %v3641, %v3721
    %s3726 = sld [smem:[#allocation4 + $0x56]]
    %v3727 = vstv %s3726
    %v3728 = vmul.f32 %v3727, %v3043
    %v3729 = vmul.f32 %v3727, %v3044
    %v3730 = vmul.f32 %v3727, %v3045
    %v3734 = vrot.slane %v3728, 5
    %v3735 = vrot.slane %v3729, 5
    %v3736 = vsel %vm746, %v3734, %v3735
    %v3737 = vrot.slane %v3730, 5
    %v3738 = vsel %vm746, %v3735, %v3737
    %3739 = vrot.lane.b32.xlu0 %v3736, 127
    %v3740 = vpop.permute.xlu0 %3739
    %3741 = vrot.lane.b32.xlu0 %v3738, 127
    %v3742 = vpop.permute.xlu0 %3741
    %v3745 = vadd.f32 %v3661, %v3740
    %v3746 = vadd.f32 %v3662, %v3742
    %s3747 = sld [smem:[#allocation4 + $0x57]]
    %v3748 = vstv %s3747
    %v3749 = vmul.f32 %v3748, %v3043
    %v3750 = vmul.f32 %v3748, %v3044
    %v3751 = vmul.f32 %v3748, %v3045
    %v3755 = vrot.slane %v3749, 5
    %v3756 = vrot.slane %v3750, 5
    %v3757 = vsel %vm746, %v3755, %v3756
    %v3758 = vrot.slane %v3751, 5
    %v3759 = vsel %vm746, %v3756, %v3758
    %3760 = vrot.lane.b32.xlu0 %v3757, 127
    %v3761 = vpop.permute.xlu0 %3760
    %3762 = vrot.lane.b32.xlu0 %v3759, 127
    %v3763 = vpop.permute.xlu0 %3762
    %v3766 = vadd.f32 %v3682, %v3761
    %v3767 = vadd.f32 %v3683, %v3763
    %s3768 = sld [smem:[#allocation4 + $0x58]]
    %v3769 = vstv %s3768
    %v3770 = vmul.f32 %v3769, %v3043
    %v3771 = vmul.f32 %v3769, %v3044
    %v3772 = vmul.f32 %v3769, %v3045
    %v3776 = vrot.slane %v3770, 5
    %v3777 = vrot.slane %v3771, 5
    %v3778 = vsel %vm746, %v3776, %v3777
    %v3779 = vrot.slane %v3772, 5
    %v3780 = vsel %vm746, %v3777, %v3779
    %3781 = vrot.lane.b32.xlu0 %v3778, 127
    %v3782 = vpop.permute.xlu0 %3781
    %3783 = vrot.lane.b32.xlu0 %v3780, 127
    %v3784 = vpop.permute.xlu0 %3783
    %v3787 = vadd.f32 %v3703, %v3782
    %v3788 = vadd.f32 %v3704, %v3784
    %s3789 = sld [smem:[#allocation4 + $0x59]]
    %v3790 = vstv %s3789
    %v3791 = vmul.f32 %v3790, %v3043
    %v3792 = vmul.f32 %v3790, %v3044
    %v3793 = vmul.f32 %v3790, %v3045
    %v3797 = vrot.slane %v3791, 5
    %v3798 = vrot.slane %v3792, 5
    %v3799 = vsel %vm746, %v3797, %v3798
    %v3800 = vrot.slane %v3793, 5
    %v3801 = vsel %vm746, %v3798, %v3800
    %3802 = vrot.lane.b32.xlu0 %v3799, 123
    %v3803 = vpop.permute.xlu0 %3802
    %3804 = vrot.lane.b32.xlu0 %v3801, 123
    %v3805 = vpop.permute.xlu0 %3804
    %v3808 = vadd.f32 %v3724, %v3803
    %v3809 = vadd.f32 %v3725, %v3805
    %s3810 = sld [smem:[#allocation4 + $0x5a]]
    %v3811 = vstv %s3810
    %v3812 = vmul.f32 %v3811, %v3043
    %v3813 = vmul.f32 %v3811, %v3044
    %v3814 = vmul.f32 %v3811, %v3045
    %v3818 = vrot.slane %v3812, 5
    %v3819 = vrot.slane %v3813, 5
    %v3820 = vsel %vm746, %v3818, %v3819
    %v3821 = vrot.slane %v3814, 5
    %v3822 = vsel %vm746, %v3819, %v3821
    %3823 = vrot.lane.b32.xlu0 %v3820, 123
    %v3824 = vpop.permute.xlu0 %3823
    %3825 = vrot.lane.b32.xlu0 %v3822, 123
    %v3826 = vpop.permute.xlu0 %3825
    %v3829 = vadd.f32 %v3745, %v3824
    %v3830 = vadd.f32 %v3746, %v3826
    %s3831 = sld [smem:[#allocation4 + $0x5b]]
    %v3832 = vstv %s3831
    %v3833 = vmul.f32 %v3832, %v3043
    %v3834 = vmul.f32 %v3832, %v3044
    %v3835 = vmul.f32 %v3832, %v3045
    %v3839 = vrot.slane %v3833, 6
    %v3840 = vrot.slane %v3834, 6
    %v3841 = vsel %vm894, %v3839, %v3840
    %v3842 = vrot.slane %v3835, 6
    %v3843 = vsel %vm894, %v3840, %v3842
    %3844 = vrot.lane.b32.xlu0 %v3841, 2
    %v3845 = vpop.permute.xlu0 %3844
    %3846 = vrot.lane.b32.xlu0 %v3843, 2
    %v3847 = vpop.permute.xlu0 %3846
    %v3850 = vadd.f32 %v3766, %v3845
    %v3851 = vadd.f32 %v3767, %v3847
    %s3852 = sld [smem:[#allocation4 + $0x5c]]
    %v3853 = vstv %s3852
    %v3854 = vmul.f32 %v3853, %v3043
    %v3855 = vmul.f32 %v3853, %v3044
    %v3856 = vmul.f32 %v3853, %v3045
    %v3860 = vrot.slane %v3854, 6
    %v3861 = vrot.slane %v3855, 6
    %v3862 = vsel %vm894, %v3860, %v3861
    %v3863 = vrot.slane %v3856, 6
    %v3864 = vsel %vm894, %v3861, %v3863
    %3865 = vrot.lane.b32.xlu0 %v3862, 2
    %v3866 = vpop.permute.xlu0 %3865
    %3867 = vrot.lane.b32.xlu0 %v3864, 2
    %v3868 = vpop.permute.xlu0 %3867
    %v3871 = vadd.f32 %v3787, %v3866
    %v3872 = vadd.f32 %v3788, %v3868
    %s3873 = sld [smem:[#allocation4 + $0x5d]]
    %v3874 = vstv %s3873
    %v3875 = vmul.f32 %v3874, %v3043
    %v3876 = vmul.f32 %v3874, %v3044
    %v3877 = vmul.f32 %v3874, %v3045
    %v3881 = vrot.slane %v3875, 6
    %v3882 = vrot.slane %v3876, 6
    %v3883 = vsel %vm894, %v3881, %v3882
    %v3884 = vrot.slane %v3877, 6
    %v3885 = vsel %vm894, %v3882, %v3884
    %3886 = vrot.lane.b32.xlu0 %v3883, 126
    %v3887 = vpop.permute.xlu0 %3886
    %3888 = vrot.lane.b32.xlu0 %v3885, 126
    %v3889 = vpop.permute.xlu0 %3888
    %v3892 = vadd.f32 %v3808, %v3887
    %v3893 = vadd.f32 %v3809, %v3889
    %s3894 = sld [smem:[#allocation4 + $0x5e]]
    %v3895 = vstv %s3894
    %v3896 = vmul.f32 %v3895, %v3043
    %v3897 = vmul.f32 %v3895, %v3044
    %v3898 = vmul.f32 %v3895, %v3045
    %v3902 = vrot.slane %v3896, 6
    %v3903 = vrot.slane %v3897, 6
    %v3904 = vsel %vm894, %v3902, %v3903
    %v3905 = vrot.slane %v3898, 6
    %v3906 = vsel %vm894, %v3903, %v3905
    %3907 = vrot.lane.b32.xlu0 %v3904, 126
    %v3908 = vpop.permute.xlu0 %3907
    %3909 = vrot.lane.b32.xlu0 %v3906, 126
    %v3910 = vpop.permute.xlu0 %3909
    %v3913 = vadd.f32 %v3829, %v3908
    %v3914 = vadd.f32 %v3830, %v3910
    %s3915 = sld [smem:[#allocation4 + $0x5f]]
    %v3916 = vstv %s3915
    %v3917 = vmul.f32 %v3916, %v3043
    %v3918 = vmul.f32 %v3916, %v3044
    %v3919 = vmul.f32 %v3916, %v3045
    %v3923 = vrot.slane %v3917, 6
    %v3924 = vrot.slane %v3918, 6
    %v3925 = vsel %vm894, %v3923, %v3924
    %v3926 = vrot.slane %v3919, 6
    %v3927 = vsel %vm894, %v3924, %v3926
    %3928 = vrot.lane.b32.xlu0 %v3925, 126
    %v3929 = vpop.permute.xlu0 %3928
    %3930 = vrot.lane.b32.xlu0 %v3927, 126
    %v3931 = vpop.permute.xlu0 %3930
    %v3934 = vadd.f32 %v3850, %v3929
    %v3935 = vadd.f32 %v3851, %v3931
    %s3936 = sld [smem:[#allocation4 + $0x60]]
    %v3937 = vstv %s3936
    %v3938 = vmul.f32 %v3937, %v3043
    %v3939 = vmul.f32 %v3937, %v3044
    %v3940 = vmul.f32 %v3937, %v3045
    %v3944 = vrot.slane %v3938, 6
    %v3945 = vrot.slane %v3939, 6
    %v3946 = vsel %vm894, %v3944, %v3945
    %v3947 = vrot.slane %v3940, 6
    %v3948 = vsel %vm894, %v3945, %v3947
    %3949 = vrot.lane.b32.xlu0 %v3946, 126
    %v3950 = vpop.permute.xlu0 %3949
    %3951 = vrot.lane.b32.xlu0 %v3948, 126
    %v3952 = vpop.permute.xlu0 %3951
    %v3955 = vadd.f32 %v3871, %v3950
    %v3956 = vadd.f32 %v3872, %v3952
    %s3957 = sld [smem:[#allocation4 + $0x61]]
    %v3958 = vstv %s3957
    %v3959 = vmul.f32 %v3958, %v3043
    %v3960 = vmul.f32 %v3958, %v3044
    %v3961 = vmul.f32 %v3958, %v3045
    %v3965 = vrot.slane %v3959, 6
    %v3966 = vrot.slane %v3960, 6
    %v3967 = vsel %vm894, %v3965, %v3966
    %v3968 = vrot.slane %v3961, 6
    %v3969 = vsel %vm894, %v3966, %v3968
    %3970 = vrot.lane.b32.xlu0 %v3967, 122
    %v3971 = vpop.permute.xlu0 %3970
    %3972 = vrot.lane.b32.xlu0 %v3969, 122
    %v3973 = vpop.permute.xlu0 %3972
    %v3976 = vadd.f32 %v3892, %v3971
    %v3977 = vadd.f32 %v3893, %v3973
    %3980 = vrot.lane.b32.xlu0 %v3913, 127
    %v3981 = vpop.permute.xlu0 %3980
    %3982 = vrot.lane.b32.xlu0 %v3914, 127
    %v3983 = vpop.permute.xlu0 %3982
    %v3986 = vadd.f32 %v3976, %v3981
    %v3987 = vadd.f32 %v3977, %v3983
    %3990 = vrot.lane.b32.xlu0 %v3955, 127
    %v3991 = vpop.permute.xlu0 %3990
    %3992 = vrot.lane.b32.xlu0 %v3956, 127
    %v3993 = vpop.permute.xlu0 %3992
    %v3996 = vadd.f32 %v3934, %v3991
    %v3997 = vadd.f32 %v3935, %v3993
    %4000 = vrot.lane.b32.xlu0 %v3996, 126
    %v4001 = vpop.permute.xlu0 %4000
    %4002 = vrot.lane.b32.xlu0 %v3997, 126
    %v4003 = vpop.permute.xlu0 %4002
    %v4006 = vadd.f32 %v3986, %v4001
    %v4007 = vadd.f32 %v3987, %v4003
    %v4008 = vadd.f32 %v3041, %v4006
    %v4009 = vadd.f32 %v3042, %v4007
    %s4010 = scalar_lea.vmem [#allocation9], 16
    %4011 = vst.msk [vmem:[%s4010] sm:$0xff] %vm2031, %v4008
    %4012 = vst.msk [vmem:[%s4010 + $0x8] sm:$0xff] %vm2031, %v4009
    // Predicated region
    $region18: #{tpu_custom_call.1} parent=1 // pred_check
      _
    $region19: #{tpu_custom_call.1} parent=1 // pred_check_branch
      %4014 = sbr.rel (0) target = $region21
    $region20: #{tpu_custom_call.1} parent=1 // pred_region
      %4016 = vsyncadd [#allocation6], 0
      %s4017 = sshll.u32 [#allocation9], 4
      %s4018 = int_to_ptr.vmem [resolvable:$true] %s4017
      %s4019 = sshll.u32 %s2, 4
      %s4020 = int_to_ptr.hbm [resolvable:$true] %s4019
      %4025 = dma.vmem_to_hbm [thread:$0]  %s4018, 512, %s4020, [#allocation6], 128, 128, 8
    $region21: #{tpu_custom_call.1} parent=1 // pred_fallthru
      _
    // Predicated region
    $region22: #{tpu_custom_call.1} parent=1 // pred_check
      _
    $region23: #{tpu_custom_call.1} parent=1 // pred_check_branch
      %4027 = sbr.rel (0) target = $region25
    $region24: #{tpu_custom_call.1} parent=1 // pred_region
      %4029 = dma.done [#allocation6], 512
    $region25: #{tpu_custom_call.1} parent=1 // pred_fallthru
      _
    %4030 = vsyncpa [#allocation5], 1
    %4031 = vsyncpa [#allocation6], 1
    %4032 = vsyncpa [#allocation7], 1

</llo_original>
